<compile_context>
chip_gen: v7x
topology: tpu7x:2x2x1
jax: 0.10.0
libtpu: 0.0.40
codegen_flags: <defaults>
</compile_context>

<pallas_src>
import functools

import jax
import jax.numpy as jnp
from jax.experimental import pallas as pl
from jax.experimental.pallas import tpu as pltpu


def _mm_t(a, w):
    """a @ w.T (contract the last dim of both), f32 accumulation on the MXU."""
    return jax.lax.dot_general(
        a, w, (((1,), (1,)), ((), ())), preferred_element_type=jnp.float32
    )


def manner_entity_encoder_kernel(
    ids_ref,     # (1, B*L, 1) int32   b-major token ids for this sample
    emb_ref,     # (VOCAB, D)  bf16    embedding table
    qkv_w_ref,   # (3*H, hd, D) bf16   per-head row blocks of [Wq; Wk; Wv]
    qkv_b_ref,   # (3*H, 1, hd) f32    per-head slices of in_proj_bias
    ow_ref,      # (H, D, hd)  bf16    out_proj.weight column blocks per head
    ob_ref,      # (1, D)      f32     out_proj.bias
    aw_ref,      # (Q, D)      bf16    AdditiveAttention linear weight
    ab_ref,      # (1, Q)      f32     AdditiveAttention linear bias
    aq_ref,      # (1, Q)      f32     AdditiveAttention query vector
    o_ref,       # (1, L, D)   f32     output block for this sample
    *,
    num_heads: int,
    cols: int,   # B: number of MHA "batch" columns per sample
    seq: int,    # L: sequence length (output rows)
):
    vocab, D = emb_ref.shape
    H = num_heads
    hd = D // H
    B, L = cols, seq
    BL = B * L
    scale = 1.0 / float(hd) ** 0.5

    # ---- 1) Embedding gather: one-hot matmul against the small bf16 table.
    #         One-hot rows are exact in bf16 and accumulation is f32, so this equals the
    #         stored bf16 embedding rows exactly.  (embedding dropout: identity in eval)
    ids = ids_ref[0]                                                  # (BL, 1) int32
    vocab_iota = jax.lax.broadcasted_iota(jnp.int32, (BL, vocab), 1)
    onehot = (vocab_iota == ids).astype(jnp.float32).astype(jnp.bfloat16)
    x = jnp.dot(onehot, emb_ref[...], preferred_element_type=jnp.float32)   # (BL, D) f32
    x_bf = x.astype(jnp.bfloat16)                                     # lossless here

    # ---- 2) Multi-head self-attention over L, batched over the B columns.
    #         The out-projection is fused into the head loop:
    #         attn @ Wo.T == sum_h attn_h @ Wo[:, h*hd:(h+1)*hd].T  (no scratch round-trip)
    mha = jnp.zeros((BL, D), jnp.float32)
    for h in range(H):                       # H is a tiny static constant; B is batched
        qh = _mm_t(x_bf, qkv_w_ref[h]) + qkv_b_ref[h]                 # (BL, hd) f32
        kh = _mm_t(x_bf, qkv_w_ref[H + h]) + qkv_b_ref[H + h]
        vh = _mm_t(x_bf, qkv_w_ref[2 * H + h]) + qkv_b_ref[2 * H + h]

        q3 = qh.reshape(B, L, hd).astype(jnp.bfloat16)
        k3 = kh.reshape(B, L, hd).astype(jnp.bfloat16)
        v3 = vh.reshape(B, L, hd).astype(jnp.bfloat16)

        # per-column (B, L, L) scores: no block-diagonal mask, no redundant B^2 work
        s = jnp.einsum("bld,bmd->blm", q3, k3,
                       preferred_element_type=jnp.float32) * scale    # (B, L, L) f32
        s = s - jnp.max(s, axis=-1, keepdims=True)                    # stable softmax (f32)
        p = jnp.exp(s)
        p = p / jnp.sum(p, axis=-1, keepdims=True)

        pv = jnp.einsum("blm,bmd->bld", p.astype(jnp.bfloat16), v3,
                        preferred_element_type=jnp.float32)           # (B, L, hd) f32
        attn_h = pv.reshape(BL, hd).astype(jnp.bfloat16)
        mha = mha + _mm_t(attn_h, ow_ref[h])                          # (BL, D) f32 accum
    mha = mha + ob_ref[...]
    # (MHA output dropout: identity in eval mode)

    # ---- 3) Additive attention: softmax over the B columns, weighted sum -> (L, D)
    a = jnp.tanh(_mm_t(mha.astype(jnp.bfloat16), aw_ref[...]) + ab_ref[...])   # (BL, Q) f32
    sc = jnp.sum(a * aq_ref[...], axis=-1, keepdims=True)             # (BL, 1)
    sc3 = sc.reshape(B, L, 1)
    sc3 = sc3 - jnp.max(sc3, axis=0, keepdims=True)                   # softmax over B
    w = jnp.exp(sc3)
    w = w / jnp.sum(w, axis=0, keepdims=True)                         # (B, L, 1)

    mha3 = mha.reshape(B, L, D)
    o_ref[0] = jnp.sum(mha3 * w, axis=0)                              # (L, D)


def manner_entity_encoder(entity_sequences, params, *, num_heads):
    """entity_sequences: (N, L, B) int32 — N independent (L, B) samples. Returns (N, L, D)."""
    N, L, B = entity_sequences.shape
    vocab, D = params["embedding"].shape
    H = num_heads
    assert D % H == 0, "embedding_dim must be divisible by num_attention_heads"
    hd = D // H
    Q = params["add_w"].shape[0]

    # b-major flattening per sample: row b*L + l holds entity_sequences[n, l, b], so each
    # MHA column is a contiguous block of L rows inside the kernel.
    ids = entity_sequences.transpose(0, 2, 1).reshape(N, B * L, 1).astype(jnp.int32)

    # Host-side weight pre-shaping: the kernel only slices weight leading axes (free).
    # MXU operands are bf16 (f32 accumulation); biases / elementwise tensors stay f32.
    in_w = params["in_w"].astype(jnp.float32)                         # (3D, D) = [Wq; Wk; Wv]
    qkv_w = in_w.reshape(3 * H, hd, D).astype(jnp.bfloat16)           # [q_h..., k_h..., v_h...]
    qkv_b = params["in_b"].astype(jnp.float32).reshape(3 * H, 1, hd)
    out_w = params["out_w"].astype(jnp.float32)                       # (D, D)
    ow = out_w.reshape(D, H, hd).transpose(1, 0, 2).astype(jnp.bfloat16)   # (H, D, hd)

    kernel = functools.partial(
        manner_entity_encoder_kernel, num_heads=H, cols=B, seq=L)

    full2 = lambda n: (0, 0)
    full3 = lambda n: (0, 0, 0)

    return pl.pallas_call(
        kernel,
        out_shape=jax.ShapeDtypeStruct((N, L, D), jnp.float32),
        grid=(N,),                                       # one sample per grid step
        in_specs=[
            pl.BlockSpec((1, B * L, 1), lambda n: (n, 0, 0)),   # ids: per-sample block
            pl.BlockSpec((vocab, D), full2),                    # table/weights: constant
            pl.BlockSpec((3 * H, hd, D), full3),                # index maps -> VMEM-resident
            pl.BlockSpec((3 * H, 1, hd), full3),
            pl.BlockSpec((H, D, hd), full3),
            pl.BlockSpec((1, D), full2),
            pl.BlockSpec((Q, D), full2),
            pl.BlockSpec((1, Q), full2),
            pl.BlockSpec((1, Q), full2),
        ],
        out_specs=pl.BlockSpec((1, L, D), lambda n: (n, 0, 0)),
        compiler_params=pltpu.CompilerParams(
            dimension_semantics=("parallel",),           # shard samples across TCs on v7x
        ),
    )(
        ids,
        params["embedding"].astype(jnp.bfloat16),
        qkv_w, qkv_b, ow,
        params["out_b"].astype(jnp.float32),
        params["add_w"].astype(jnp.bfloat16),
        params["add_b"].astype(jnp.float32),
        params["add_q"].astype(jnp.float32),
    )


def _reference_single(entity_sequence, params, *, num_heads):
    """Pure-JAX f32 reference mirroring the PyTorch forward (eval mode) for one sample."""
    x = params["embedding"][entity_sequence].astype(jnp.float32)      # (L, B, D)
    L, B, D = x.shape
    H, hd = num_heads, D // num_heads
    in_w, in_b = params["in_w"], params["in_b"][0]

    q = x @ in_w[:D].T + in_b[:D]
    k = x @ in_w[D:2 * D].T + in_b[D:2 * D]
    v = x @ in_w[2 * D:].T + in_b[2 * D:]

    def to_heads(t):
        return t.reshape(L, B, H, hd).transpose(1, 2, 0, 3)           # (B, H, L, hd)

    qh, kh, vh = to_heads(q), to_heads(k), to_heads(v)
    scores = jnp.einsum("bhld,bhmd->bhlm", qh, kh) / jnp.sqrt(jnp.float32(hd))
    p = jax.nn.softmax(scores, axis=-1)
    attn = jnp.einsum("bhlm,bhmd->bhld", p, vh)
    attn = attn.transpose(2, 0, 1, 3).reshape(L, B, D)
    mha = attn @ params["out_w"].T + params["out_b"][0]               # (L, B, D)

    a = jnp.tanh(mha @ params["add_w"].T + params["add_b"][0])        # (L, B, Q)
    s = a @ params["add_q"][0]                                        # (L, B)
    w = jax.nn.softmax(s, axis=1)
    return jnp.einsum("lb,lbd->ld", w, mha)                           # (L, D)


def manner_entity_encoder_reference(entity_sequences, params, *, num_heads):
    return jax.vmap(
        lambda seq: _reference_single(seq, params, num_heads=num_heads)
    )(entity_sequences)


if __name__ == "__main__":
    # Small, module-consistent shapes.
    VOCAB = 50          # pretrained_embedding rows
    D = 32              # embedding_dim
    H = 2               # num_attention_heads
    Q = 16              # query_vector_dim
    L, B = 4, 8         # per-sample entity_sequence shape (dim0, dim1)
    N = 4               # samples in the rec batch (grid axis)

    key = jax.random.PRNGKey(0)
    keys = jax.random.split(key, 9)

    params = {
        "embedding": jax.random.normal(keys[0], (VOCAB, D), jnp.float32) * 0.5,
        "in_w":      jax.random.normal(keys[1], (3 * D, D), jnp.float32) * 0.1,
        "in_b":      jax.random.normal(keys[2], (1, 3 * D), jnp.float32) * 0.01,
        "out_w":     jax.random.normal(keys[3], (D, D), jnp.float32) * 0.1,
        "out_b":     jax.random.normal(keys[4], (1, D), jnp.float32) * 0.01,
        "add_w":     jax.random.normal(keys[5], (Q, D), jnp.float32) * 0.1,
        "add_b":     jax.random.normal(keys[6], (1, Q), jnp.float32) * 0.01,
        "add_q":     jax.random.normal(keys[7], (1, Q), jnp.float32) * 0.1,
    }
    entity_sequences = jax.random.randint(keys[8], (N, L, B), 0, VOCAB, dtype=jnp.int32)

    out = manner_entity_encoder(entity_sequences, params, num_heads=H)
    out = jax.block_until_ready(out)

    ref = manner_entity_encoder_reference(entity_sequences, params, num_heads=H)
    assert out.shape == (N, L, D)
    max_err = float(jnp.max(jnp.abs(out - ref)))
    # bf16 MXU operands vs f32 reference -> loosened tolerance (per perf review).
    assert jnp.allclose(out, ref, atol=2e-2, rtol=2e-2), max_err

    print("KERNEL_OK")
</pallas_src>

<mosaic_0001>
module attributes {stable_mosaic.version = 11 : i64} {
  func.func @manner_entity_encoder_kernel(%arg0: i32, %arg1: memref<1x32x1xi32, #tpu.memory_space<vmem>>, %arg2: memref<50x32xbf16, #tpu.memory_space<vmem>>, %arg3: memref<6x16x32xbf16, #tpu.memory_space<vmem>>, %arg4: memref<6x1x16xf32, #tpu.memory_space<vmem>>, %arg5: memref<2x32x16xbf16, #tpu.memory_space<vmem>>, %arg6: memref<1x32xf32, #tpu.memory_space<vmem>>, %arg7: memref<16x32xbf16, #tpu.memory_space<vmem>>, %arg8: memref<1x16xf32, #tpu.memory_space<vmem>>, %arg9: memref<1x16xf32, #tpu.memory_space<vmem>>, %arg10: memref<1x4x32xf32, #tpu.memory_space<vmem>>) attributes {dimension_semantics = [#tpu.dimension_semantics<parallel>], iteration_bounds = array<i64: 4>, scalar_prefetch = 0 : i64, scratch_operands = 0 : i64, tpu.core_type = #tpu.core_type<tc>, window_params = [{transform_indices = @transform_0, window_bounds = array<i64: 1, 32, 1>}, {pipeline_mode = #tpu.pipeline_mode<synchronous>, transform_indices = @transform_1, window_bounds = array<i64: 50, 32>}, {pipeline_mode = #tpu.pipeline_mode<synchronous>, transform_indices = @transform_2, window_bounds = array<i64: 6, 16, 32>}, {pipeline_mode = #tpu.pipeline_mode<synchronous>, transform_indices = @transform_3, window_bounds = array<i64: 6, 1, 16>}, {pipeline_mode = #tpu.pipeline_mode<synchronous>, transform_indices = @transform_4, window_bounds = array<i64: 2, 32, 16>}, {pipeline_mode = #tpu.pipeline_mode<synchronous>, transform_indices = @transform_5, window_bounds = array<i64: 1, 32>}, {pipeline_mode = #tpu.pipeline_mode<synchronous>, transform_indices = @transform_6, window_bounds = array<i64: 16, 32>}, {pipeline_mode = #tpu.pipeline_mode<synchronous>, transform_indices = @transform_7, window_bounds = array<i64: 1, 16>}, {pipeline_mode = #tpu.pipeline_mode<synchronous>, transform_indices = @transform_8, window_bounds = array<i64: 1, 16>}, {transform_indices = @transform_9, window_bounds = array<i64: 1, 4, 32>}]} {
    %c0 = arith.constant 0 : index
    %c0_0 = arith.constant 0 : index
    %c0_1 = arith.constant 0 : index
    %0 = vector.load %arg1[%c0, %c0_0, %c0_1] : memref<1x32x1xi32, #tpu.memory_space<vmem>>, vector<1x32x1xi32>
    %1 = vector.shape_cast %0 : vector<1x32x1xi32> to vector<32x1xi32>
    %2 = tpu.iota {dimensions = array<i32: 1>} : vector<32x50xi32>
    %3 = vector.broadcast %1 : vector<32x1xi32> to vector<32x50xi32>
    %4 = arith.cmpi eq, %2, %3 : vector<32x50xi32>
    %5 = arith.extui %4 : vector<32x50xi1> to vector<32x50xi32>
    %6 = arith.sitofp %5 : vector<32x50xi32> to vector<32x50xf32>
    %7 = arith.truncf %6 : vector<32x50xf32> to vector<32x50xbf16>
    %c0_2 = arith.constant 0 : index
    %c0_3 = arith.constant 0 : index
    %8 = vector.load %arg2[%c0_2, %c0_3] : memref<50x32xbf16, #tpu.memory_space<vmem>>, vector<50x32xbf16>
    %cst = arith.constant dense<0.000000e+00> : vector<32x32xf32>
    %9 = tpu.matmul %7, %8, %cst {dimension_numbers = #tpu.dot_dimension_numbers<[1], [0], [0], [1], [0, 0, 1, 1], [], []>} : vector<32x50xbf16>, vector<50x32xbf16>, vector<32x32xf32> -> vector<32x32xf32>
    %10 = arith.truncf %9 : vector<32x32xf32> to vector<32x32xbf16>
    %cst_4 = arith.constant 0.000000e+00 : f32
    %11 = vector.broadcast %cst_4 : f32 to vector<32x32xf32>
    %c0_5 = arith.constant 0 : index
    %c0_6 = arith.constant 0 : index
    %c0_7 = arith.constant 0 : index
    %12 = vector.load %arg3[%c0_5, %c0_6, %c0_7] : memref<6x16x32xbf16, #tpu.memory_space<vmem>>, vector<1x16x32xbf16>
    %13 = vector.shape_cast %12 : vector<1x16x32xbf16> to vector<16x32xbf16>
    %cst_8 = arith.constant dense<0.000000e+00> : vector<32x16xf32>
    %14 = tpu.matmul %10, %13, %cst_8 {dimension_numbers = #tpu.dot_dimension_numbers<[1], [1], [0], [0], [0, 0, 1, 0], [], []>} : vector<32x32xbf16>, vector<16x32xbf16>, vector<32x16xf32> -> vector<32x16xf32>
    %c0_9 = arith.constant 0 : index
    %c0_10 = arith.constant 0 : index
    %c0_11 = arith.constant 0 : index
    %15 = vector.load %arg4[%c0_9, %c0_10, %c0_11] : memref<6x1x16xf32, #tpu.memory_space<vmem>>, vector<1x1x16xf32>
    %16 = vector.shape_cast %15 : vector<1x1x16xf32> to vector<1x16xf32>
    %17 = vector.broadcast %16 : vector<1x16xf32> to vector<32x16xf32>
    %18 = arith.addf %14, %17 : vector<32x16xf32>
    %c2 = arith.constant 2 : index
    %c0_12 = arith.constant 0 : index
    %c0_13 = arith.constant 0 : index
    %19 = vector.load %arg3[%c2, %c0_12, %c0_13] : memref<6x16x32xbf16, #tpu.memory_space<vmem>>, vector<1x16x32xbf16>
    %20 = vector.shape_cast %19 : vector<1x16x32xbf16> to vector<16x32xbf16>
    %cst_14 = arith.constant dense<0.000000e+00> : vector<32x16xf32>
    %21 = tpu.matmul %10, %20, %cst_14 {dimension_numbers = #tpu.dot_dimension_numbers<[1], [1], [0], [0], [0, 0, 1, 0], [], []>} : vector<32x32xbf16>, vector<16x32xbf16>, vector<32x16xf32> -> vector<32x16xf32>
    %c2_15 = arith.constant 2 : index
    %c0_16 = arith.constant 0 : index
    %c0_17 = arith.constant 0 : index
    %22 = vector.load %arg4[%c2_15, %c0_16, %c0_17] : memref<6x1x16xf32, #tpu.memory_space<vmem>>, vector<1x1x16xf32>
    %23 = vector.shape_cast %22 : vector<1x1x16xf32> to vector<1x16xf32>
    %24 = vector.broadcast %23 : vector<1x16xf32> to vector<32x16xf32>
    %25 = arith.addf %21, %24 : vector<32x16xf32>
    %c4 = arith.constant 4 : index
    %c0_18 = arith.constant 0 : index
    %c0_19 = arith.constant 0 : index
    %26 = vector.load %arg3[%c4, %c0_18, %c0_19] : memref<6x16x32xbf16, #tpu.memory_space<vmem>>, vector<1x16x32xbf16>
    %27 = vector.shape_cast %26 : vector<1x16x32xbf16> to vector<16x32xbf16>
    %cst_20 = arith.constant dense<0.000000e+00> : vector<32x16xf32>
    %28 = tpu.matmul %10, %27, %cst_20 {dimension_numbers = #tpu.dot_dimension_numbers<[1], [1], [0], [0], [0, 0, 1, 0], [], []>} : vector<32x32xbf16>, vector<16x32xbf16>, vector<32x16xf32> -> vector<32x16xf32>
    %c4_21 = arith.constant 4 : index
    %c0_22 = arith.constant 0 : index
    %c0_23 = arith.constant 0 : index
    %29 = vector.load %arg4[%c4_21, %c0_22, %c0_23] : memref<6x1x16xf32, #tpu.memory_space<vmem>>, vector<1x1x16xf32>
    %30 = vector.shape_cast %29 : vector<1x1x16xf32> to vector<1x16xf32>
    %31 = vector.broadcast %30 : vector<1x16xf32> to vector<32x16xf32>
    %32 = arith.addf %28, %31 : vector<32x16xf32>
    %33 = vector.shape_cast %18 : vector<32x16xf32> to vector<8x4x16xf32>
    %34 = arith.truncf %33 : vector<8x4x16xf32> to vector<8x4x16xbf16>
    %35 = vector.shape_cast %25 : vector<32x16xf32> to vector<8x4x16xf32>
    %36 = arith.truncf %35 : vector<8x4x16xf32> to vector<8x4x16xbf16>
    %37 = vector.shape_cast %32 : vector<32x16xf32> to vector<8x4x16xf32>
    %38 = arith.truncf %37 : vector<8x4x16xf32> to vector<8x4x16xbf16>
    "tpu.trace_start"() <{level = 10 : i32, message = "bld,bmd->blm"}> : () -> ()
    %cst_24 = arith.constant dense<0.000000e+00> : vector<8x4x4xf32>
    %39 = tpu.matmul %34, %36, %cst_24 {dimension_numbers = #tpu.dot_dimension_numbers<[2], [2], [1], [1], [0, 0, 0, 1, 1, 1], [0], [0]>} : vector<8x4x16xbf16>, vector<8x4x16xbf16>, vector<8x4x4xf32> -> vector<8x4x4xf32>
    "tpu.trace_stop"() : () -> ()
    %cst_25 = arith.constant 2.500000e-01 : f32
    %40 = vector.broadcast %cst_25 : f32 to vector<8x4x4xf32>
    %41 = arith.mulf %39, %40 : vector<8x4x4xf32>
    %cst_26 = arith.constant dense<0xFF800000> : vector<8x4xf32>
    %42 = vector.multi_reduction <maximumf>, %41, %cst_26 [2] : vector<8x4x4xf32> to vector<8x4xf32>
    %43 = vector.shape_cast %42 : vector<8x4xf32> to vector<8x4x1xf32>
    %44 = vector.broadcast %43 : vector<8x4x1xf32> to vector<8x4x4xf32>
    %45 = arith.subf %41, %44 : vector<8x4x4xf32>
    %46 = math.exp %45 : vector<8x4x4xf32>
    %cst_27 = arith.constant dense<0.000000e+00> : vector<8x4xf32>
    %47 = vector.multi_reduction <add>, %46, %cst_27 [2] : vector<8x4x4xf32> to vector<8x4xf32>
    %48 = vector.shape_cast %47 : vector<8x4xf32> to vector<8x4x1xf32>
    %49 = vector.broadcast %48 : vector<8x4x1xf32> to vector<8x4x4xf32>
    %50 = arith.divf %46, %49 : vector<8x4x4xf32>
    %51 = arith.truncf %50 : vector<8x4x4xf32> to vector<8x4x4xbf16>
    "tpu.trace_start"() <{level = 10 : i32, message = "blm,bmd->bld"}> : () -> ()
    %cst_28 = arith.constant dense<0.000000e+00> : vector<8x4x16xf32>
    %52 = tpu.matmul %51, %38, %cst_28 {dimension_numbers = #tpu.dot_dimension_numbers<[2], [1], [1], [2], [0, 0, 0, 1, 1, 2], [0], [0]>} : vector<8x4x4xbf16>, vector<8x4x16xbf16>, vector<8x4x16xf32> -> vector<8x4x16xf32>
    "tpu.trace_stop"() : () -> ()
    %53 = vector.shape_cast %52 : vector<8x4x16xf32> to vector<32x16xf32>
    %54 = arith.truncf %53 : vector<32x16xf32> to vector<32x16xbf16>
    %c0_29 = arith.constant 0 : index
    %c0_30 = arith.constant 0 : index
    %c0_31 = arith.constant 0 : index
    %55 = vector.load %arg5[%c0_29, %c0_30, %c0_31] : memref<2x32x16xbf16, #tpu.memory_space<vmem>>, vector<1x32x16xbf16>
    %56 = vector.shape_cast %55 : vector<1x32x16xbf16> to vector<32x16xbf16>
    %cst_32 = arith.constant dense<0.000000e+00> : vector<32x32xf32>
    %57 = tpu.matmul %54, %56, %cst_32 {dimension_numbers = #tpu.dot_dimension_numbers<[1], [1], [0], [0], [0, 0, 1, 0], [], []>} : vector<32x16xbf16>, vector<32x16xbf16>, vector<32x32xf32> -> vector<32x32xf32>
    %58 = arith.addf %11, %57 : vector<32x32xf32>
    %c1 = arith.constant 1 : index
    %c0_33 = arith.constant 0 : index
    %c0_34 = arith.constant 0 : index
    %59 = vector.load %arg3[%c1, %c0_33, %c0_34] : memref<6x16x32xbf16, #tpu.memory_space<vmem>>, vector<1x16x32xbf16>
    %60 = vector.shape_cast %59 : vector<1x16x32xbf16> to vector<16x32xbf16>
    %cst_35 = arith.constant dense<0.000000e+00> : vector<32x16xf32>
    %61 = tpu.matmul %10, %60, %cst_35 {dimension_numbers = #tpu.dot_dimension_numbers<[1], [1], [0], [0], [0, 0, 1, 0], [], []>} : vector<32x32xbf16>, vector<16x32xbf16>, vector<32x16xf32> -> vector<32x16xf32>
    %c1_36 = arith.constant 1 : index
    %c0_37 = arith.constant 0 : index
    %c0_38 = arith.constant 0 : index
    %62 = vector.load %arg4[%c1_36, %c0_37, %c0_38] : memref<6x1x16xf32, #tpu.memory_space<vmem>>, vector<1x1x16xf32>
    %63 = vector.shape_cast %62 : vector<1x1x16xf32> to vector<1x16xf32>
    %64 = vector.broadcast %63 : vector<1x16xf32> to vector<32x16xf32>
    %65 = arith.addf %61, %64 : vector<32x16xf32>
    %c3 = arith.constant 3 : index
    %c0_39 = arith.constant 0 : index
    %c0_40 = arith.constant 0 : index
    %66 = vector.load %arg3[%c3, %c0_39, %c0_40] : memref<6x16x32xbf16, #tpu.memory_space<vmem>>, vector<1x16x32xbf16>
    %67 = vector.shape_cast %66 : vector<1x16x32xbf16> to vector<16x32xbf16>
    %cst_41 = arith.constant dense<0.000000e+00> : vector<32x16xf32>
    %68 = tpu.matmul %10, %67, %cst_41 {dimension_numbers = #tpu.dot_dimension_numbers<[1], [1], [0], [0], [0, 0, 1, 0], [], []>} : vector<32x32xbf16>, vector<16x32xbf16>, vector<32x16xf32> -> vector<32x16xf32>
    %c3_42 = arith.constant 3 : index
    %c0_43 = arith.constant 0 : index
    %c0_44 = arith.constant 0 : index
    %69 = vector.load %arg4[%c3_42, %c0_43, %c0_44] : memref<6x1x16xf32, #tpu.memory_space<vmem>>, vector<1x1x16xf32>
    %70 = vector.shape_cast %69 : vector<1x1x16xf32> to vector<1x16xf32>
    %71 = vector.broadcast %70 : vector<1x16xf32> to vector<32x16xf32>
    %72 = arith.addf %68, %71 : vector<32x16xf32>
    %c5 = arith.constant 5 : index
    %c0_45 = arith.constant 0 : index
    %c0_46 = arith.constant 0 : index
    %73 = vector.load %arg3[%c5, %c0_45, %c0_46] : memref<6x16x32xbf16, #tpu.memory_space<vmem>>, vector<1x16x32xbf16>
    %74 = vector.shape_cast %73 : vector<1x16x32xbf16> to vector<16x32xbf16>
    %cst_47 = arith.constant dense<0.000000e+00> : vector<32x16xf32>
    %75 = tpu.matmul %10, %74, %cst_47 {dimension_numbers = #tpu.dot_dimension_numbers<[1], [1], [0], [0], [0, 0, 1, 0], [], []>} : vector<32x32xbf16>, vector<16x32xbf16>, vector<32x16xf32> -> vector<32x16xf32>
    %c5_48 = arith.constant 5 : index
    %c0_49 = arith.constant 0 : index
    %c0_50 = arith.constant 0 : index
    %76 = vector.load %arg4[%c5_48, %c0_49, %c0_50] : memref<6x1x16xf32, #tpu.memory_space<vmem>>, vector<1x1x16xf32>
    %77 = vector.shape_cast %76 : vector<1x1x16xf32> to vector<1x16xf32>
    %78 = vector.broadcast %77 : vector<1x16xf32> to vector<32x16xf32>
    %79 = arith.addf %75, %78 : vector<32x16xf32>
    %80 = vector.shape_cast %65 : vector<32x16xf32> to vector<8x4x16xf32>
    %81 = arith.truncf %80 : vector<8x4x16xf32> to vector<8x4x16xbf16>
    %82 = vector.shape_cast %72 : vector<32x16xf32> to vector<8x4x16xf32>
    %83 = arith.truncf %82 : vector<8x4x16xf32> to vector<8x4x16xbf16>
    %84 = vector.shape_cast %79 : vector<32x16xf32> to vector<8x4x16xf32>
    %85 = arith.truncf %84 : vector<8x4x16xf32> to vector<8x4x16xbf16>
    "tpu.trace_start"() <{level = 10 : i32, message = "bld,bmd->blm"}> : () -> ()
    %cst_51 = arith.constant dense<0.000000e+00> : vector<8x4x4xf32>
    %86 = tpu.matmul %81, %83, %cst_51 {dimension_numbers = #tpu.dot_dimension_numbers<[2], [2], [1], [1], [0, 0, 0, 1, 1, 1], [0], [0]>} : vector<8x4x16xbf16>, vector<8x4x16xbf16>, vector<8x4x4xf32> -> vector<8x4x4xf32>
    "tpu.trace_stop"() : () -> ()
    %cst_52 = arith.constant 2.500000e-01 : f32
    %87 = vector.broadcast %cst_52 : f32 to vector<8x4x4xf32>
    %88 = arith.mulf %86, %87 : vector<8x4x4xf32>
    %cst_53 = arith.constant dense<0xFF800000> : vector<8x4xf32>
    %89 = vector.multi_reduction <maximumf>, %88, %cst_53 [2] : vector<8x4x4xf32> to vector<8x4xf32>
    %90 = vector.shape_cast %89 : vector<8x4xf32> to vector<8x4x1xf32>
    %91 = vector.broadcast %90 : vector<8x4x1xf32> to vector<8x4x4xf32>
    %92 = arith.subf %88, %91 : vector<8x4x4xf32>
    %93 = math.exp %92 : vector<8x4x4xf32>
    %cst_54 = arith.constant dense<0.000000e+00> : vector<8x4xf32>
    %94 = vector.multi_reduction <add>, %93, %cst_54 [2] : vector<8x4x4xf32> to vector<8x4xf32>
    %95 = vector.shape_cast %94 : vector<8x4xf32> to vector<8x4x1xf32>
    %96 = vector.broadcast %95 : vector<8x4x1xf32> to vector<8x4x4xf32>
    %97 = arith.divf %93, %96 : vector<8x4x4xf32>
    %98 = arith.truncf %97 : vector<8x4x4xf32> to vector<8x4x4xbf16>
    "tpu.trace_start"() <{level = 10 : i32, message = "blm,bmd->bld"}> : () -> ()
    %cst_55 = arith.constant dense<0.000000e+00> : vector<8x4x16xf32>
    %99 = tpu.matmul %98, %85, %cst_55 {dimension_numbers = #tpu.dot_dimension_numbers<[2], [1], [1], [2], [0, 0, 0, 1, 1, 2], [0], [0]>} : vector<8x4x4xbf16>, vector<8x4x16xbf16>, vector<8x4x16xf32> -> vector<8x4x16xf32>
    "tpu.trace_stop"() : () -> ()
    %100 = vector.shape_cast %99 : vector<8x4x16xf32> to vector<32x16xf32>
    %101 = arith.truncf %100 : vector<32x16xf32> to vector<32x16xbf16>
    %c1_56 = arith.constant 1 : index
    %c0_57 = arith.constant 0 : index
    %c0_58 = arith.constant 0 : index
    %102 = vector.load %arg5[%c1_56, %c0_57, %c0_58] : memref<2x32x16xbf16, #tpu.memory_space<vmem>>, vector<1x32x16xbf16>
    %103 = vector.shape_cast %102 : vector<1x32x16xbf16> to vector<32x16xbf16>
    %cst_59 = arith.constant dense<0.000000e+00> : vector<32x32xf32>
    %104 = tpu.matmul %101, %103, %cst_59 {dimension_numbers = #tpu.dot_dimension_numbers<[1], [1], [0], [0], [0, 0, 1, 0], [], []>} : vector<32x16xbf16>, vector<32x16xbf16>, vector<32x32xf32> -> vector<32x32xf32>
    %105 = arith.addf %58, %104 : vector<32x32xf32>
    %c0_60 = arith.constant 0 : index
    %c0_61 = arith.constant 0 : index
    %106 = vector.load %arg6[%c0_60, %c0_61] : memref<1x32xf32, #tpu.memory_space<vmem>>, vector<1x32xf32>
    %107 = vector.broadcast %106 : vector<1x32xf32> to vector<32x32xf32>
    %108 = arith.addf %105, %107 : vector<32x32xf32>
    %109 = arith.truncf %108 : vector<32x32xf32> to vector<32x32xbf16>
    %c0_62 = arith.constant 0 : index
    %c0_63 = arith.constant 0 : index
    %110 = vector.load %arg7[%c0_62, %c0_63] : memref<16x32xbf16, #tpu.memory_space<vmem>>, vector<16x32xbf16>
    %cst_64 = arith.constant dense<0.000000e+00> : vector<32x16xf32>
    %111 = tpu.matmul %109, %110, %cst_64 {dimension_numbers = #tpu.dot_dimension_numbers<[1], [1], [0], [0], [0, 0, 1, 0], [], []>} : vector<32x32xbf16>, vector<16x32xbf16>, vector<32x16xf32> -> vector<32x16xf32>
    %c0_65 = arith.constant 0 : index
    %c0_66 = arith.constant 0 : index
    %112 = vector.load %arg8[%c0_65, %c0_66] : memref<1x16xf32, #tpu.memory_space<vmem>>, vector<1x16xf32>
    %113 = vector.broadcast %112 : vector<1x16xf32> to vector<32x16xf32>
    %114 = arith.addf %111, %113 : vector<32x16xf32>
    %115 = math.tanh %114 : vector<32x16xf32>
    %c0_67 = arith.constant 0 : index
    %c0_68 = arith.constant 0 : index
    %116 = vector.load %arg9[%c0_67, %c0_68] : memref<1x16xf32, #tpu.memory_space<vmem>>, vector<1x16xf32>
    %117 = vector.broadcast %116 : vector<1x16xf32> to vector<32x16xf32>
    %118 = arith.mulf %115, %117 : vector<32x16xf32>
    %cst_69 = arith.constant dense<0.000000e+00> : vector<32xf32>
    %119 = vector.multi_reduction <add>, %118, %cst_69 [1] : vector<32x16xf32> to vector<32xf32>
    %120 = vector.shape_cast %119 : vector<32xf32> to vector<32x1xf32>
    %121 = vector.shape_cast %120 : vector<32x1xf32> to vector<8x4x1xf32>
    %cst_70 = arith.constant dense<0xFF800000> : vector<4x1xf32>
    %122 = vector.multi_reduction <maximumf>, %121, %cst_70 [0] : vector<8x4x1xf32> to vector<4x1xf32>
    %123 = vector.shape_cast %122 : vector<4x1xf32> to vector<1x4x1xf32>
    %124 = vector.broadcast %123 : vector<1x4x1xf32> to vector<8x4x1xf32>
    %125 = arith.subf %121, %124 : vector<8x4x1xf32>
    %126 = math.exp %125 : vector<8x4x1xf32>
    %cst_71 = arith.constant dense<0.000000e+00> : vector<4x1xf32>
    %127 = vector.multi_reduction <add>, %126, %cst_71 [0] : vector<8x4x1xf32> to vector<4x1xf32>
    %128 = vector.shape_cast %127 : vector<4x1xf32> to vector<1x4x1xf32>
    %129 = vector.broadcast %128 : vector<1x4x1xf32> to vector<8x4x1xf32>
    %130 = arith.divf %126, %129 : vector<8x4x1xf32>
    %131 = vector.shape_cast %108 : vector<32x32xf32> to vector<8x4x32xf32>
    %132 = vector.broadcast %130 : vector<8x4x1xf32> to vector<8x4x32xf32>
    %133 = arith.mulf %131, %132 : vector<8x4x32xf32>
    %cst_72 = arith.constant dense<0.000000e+00> : vector<4x32xf32>
    %134 = vector.multi_reduction <add>, %133, %cst_72 [0] : vector<8x4x32xf32> to vector<4x32xf32>
    %c0_73 = arith.constant 0 : index
    %c0_74 = arith.constant 0 : index
    %c0_75 = arith.constant 0 : index
    %135 = vector.load %arg10[%c0_73, %c0_74, %c0_75] : memref<1x4x32xf32, #tpu.memory_space<vmem>>, vector<1x4x32xf32>
    %136 = vector.shape_cast %135 : vector<1x4x32xf32> to vector<4x32xf32>
    %137 = vector.shape_cast %134 : vector<4x32xf32> to vector<1x4x32xf32>
    tpu.vector_store %arg10[%c0_73, %c0_74, %c0_75], %137 {strides = array<i32>} : memref<1x4x32xf32, #tpu.memory_space<vmem>>, vector<1x4x32xf32>,
    return
  }
  func.func @transform_0(%arg0: i32) -> (i32, i32, i32) {
    %c0_i32 = arith.constant 0 : i32
    %c0_i32_0 = arith.constant 0 : i32
    %c0_i32_1 = arith.constant 0 : i32
    return %arg0, %c0_i32, %c0_i32_0 : i32, i32, i32
  }
  func.func @transform_1(%arg0: i32) -> (i32, i32) {
    %c0_i32 = arith.constant 0 : i32
    %c0_i32_0 = arith.constant 0 : i32
    %c0_i32_1 = arith.constant 0 : i32
    return %c0_i32, %c0_i32_0 : i32, i32
  }
  func.func @transform_2(%arg0: i32) -> (i32, i32, i32) {
    %c0_i32 = arith.constant 0 : i32
    %c0_i32_0 = arith.constant 0 : i32
    %c0_i32_1 = arith.constant 0 : i32
    %c0_i32_2 = arith.constant 0 : i32
    return %c0_i32, %c0_i32_0, %c0_i32_1 : i32, i32, i32
  }
  func.func @transform_3(%arg0: i32) -> (i32, i32, i32) {
    %c0_i32 = arith.constant 0 : i32
    %c0_i32_0 = arith.constant 0 : i32
    %c0_i32_1 = arith.constant 0 : i32
    %c0_i32_2 = arith.constant 0 : i32
    return %c0_i32, %c0_i32_0, %c0_i32_1 : i32, i32, i32
  }
  func.func @transform_4(%arg0: i32) -> (i32, i32, i32) {
    %c0_i32 = arith.constant 0 : i32
    %c0_i32_0 = arith.constant 0 : i32
    %c0_i32_1 = arith.constant 0 : i32
    %c0_i32_2 = arith.constant 0 : i32
    return %c0_i32, %c0_i32_0, %c0_i32_1 : i32, i32, i32
  }
  func.func @transform_5(%arg0: i32) -> (i32, i32) {
    %c0_i32 = arith.constant 0 : i32
    %c0_i32_0 = arith.constant 0 : i32
    %c0_i32_1 = arith.constant 0 : i32
    return %c0_i32, %c0_i32_0 : i32, i32
  }
  func.func @transform_6(%arg0: i32) -> (i32, i32) {
    %c0_i32 = arith.constant 0 : i32
    %c0_i32_0 = arith.constant 0 : i32
    %c0_i32_1 = arith.constant 0 : i32
    return %c0_i32, %c0_i32_0 : i32, i32
  }
  func.func @transform_7(%arg0: i32) -> (i32, i32) {
    %c0_i32 = arith.constant 0 : i32
    %c0_i32_0 = arith.constant 0 : i32
    %c0_i32_1 = arith.constant 0 : i32
    return %c0_i32, %c0_i32_0 : i32, i32
  }
  func.func @transform_8(%arg0: i32) -> (i32, i32) {
    %c0_i32 = arith.constant 0 : i32
    %c0_i32_0 = arith.constant 0 : i32
    %c0_i32_1 = arith.constant 0 : i32
    return %c0_i32, %c0_i32_0 : i32, i32
  }
  func.func @transform_9(%arg0: i32) -> (i32, i32, i32) {
    %c0_i32 = arith.constant 0 : i32
    %c0_i32_0 = arith.constant 0 : i32
    %c0_i32_1 = arith.constant 0 : i32
    return %arg0, %c0_i32, %c0_i32_0 : i32, i32, i32
  }
}

</mosaic_0001>

<llo_original>
// kernel: tpu_custom_call.1
$region0: #{tpu_custom_call.1}
  #allocation0 [shape = 'u32[]', space=smem, size = 0x4, offset = 0x4, fixed_abs, tag = 'smem constant byte address 0x4 - core index']
  #allocation1 [shape = 'u32[144,128]{1,0:T(1,128)}', space=vmem, size = 0x12000, scoped, tag = 'internal scratch']
  %s0 = inlined_call_operand.vmem [shape: s32[4,32,1], index: 0, kind: input, shape index: {}]
  %s1 = inlined_call_operand.vmem [shape: bf16[50,32], index: 1, kind: input, shape index: {}]
  %s2 = inlined_call_operand.vmem [shape: bf16[6,16,32], index: 2, kind: input, shape index: {}]
  %s3 = inlined_call_operand.vmem [shape: f32[6,1,16], index: 3, kind: input, shape index: {}]
  %s4 = inlined_call_operand.vmem [shape: bf16[2,32,16], index: 4, kind: input, shape index: {}]
  %s5 = inlined_call_operand.vmem [shape: f32[1,32], index: 5, kind: input, shape index: {}]
  %s6 = inlined_call_operand.vmem [shape: bf16[16,32], index: 6, kind: input, shape index: {}]
  %s7 = inlined_call_operand.vmem [shape: f32[1,16], index: 7, kind: input, shape index: {}]
  %s8 = inlined_call_operand.vmem [shape: f32[1,16], index: 8, kind: input, shape index: {}]
  %s9 = inlined_call_operand.hbm [shape: f32[4,4,32], index: 9, kind: output, shape index: {}]
  %s10 = sld [smem:[#allocation0]]
  $region69: #{tpu_custom_call.1} parent=0
    _
  %s12 = ssub.s32 1, %s10
  %s13 = scalar_select 0, %s12, %s10
  $region1: #{tpu_custom_call.1} parent=0
    #allocation2 [shape = 'u8[4096]{0}', space=vmem, size = 0x1000, scoped, tag = 'output window, operand 0']
    #allocation3 [shape = 's32[2]{0}', space=sflag, size = 0x8, scoped, tag = 'scoped memory for tpu_custom_call.1']
    %14 = vsyncpa [#allocation3], 0
    %s15 = scalar_lea.sflag [#allocation3], 1
    %16 = vsyncpa %s15, 0
    loop: start=0, step=1, limit=6
    $region2: #{tpu_custom_call.1} parent=1 // loop_pre_header
      _
    $region3: #{tpu_custom_call.1} parent=1 // loop_header
      %s18 = sphi 0, %s22
      %p19 = scmp.ge.s32.totalorder %s18, 6
      %s28 = sphi 0, %s30
      %s31 = sphi 0, %s28
      %s32 = sphi 0, %s31
      %s48 = sphi 0, %s32
      %s52 = sphi 0, %s52
      %s54 = sphi 0, %s52
      %s55 = sphi 0, %s54
      %s69 = sphi 0, %s55
      %s73 = sphi 0, %s73
      %s75 = sphi 0, %s73
      %s76 = sphi 0, %s75
      %s90 = sphi 0, %s76
      %s94 = sphi 0, %s94
      %s96 = sphi 0, %s94
      %s97 = sphi 0, %s96
      %s111 = sphi 0, %s97
      %s115 = sphi 0, %s115
      %s117 = sphi 0, %s115
      %s118 = sphi 0, %s117
      %s132 = sphi 0, %s118
      %s136 = sphi 0, %s136
      %s138 = sphi 0, %s136
      %s139 = sphi 0, %s138
      %s153 = sphi 0, %s139
      %s157 = sphi 0, %s157
      %s159 = sphi 0, %s157
      %s160 = sphi 0, %s159
      %s174 = sphi 0, %s160
      %s178 = sphi 0, %s178
      %s180 = sphi 0, %s178
      %s181 = sphi 0, %s180
      %s195 = sphi 0, %s181
      %s199 = sphi 0, %s199
      %s201 = sphi 0, %s199
      %s202 = sphi 0, %s201
      %s216 = sphi 0, %s202
      %s222 = sphi 0, %s224
      %s225 = sphi 0, %s222
      %s226 = sphi 0, %s225
      %s242 = sphi 0, %s226
    $region4: #{tpu_custom_call.1} parent=1 // loop_header_branch
      %21 = sbr.rel (%p19) target = $region8
    $region5: #{tpu_custom_call.1} parent=1 // loop_body
      %s23 = ssub.s32 %s18, 1
      %s24 = ssub.s32 %s18, 2
      %s25 = sadd.s32 %s18, 1
      %s26 = ssub.s32 %s18, %s25
      %p27 = scmp.eq.s32.totalorder %s26, 0
      %s29 = sadd.s32 %s28, 1
      %s30 = scalar_select %p27, %s28, %s29
      %p33 = pneg %p27
      %p34 = scmp.eq.s32.totalorder %s18, 3
      %p35 = por %p33, %p34
      %p36 = scmp.ne.s32.totalorder %s28, %s31
      %p37 = scmp.eq.s32.totalorder %s18, 0
      %p38 = por %p36, %p37
      %p39 = scmp.ne.s32.totalorder %s28, %s31
      %p40 = scmp.eq.s32.totalorder %s23, 3
      %p41 = por %p39, %p40
      %p42 = scmp.ne.s32.totalorder %s31, %s32
      %p43 = scmp.eq.s32.totalorder %s23, 0
      %p44 = por %p42, %p43
      %p45 = scmp.ne.s32.totalorder %s31, %s32
      %p46 = scmp.eq.s32.totalorder %s24, 3
      %p47 = por %p45, %p46
      %p49 = scmp.ne.s32.totalorder %s32, %s48
      %p50 = scmp.eq.s32.totalorder %s24, 0
      %p51 = por %p49, %p50
      %s53 = sadd.s32 %s52, 1
      %p56 = scmp.eq.s32.totalorder %s18, 3
      %p57 = scmp.ne.s32.totalorder %s52, %s54
      %p58 = scmp.eq.s32.totalorder %s18, 0
      %p59 = por %p57, %p58
      %p60 = scmp.ne.s32.totalorder %s52, %s54
      %p61 = scmp.eq.s32.totalorder %s23, 3
      %p62 = por %p60, %p61
      %p63 = scmp.ne.s32.totalorder %s54, %s55
      %p64 = scmp.eq.s32.totalorder %s23, 0
      %p65 = por %p63, %p64
      %p66 = scmp.ne.s32.totalorder %s54, %s55
      %p67 = scmp.eq.s32.totalorder %s24, 3
      %p68 = por %p66, %p67
      %p70 = scmp.ne.s32.totalorder %s55, %s69
      %p71 = scmp.eq.s32.totalorder %s24, 0
      %p72 = por %p70, %p71
      %s74 = sadd.s32 %s73, 1
      %p77 = scmp.eq.s32.totalorder %s18, 3
      %p78 = scmp.ne.s32.totalorder %s73, %s75
      %p79 = scmp.eq.s32.totalorder %s18, 0
      %p80 = por %p78, %p79
      %p81 = scmp.ne.s32.totalorder %s73, %s75
      %p82 = scmp.eq.s32.totalorder %s23, 3
      %p83 = por %p81, %p82
      %p84 = scmp.ne.s32.totalorder %s75, %s76
      %p85 = scmp.eq.s32.totalorder %s23, 0
      %p86 = por %p84, %p85
      %p87 = scmp.ne.s32.totalorder %s75, %s76
      %p88 = scmp.eq.s32.totalorder %s24, 3
      %p89 = por %p87, %p88
      %p91 = scmp.ne.s32.totalorder %s76, %s90
      %p92 = scmp.eq.s32.totalorder %s24, 0
      %p93 = por %p91, %p92
      %s95 = sadd.s32 %s94, 1
      %p98 = scmp.eq.s32.totalorder %s18, 3
      %p99 = scmp.ne.s32.totalorder %s94, %s96
      %p100 = scmp.eq.s32.totalorder %s18, 0
      %p101 = por %p99, %p100
      %p102 = scmp.ne.s32.totalorder %s94, %s96
      %p103 = scmp.eq.s32.totalorder %s23, 3
      %p104 = por %p102, %p103
      %p105 = scmp.ne.s32.totalorder %s96, %s97
      %p106 = scmp.eq.s32.totalorder %s23, 0
      %p107 = por %p105, %p106
      %p108 = scmp.ne.s32.totalorder %s96, %s97
      %p109 = scmp.eq.s32.totalorder %s24, 3
      %p110 = por %p108, %p109
      %p112 = scmp.ne.s32.totalorder %s97, %s111
      %p113 = scmp.eq.s32.totalorder %s24, 0
      %p114 = por %p112, %p113
      %s116 = sadd.s32 %s115, 1
      %p119 = scmp.eq.s32.totalorder %s18, 3
      %p120 = scmp.ne.s32.totalorder %s115, %s117
      %p121 = scmp.eq.s32.totalorder %s18, 0
      %p122 = por %p120, %p121
      %p123 = scmp.ne.s32.totalorder %s115, %s117
      %p124 = scmp.eq.s32.totalorder %s23, 3
      %p125 = por %p123, %p124
      %p126 = scmp.ne.s32.totalorder %s117, %s118
      %p127 = scmp.eq.s32.totalorder %s23, 0
      %p128 = por %p126, %p127
      %p129 = scmp.ne.s32.totalorder %s117, %s118
      %p130 = scmp.eq.s32.totalorder %s24, 3
      %p131 = por %p129, %p130
      %p133 = scmp.ne.s32.totalorder %s118, %s132
      %p134 = scmp.eq.s32.totalorder %s24, 0
      %p135 = por %p133, %p134
      %s137 = sadd.s32 %s136, 1
      %p140 = scmp.eq.s32.totalorder %s18, 3
      %p141 = scmp.ne.s32.totalorder %s136, %s138
      %p142 = scmp.eq.s32.totalorder %s18, 0
      %p143 = por %p141, %p142
      %p144 = scmp.ne.s32.totalorder %s136, %s138
      %p145 = scmp.eq.s32.totalorder %s23, 3
      %p146 = por %p144, %p145
      %p147 = scmp.ne.s32.totalorder %s138, %s139
      %p148 = scmp.eq.s32.totalorder %s23, 0
      %p149 = por %p147, %p148
      %p150 = scmp.ne.s32.totalorder %s138, %s139
      %p151 = scmp.eq.s32.totalorder %s24, 3
      %p152 = por %p150, %p151
      %p154 = scmp.ne.s32.totalorder %s139, %s153
      %p155 = scmp.eq.s32.totalorder %s24, 0
      %p156 = por %p154, %p155
      %s158 = sadd.s32 %s157, 1
      %p161 = scmp.eq.s32.totalorder %s18, 3
      %p162 = scmp.ne.s32.totalorder %s157, %s159
      %p163 = scmp.eq.s32.totalorder %s18, 0
      %p164 = por %p162, %p163
      %p165 = scmp.ne.s32.totalorder %s157, %s159
      %p166 = scmp.eq.s32.totalorder %s23, 3
      %p167 = por %p165, %p166
      %p168 = scmp.ne.s32.totalorder %s159, %s160
      %p169 = scmp.eq.s32.totalorder %s23, 0
      %p170 = por %p168, %p169
      %p171 = scmp.ne.s32.totalorder %s159, %s160
      %p172 = scmp.eq.s32.totalorder %s24, 3
      %p173 = por %p171, %p172
      %p175 = scmp.ne.s32.totalorder %s160, %s174
      %p176 = scmp.eq.s32.totalorder %s24, 0
      %p177 = por %p175, %p176
      %s179 = sadd.s32 %s178, 1
      %p182 = scmp.eq.s32.totalorder %s18, 3
      %p183 = scmp.ne.s32.totalorder %s178, %s180
      %p184 = scmp.eq.s32.totalorder %s18, 0
      %p185 = por %p183, %p184
      %p186 = scmp.ne.s32.totalorder %s178, %s180
      %p187 = scmp.eq.s32.totalorder %s23, 3
      %p188 = por %p186, %p187
      %p189 = scmp.ne.s32.totalorder %s180, %s181
      %p190 = scmp.eq.s32.totalorder %s23, 0
      %p191 = por %p189, %p190
      %p192 = scmp.ne.s32.totalorder %s180, %s181
      %p193 = scmp.eq.s32.totalorder %s24, 3
      %p194 = por %p192, %p193
      %p196 = scmp.ne.s32.totalorder %s181, %s195
      %p197 = scmp.eq.s32.totalorder %s24, 0
      %p198 = por %p196, %p197
      %s200 = sadd.s32 %s199, 1
      %p203 = scmp.eq.s32.totalorder %s18, 3
      %p204 = scmp.ne.s32.totalorder %s199, %s201
      %p205 = scmp.eq.s32.totalorder %s18, 0
      %p206 = por %p204, %p205
      %p207 = scmp.ne.s32.totalorder %s199, %s201
      %p208 = scmp.eq.s32.totalorder %s23, 3
      %p209 = por %p207, %p208
      %p210 = scmp.ne.s32.totalorder %s201, %s202
      %p211 = scmp.eq.s32.totalorder %s23, 0
      %p212 = por %p210, %p211
      %p213 = scmp.ne.s32.totalorder %s201, %s202
      %p214 = scmp.eq.s32.totalorder %s24, 3
      %p215 = por %p213, %p214
      %p217 = scmp.ne.s32.totalorder %s202, %s216
      %p218 = scmp.eq.s32.totalorder %s24, 0
      %p219 = por %p217, %p218
      %s220 = ssub.s32 %s18, %s25
      %p221 = scmp.eq.s32.totalorder %s220, 0
      %s223 = sadd.s32 %s222, 1
      %s224 = scalar_select %p221, %s222, %s223
      %p227 = pneg %p221
      %p228 = scmp.eq.s32.totalorder %s18, 3
      %p229 = por %p227, %p228
      %p230 = scmp.ne.s32.totalorder %s222, %s225
      %p231 = scmp.eq.s32.totalorder %s18, 0
      %p232 = por %p230, %p231
      %p233 = scmp.ne.s32.totalorder %s222, %s225
      %p234 = scmp.eq.s32.totalorder %s23, 3
      %p235 = por %p233, %p234
      %p236 = scmp.ne.s32.totalorder %s225, %s226
      %p237 = scmp.eq.s32.totalorder %s23, 0
      %p238 = por %p236, %p237
      %p239 = scmp.ne.s32.totalorder %s225, %s226
      %p240 = scmp.eq.s32.totalorder %s24, 3
      %p241 = por %p239, %p240
      %p243 = scmp.ne.s32.totalorder %s226, %s242
      %p244 = scmp.eq.s32.totalorder %s24, 0
      %p245 = por %p243, %p244
      %p246 = scmp.le.s32.totalorder 1, %s18
      %p247 = scmp.lt.s32.totalorder %s18, 5
      %p248 = pnand %p246, %p247
      %p249 = pneg %p248
      // Predicated region
      $region9: #{tpu_custom_call.1} parent=5 // pred_check
        _
      $region10: #{tpu_custom_call.1} parent=5 // pred_check_branch
        %251 = sbr.rel (%p248) target = $region12
      $region11: #{tpu_custom_call.1} parent=5 // pred_region
        %s252 = ssub.s32 %s18, 1
        // Predicated region
        $region13: #{tpu_custom_call.1} parent=11 // pred_check
          %p253 = pneg %p65
        $region14: #{tpu_custom_call.1} parent=11 // pred_check_branch
          %255 = sbr.rel (%p253) target = $region16
        $region15: #{tpu_custom_call.1} parent=11 // pred_region
          _
        $region16: #{tpu_custom_call.1} parent=11 // pred_fallthru
          _
        // Predicated region
        $region17: #{tpu_custom_call.1} parent=11 // pred_check
          %p256 = pneg %p86
        $region18: #{tpu_custom_call.1} parent=11 // pred_check_branch
          %258 = sbr.rel (%p256) target = $region20
        $region19: #{tpu_custom_call.1} parent=11 // pred_region
          _
        $region20: #{tpu_custom_call.1} parent=11 // pred_fallthru
          _
        // Predicated region
        $region21: #{tpu_custom_call.1} parent=11 // pred_check
          %p259 = pneg %p107
        $region22: #{tpu_custom_call.1} parent=11 // pred_check_branch
          %261 = sbr.rel (%p259) target = $region24
        $region23: #{tpu_custom_call.1} parent=11 // pred_region
          _
        $region24: #{tpu_custom_call.1} parent=11 // pred_fallthru
          _
        // Predicated region
        $region25: #{tpu_custom_call.1} parent=11 // pred_check
          %p262 = pneg %p128
        $region26: #{tpu_custom_call.1} parent=11 // pred_check_branch
          %264 = sbr.rel (%p262) target = $region28
        $region27: #{tpu_custom_call.1} parent=11 // pred_region
          _
        $region28: #{tpu_custom_call.1} parent=11 // pred_fallthru
          _
        // Predicated region
        $region29: #{tpu_custom_call.1} parent=11 // pred_check
          %p265 = pneg %p149
        $region30: #{tpu_custom_call.1} parent=11 // pred_check_branch
          %267 = sbr.rel (%p265) target = $region32
        $region31: #{tpu_custom_call.1} parent=11 // pred_region
          _
        $region32: #{tpu_custom_call.1} parent=11 // pred_fallthru
          _
        // Predicated region
        $region33: #{tpu_custom_call.1} parent=11 // pred_check
          %p268 = pneg %p170
        $region34: #{tpu_custom_call.1} parent=11 // pred_check_branch
          %270 = sbr.rel (%p268) target = $region36
        $region35: #{tpu_custom_call.1} parent=11 // pred_region
          _
        $region36: #{tpu_custom_call.1} parent=11 // pred_fallthru
          _
        // Predicated region
        $region37: #{tpu_custom_call.1} parent=11 // pred_check
          %p271 = pneg %p191
        $region38: #{tpu_custom_call.1} parent=11 // pred_check_branch
          %273 = sbr.rel (%p271) target = $region40
        $region39: #{tpu_custom_call.1} parent=11 // pred_region
          _
        $region40: #{tpu_custom_call.1} parent=11 // pred_fallthru
          _
        // Predicated region
        $region41: #{tpu_custom_call.1} parent=11 // pred_check
          %p274 = pneg %p212
        $region42: #{tpu_custom_call.1} parent=11 // pred_check_branch
          %276 = sbr.rel (%p274) target = $region44
        $region43: #{tpu_custom_call.1} parent=11 // pred_region
          _
        $region44: #{tpu_custom_call.1} parent=11 // pred_fallthru
          _
      $region12: #{tpu_custom_call.1} parent=5 // pred_fallthru
        _
      %p277 = scmp.lt.s32.totalorder %s18, 4
      // Predicated region
      $region45: #{tpu_custom_call.1} parent=5 // pred_check
        %p278 = pneg %p277
      $region46: #{tpu_custom_call.1} parent=5 // pred_check_branch
        %280 = sbr.rel (%p278) target = $region48
      $region47: #{tpu_custom_call.1} parent=5 // pred_region
        // Predicated region
        $region49: #{tpu_custom_call.1} parent=47 // pred_check
          %p281 = pneg %p38
        $region50: #{tpu_custom_call.1} parent=47 // pred_check_branch
          %283 = sbr.rel (%p281) target = $region52
        $region51: #{tpu_custom_call.1} parent=47 // pred_region
          %p284 = scmp.lt.s32.totalorder %s18, 3
          %s285 = scalar_select %p284, %s18, 3
          %s286 = smul.addr %s285, 4
          %s287 = smul.addr %s286, 8
          %s288 = scalar_lea.vmem %s0, %s287
        $region52: #{tpu_custom_call.1} parent=47 // pred_fallthru
          _
      $region48: #{tpu_custom_call.1} parent=5 // pred_fallthru
        _
      %p289 = scmp.le.s32.totalorder 1, %s18
      %p290 = scmp.lt.s32.totalorder %s18, 5
      %p291 = pnand %p289, %p290
      %p292 = pneg %p291
      // Predicated region
      $region53: #{tpu_custom_call.1} parent=5 // pred_check
        _
      $region54: #{tpu_custom_call.1} parent=5 // pred_check_branch
        %294 = sbr.rel (%p291) target = $region56
      $region55: #{tpu_custom_call.1} parent=5 // pred_region
        %s295 = ssub.s32 %s18, 1
        %p296 = scmp.lt.s32.totalorder %s23, 3
        %s297 = scalar_select %p296, %s23, 3
        %s298 = smul.addr %s297, 4
        %s299 = smul.addr %s298, 8
        %s300 = scalar_lea.vmem %s0, %s299
        %p301 = pneg %p44
        %p302 = pneg %p41
        %p303 = pneg %p65
        %p304 = pneg %p62
        %p305 = pneg %p86
        %p306 = pneg %p83
        %p307 = pneg %p107
        %p308 = pneg %p104
        %p309 = pneg %p128
        %p310 = pneg %p125
        %p311 = pneg %p149
        %p312 = pneg %p146
        %p313 = pneg %p170
        %p314 = pneg %p167
        %p315 = pneg %p191
        %p316 = pneg %p188
        %p317 = pneg %p212
        %p318 = pneg %p209
        %p319 = pneg %p238
        %p320 = pneg %p235
        %s321 = sand.u32 %s225, 1
        %s322 = scalar_lea.sflag [#allocation3], %s321
        %s323 = sand.u32 %s225, 1
        %s324 = smul.addr %s323, 4
        %s325 = scalar_lea.vmem [#allocation2], %s324
        %p326 = scmp.lt.s32.totalorder %s23, 3
        %s327 = scalar_select %p326, %s23, 3
        %s328 = smul.addr %s327, 4
        %s329 = smul.addr %s328, 8
        %s330 = scalar_lea.vmem %s0, %s329
        %v332 = vld [vmem:[%s330] sm:$0xff]
        %v333 = vld [vmem:[%s330 + $0x8] sm:$0xff]
        %v334 = vld [vmem:[%s330 + $0x10] sm:$0xff]
        %v335 = vld [vmem:[%s330 + $0x18] sm:$0xff]
        %v336 = vlaneseq
        %v337 = vand.u32 %v336, 127
        %338 = vset.pattern.permute.xlu0 0
        %339 = vperm.xlu0 %338, %v332
        %v340 = vpop.permute.xlu0 %339
        %341 = vset.pattern.permute.xlu0 0
        %342 = vperm.xlu0 %341, %v333
        %v343 = vpop.permute.xlu0 %342
        %344 = vset.pattern.permute.xlu0 0
        %345 = vperm.xlu0 %344, %v334
        %v346 = vpop.permute.xlu0 %345
        %347 = vset.pattern.permute.xlu0 0
        %348 = vperm.xlu0 %347, %v335
        %v349 = vpop.permute.xlu0 %348
        %vm350 = vcmp.eq.s32.totalorder %v337, %v340
        %vm351 = vcmp.eq.s32.totalorder %v337, %v343
        %vm352 = vcmp.eq.s32.totalorder %v337, %v346
        %vm353 = vcmp.eq.s32.totalorder %v337, %v349
        %v354 = vsel %vm350, 1, 0
        %v355 = vsel %vm351, 1, 0
        %v356 = vsel %vm352, 1, 0
        %v357 = vsel %vm353, 1, 0
        %v358 = vcvt.s32.f32 %v354
        %v359 = vcvt.s32.f32 %v355
        %v360 = vcvt.s32.f32 %v356
        %v361 = vcvt.s32.f32 %v357
        %v362 = vpack.c.bf16 %v359, %v358
        %v363 = vpack.c.bf16 %v361, %v360
        %v364 = vld [vmem:[%s1] sm:$0xf]
        %v365 = vld [vmem:[%s1 + $0x4] sm:$0xf]
        %v366 = vld [vmem:[%s1 + $0x8] sm:$0xf]
        %v367 = vld [vmem:[%s1 + $0xc] sm:$0xf]
        %v368 = vld [vmem:[%s1 + $0x10] sm:$0xf]
        %v369 = vld [vmem:[%s1 + $0x14] sm:$0xf]
        %v370 = vld [vmem:[%s1 + $0x18] sm:$0x1]
        %v378 = vunpack.c.l.b16 %v364
        %v379 = vunpack.c.l.b16 %v365
        %v380 = vunpack.c.l.b16 %v366
        %v381 = vunpack.c.l.b16 %v367
        %v382 = vunpack.c.l.b16 %v368
        %v383 = vunpack.c.l.b16 %v369
        %v384 = vunpack.c.l.b16 %v370
        %v385 = vpack.c.b16 %v379, %v378
        %v386 = vpack.c.b16 %v381, %v380
        %v387 = vpack.c.b16 %v383, %v382
        %v388 = vpack.c.b16 %v384, %v384
        %vm392 = vcmask 408576
        %v394 = vsel %vm392, %v362, 0
        %v397 = vsel %vm392, %v363, 0
        %vm399 = vcmask 1040384
        %v401 = vsel %vm399, %v388, 0
        %403 = vmatprep.subr.bf16.mxu0 0
        %404 = vmatpush1.bf16.msra.mxu0 %v385
        %405 = vmatprep.subr.bf16.mxu0 0
        %406 = vmatpush1.bf16.msra.mxu0 %v386
        %407 = vmatprep.subr.bf16.mxu0 0
        %408 = vmatpush1.bf16.msra.mxu0 %v387
        %409 = vmatprep.subr.bf16.mxu0 0
        %410 = vmatpush1.bf16.msra.mxu0 %v401
        %411 = vmatprep.subr.bf16.mxu0 0
        %412 = vmatpush1.bf16.msra.mxu0 0
        %413 = vmatprep.subr.bf16.mxu0 0
        %414 = vmatpush1.bf16.msra.mxu0 0
        %415 = vmatprep.subr.bf16.mxu0 0
        %416 = vmatpush1.bf16.msra.mxu0 0
        %417 = vmatprep.subr.bf16.mxu0 0
        %418 = vmatpush1.bf16.msra.mxu0 0
        %419 = vmatprep.subr.bf16.mxu0 0
        %420 = vmatpush1.bf16.msra.mxu0 0
        %421 = vmatprep.subr.bf16.mxu0 0
        %422 = vmatpush1.bf16.msra.mxu0 0
        %423 = vmatprep.subr.bf16.mxu0 0
        %424 = vmatpush1.bf16.msra.mxu0 0
        %425 = vmatprep.subr.bf16.mxu0 0
        %426 = vmatpush1.bf16.msra.mxu0 0
        %427 = vmatprep.subr.bf16.mxu0 0
        %428 = vmatpush1.bf16.msra.mxu0 0
        %429 = vmatprep.subr.bf16.mxu0 0
        %430 = vmatpush1.bf16.msra.mxu0 0
        %431 = vmatprep.subr.bf16.mxu0 0
        %432 = vmatpush1.bf16.msra.mxu0 0
        %433 = vmatprep.subr.bf16.mxu0 0
        %434 = vmatpush1.bf16.msra.mxu0 0
        %435 = vmatprep.mubr.bf16.mxu0 0
        %436 = vmatmul.mubr.bf16.gmra.mrb[0].mxu0 %v394
        %v437 = vpop.f32.mrb[0].mxu0
        %v438 = vadd.f32 0.0, %v437
        %v439 = vpop.f32.mrb[0].mxu0
        %v440 = vpop.f32.mrb[0].mxu0
        %v441 = vadd.f32 0.0, %v440
        %v442 = vpop.f32.mrb[0].mxu0
        %443 = vmatprep.mubr.bf16.mxu0 0
        %444 = vmatmul.mubr.bf16.gmra.mrb[0].mxu0 %v397
        %v445 = vpop.f32.mrb[0].mxu0
        %v446 = vadd.f32 0.0, %v445
        %v447 = vpop.f32.mrb[0].mxu0
        %v448 = vpop.f32.mrb[0].mxu0
        %v449 = vadd.f32 0.0, %v448
        %v450 = vpop.f32.mrb[0].mxu0
        %451 = vdwg.mxu0
        %v452 = vpack.c.bf16 %v441, %v438
        %v453 = vpack.c.bf16 %v449, %v446
        %v454 = vld [vmem:[%s2] sm:$0xf]
        %v455 = vld [vmem:[%s2 + $0x4] sm:$0xf]
        %v456 = vld [vmem:[%s3] sm:$0x1]
        %v458 = vlaneseq
        %v459 = vshrl.u32 %v458, 7
        %v460 = vsub.s32 0, %v459
        %v461 = vrot.slane %v456, %v460
        %v465 = vunpack.c.l.b16 %v454
        %v466 = vunpack.c.l.b16 %v455
        %v467 = vpack.c.b16 %v466, %v465
        %vm468 = vcmask 261120
        %v470 = vsel %vm468, %v452, 0
        %v473 = vsel %vm468, %v453, 0
        %v476 = vsel %vm468, %v467, 0
        %478 = vmatprep.subr.bf16.mxu0 0
        %479 = vmatpush1.bf16.xpose.msra.mxu0 %v476
        %480 = vmatprep.subr.bf16.mxu0 0
        %481 = vmatpush1.bf16.xpose.msra.mxu0 0
        %482 = vmatprep.subr.bf16.mxu0 0
        %483 = vmatpush1.bf16.xpose.msra.mxu0 0
        %484 = vmatprep.subr.bf16.mxu0 0
        %485 = vmatpush1.bf16.xpose.msra.mxu0 0
        %486 = vmatprep.subr.bf16.mxu0 0
        %487 = vmatpush1.bf16.xpose.msra.mxu0 0
        %488 = vmatprep.subr.bf16.mxu0 0
        %489 = vmatpush1.bf16.xpose.msra.mxu0 0
        %490 = vmatprep.subr.bf16.mxu0 0
        %491 = vmatpush1.bf16.xpose.msra.mxu0 0
        %492 = vmatprep.subr.bf16.mxu0 0
        %493 = vmatpush1.bf16.xpose.msra.mxu0 0
        %494 = vmatprep.subr.bf16.mxu0 0
        %495 = vmatpush1.bf16.xpose.msra.mxu0 0
        %496 = vmatprep.subr.bf16.mxu0 0
        %497 = vmatpush1.bf16.xpose.msra.mxu0 0
        %498 = vmatprep.subr.bf16.mxu0 0
        %499 = vmatpush1.bf16.xpose.msra.mxu0 0
        %500 = vmatprep.subr.bf16.mxu0 0
        %501 = vmatpush1.bf16.xpose.msra.mxu0 0
        %502 = vmatprep.subr.bf16.mxu0 0
        %503 = vmatpush1.bf16.xpose.msra.mxu0 0
        %504 = vmatprep.subr.bf16.mxu0 0
        %505 = vmatpush1.bf16.xpose.msra.mxu0 0
        %506 = vmatprep.subr.bf16.mxu0 0
        %507 = vmatpush1.bf16.xpose.msra.mxu0 0
        %508 = vmatprep.subr.bf16.mxu0 0
        %509 = vmatpush1.bf16.xpose.msra.mxu0 0
        %510 = vmatprep.mubr.bf16.mxu0 0
        %511 = vmatmul.mubr.bf16.gmra.mrb[0].mxu0 %v470
        %v512 = vpop.f32.mrb[0].mxu0
        %v513 = vadd.f32 %v461, %v512
        %v514 = vpop.f32.mrb[0].mxu0
        %v515 = vpop.f32.mrb[0].mxu0
        %v516 = vadd.f32 %v461, %v515
        %v517 = vpop.f32.mrb[0].mxu0
        %518 = vmatprep.mubr.bf16.mxu0 0
        %519 = vmatmul.mubr.bf16.gmra.mrb[0].mxu0 %v473
        %v520 = vpop.f32.mrb[0].mxu0
        %v521 = vadd.f32 %v461, %v520
        %v522 = vpop.f32.mrb[0].mxu0
        %v523 = vpop.f32.mrb[0].mxu0
        %v524 = vadd.f32 %v461, %v523
        %v525 = vpop.f32.mrb[0].mxu0
        %526 = vdwg.mxu0
        %s527 = scalar_lea.vmem %s2, 16
        %v528 = vld [vmem:[%s527] sm:$0xf]
        %v529 = vld [vmem:[%s527 + $0x4] sm:$0xf]
        %s530 = scalar_lea.vmem %s3, 2
        %v531 = vld [vmem:[%s530] sm:$0x1]
        %v533 = vlaneseq
        %v534 = vshrl.u32 %v533, 7
        %v535 = vsub.s32 0, %v534
        %v536 = vrot.slane %v531, %v535
        %v540 = vunpack.c.l.b16 %v528
        %v541 = vunpack.c.l.b16 %v529
        %v542 = vpack.c.b16 %v541, %v540
        %v544 = vsel %vm468, %v542, 0
        %546 = vmatprep.subr.bf16.mxu0 0
        %547 = vmatpush1.bf16.xpose.msra.mxu0 %v544
        %548 = vmatprep.subr.bf16.mxu0 0
        %549 = vmatpush1.bf16.xpose.msra.mxu0 0
        %550 = vmatprep.subr.bf16.mxu0 0
        %551 = vmatpush1.bf16.xpose.msra.mxu0 0
        %552 = vmatprep.subr.bf16.mxu0 0
        %553 = vmatpush1.bf16.xpose.msra.mxu0 0
        %554 = vmatprep.subr.bf16.mxu0 0
        %555 = vmatpush1.bf16.xpose.msra.mxu0 0
        %556 = vmatprep.subr.bf16.mxu0 0
        %557 = vmatpush1.bf16.xpose.msra.mxu0 0
        %558 = vmatprep.subr.bf16.mxu0 0
        %559 = vmatpush1.bf16.xpose.msra.mxu0 0
        %560 = vmatprep.subr.bf16.mxu0 0
        %561 = vmatpush1.bf16.xpose.msra.mxu0 0
        %562 = vmatprep.subr.bf16.mxu0 0
        %563 = vmatpush1.bf16.xpose.msra.mxu0 0
        %564 = vmatprep.subr.bf16.mxu0 0
        %565 = vmatpush1.bf16.xpose.msra.mxu0 0
        %566 = vmatprep.subr.bf16.mxu0 0
        %567 = vmatpush1.bf16.xpose.msra.mxu0 0
        %568 = vmatprep.subr.bf16.mxu0 0
        %569 = vmatpush1.bf16.xpose.msra.mxu0 0
        %570 = vmatprep.subr.bf16.mxu0 0
        %571 = vmatpush1.bf16.xpose.msra.mxu0 0
        %572 = vmatprep.subr.bf16.mxu0 0
        %573 = vmatpush1.bf16.xpose.msra.mxu0 0
        %574 = vmatprep.subr.bf16.mxu0 0
        %575 = vmatpush1.bf16.xpose.msra.mxu0 0
        %576 = vmatprep.subr.bf16.mxu0 0
        %577 = vmatpush1.bf16.xpose.msra.mxu0 0
        %578 = vmatprep.mubr.bf16.mxu0 0
        %579 = vmatmul.mubr.bf16.gmra.mrb[0].mxu0 %v470
        %v580 = vpop.f32.mrb[0].mxu0
        %v581 = vadd.f32 %v536, %v580
        %v582 = vpop.f32.mrb[0].mxu0
        %v583 = vpop.f32.mrb[0].mxu0
        %v584 = vadd.f32 %v536, %v583
        %v585 = vpop.f32.mrb[0].mxu0
        %586 = vmatprep.mubr.bf16.mxu0 0
        %587 = vmatmul.mubr.bf16.gmra.mrb[0].mxu0 %v473
        %v588 = vpop.f32.mrb[0].mxu0
        %v589 = vadd.f32 %v536, %v588
        %v590 = vpop.f32.mrb[0].mxu0
        %v591 = vpop.f32.mrb[0].mxu0
        %v592 = vadd.f32 %v536, %v591
        %v593 = vpop.f32.mrb[0].mxu0
        %594 = vdwg.mxu0
        %s595 = scalar_lea.vmem %s2, 32
        %v596 = vld [vmem:[%s595] sm:$0xf]
        %v597 = vld [vmem:[%s595 + $0x4] sm:$0xf]
        %s598 = scalar_lea.vmem %s3, 4
        %v599 = vld [vmem:[%s598] sm:$0x1]
        %v601 = vlaneseq
        %v602 = vshrl.u32 %v601, 7
        %v603 = vsub.s32 0, %v602
        %v604 = vrot.slane %v599, %v603
        %v608 = vunpack.c.l.b16 %v596
        %v609 = vunpack.c.l.b16 %v597
        %v610 = vpack.c.b16 %v609, %v608
        %v612 = vsel %vm468, %v610, 0
        %614 = vmatprep.subr.bf16.mxu0 0
        %615 = vmatpush1.bf16.xpose.msra.mxu0 %v612
        %616 = vmatprep.subr.bf16.mxu0 0
        %617 = vmatpush1.bf16.xpose.msra.mxu0 0
        %618 = vmatprep.subr.bf16.mxu0 0
        %619 = vmatpush1.bf16.xpose.msra.mxu0 0
        %620 = vmatprep.subr.bf16.mxu0 0
        %621 = vmatpush1.bf16.xpose.msra.mxu0 0
        %622 = vmatprep.subr.bf16.mxu0 0
        %623 = vmatpush1.bf16.xpose.msra.mxu0 0
        %624 = vmatprep.subr.bf16.mxu0 0
        %625 = vmatpush1.bf16.xpose.msra.mxu0 0
        %626 = vmatprep.subr.bf16.mxu0 0
        %627 = vmatpush1.bf16.xpose.msra.mxu0 0
        %628 = vmatprep.subr.bf16.mxu0 0
        %629 = vmatpush1.bf16.xpose.msra.mxu0 0
        %630 = vmatprep.subr.bf16.mxu0 0
        %631 = vmatpush1.bf16.xpose.msra.mxu0 0
        %632 = vmatprep.subr.bf16.mxu0 0
        %633 = vmatpush1.bf16.xpose.msra.mxu0 0
        %634 = vmatprep.subr.bf16.mxu0 0
        %635 = vmatpush1.bf16.xpose.msra.mxu0 0
        %636 = vmatprep.subr.bf16.mxu0 0
        %637 = vmatpush1.bf16.xpose.msra.mxu0 0
        %638 = vmatprep.subr.bf16.mxu0 0
        %639 = vmatpush1.bf16.xpose.msra.mxu0 0
        %640 = vmatprep.subr.bf16.mxu0 0
        %641 = vmatpush1.bf16.xpose.msra.mxu0 0
        %642 = vmatprep.subr.bf16.mxu0 0
        %643 = vmatpush1.bf16.xpose.msra.mxu0 0
        %644 = vmatprep.subr.bf16.mxu0 0
        %645 = vmatpush1.bf16.xpose.msra.mxu0 0
        %646 = vmatprep.mubr.bf16.mxu0 0
        %647 = vmatmul.mubr.bf16.gmra.mrb[0].mxu0 %v470
        %v648 = vpop.f32.mrb[0].mxu0
        %v649 = vadd.f32 %v604, %v648
        %v650 = vpop.f32.mrb[0].mxu0
        %v651 = vpop.f32.mrb[0].mxu0
        %v652 = vadd.f32 %v604, %v651
        %v653 = vpop.f32.mrb[0].mxu0
        %654 = vmatprep.mubr.bf16.mxu0 0
        %655 = vmatmul.mubr.bf16.gmra.mrb[0].mxu0 %v473
        %v656 = vpop.f32.mrb[0].mxu0
        %v657 = vadd.f32 %v604, %v656
        %v658 = vpop.f32.mrb[0].mxu0
        %v659 = vpop.f32.mrb[0].mxu0
        %v660 = vadd.f32 %v604, %v659
        %v661 = vpop.f32.mrb[0].mxu0
        %662 = vdwg.mxu0
        %v667 = vcombine.high %v513, %v513
        %v668 = vcombine.high %v516, %v516
        %v669 = vcombine.high %v521, %v521
        %v670 = vcombine.high %v524, %v524
        %v675 = vpack.c.bf16 %v513, %v513
        %v676 = vpack.c.bf16 %v667, %v667
        %v677 = vpack.c.bf16 %v516, %v516
        %v678 = vpack.c.bf16 %v668, %v668
        %v679 = vpack.c.bf16 %v521, %v521
        %v680 = vpack.c.bf16 %v669, %v669
        %v681 = vpack.c.bf16 %v524, %v524
        %v682 = vpack.c.bf16 %v670, %v670
        %v687 = vcombine.high %v581, %v581
        %v688 = vcombine.high %v584, %v584
        %v689 = vcombine.high %v589, %v589
        %v690 = vcombine.high %v592, %v592
        %v695 = vpack.c.bf16 %v581, %v581
        %v696 = vpack.c.bf16 %v687, %v687
        %v697 = vpack.c.bf16 %v584, %v584
        %v698 = vpack.c.bf16 %v688, %v688
        %v699 = vpack.c.bf16 %v589, %v589
        %v700 = vpack.c.bf16 %v689, %v689
        %v701 = vpack.c.bf16 %v592, %v592
        %v702 = vpack.c.bf16 %v690, %v690
        %v707 = vcombine.high %v649, %v649
        %v708 = vcombine.high %v652, %v652
        %v709 = vcombine.high %v657, %v657
        %v710 = vcombine.high %v660, %v660
        %v715 = vpack.c.bf16 %v649, %v649
        %v716 = vpack.c.bf16 %v707, %v707
        %v717 = vpack.c.bf16 %v652, %v652
        %v718 = vpack.c.bf16 %v708, %v708
        %v719 = vpack.c.bf16 %v657, %v657
        %v720 = vpack.c.bf16 %v709, %v709
        %v721 = vpack.c.bf16 %v660, %v660
        %v722 = vpack.c.bf16 %v710, %v710
        %vm723 = vcmask 130048
        %v725 = vsel %vm723, %v675, 0
        %v728 = vsel %vm723, %v695, 0
        %730 = vmatprep.subr.bf16.mxu0 0
        %731 = vmatpush1.bf16.xpose.msra.mxu0 %v728
        %732 = vmatprep.subr.bf16.mxu0 0
        %733 = vmatpush1.bf16.xpose.msra.mxu0 0
        %734 = vmatprep.subr.bf16.mxu0 0
        %735 = vmatpush1.bf16.xpose.msra.mxu0 0
        %736 = vmatprep.subr.bf16.mxu0 0
        %737 = vmatpush1.bf16.xpose.msra.mxu0 0
        %738 = vmatprep.subr.bf16.mxu0 0
        %739 = vmatpush1.bf16.xpose.msra.mxu0 0
        %740 = vmatprep.subr.bf16.mxu0 0
        %741 = vmatpush1.bf16.xpose.msra.mxu0 0
        %742 = vmatprep.subr.bf16.mxu0 0
        %743 = vmatpush1.bf16.xpose.msra.mxu0 0
        %744 = vmatprep.subr.bf16.mxu0 0
        %745 = vmatpush1.bf16.xpose.msra.mxu0 0
        %746 = vmatprep.subr.bf16.mxu0 0
        %747 = vmatpush1.bf16.xpose.msra.mxu0 0
        %748 = vmatprep.subr.bf16.mxu0 0
        %749 = vmatpush1.bf16.xpose.msra.mxu0 0
        %750 = vmatprep.subr.bf16.mxu0 0
        %751 = vmatpush1.bf16.xpose.msra.mxu0 0
        %752 = vmatprep.subr.bf16.mxu0 0
        %753 = vmatpush1.bf16.xpose.msra.mxu0 0
        %754 = vmatprep.subr.bf16.mxu0 0
        %755 = vmatpush1.bf16.xpose.msra.mxu0 0
        %756 = vmatprep.subr.bf16.mxu0 0
        %757 = vmatpush1.bf16.xpose.msra.mxu0 0
        %758 = vmatprep.subr.bf16.mxu0 0
        %759 = vmatpush1.bf16.xpose.msra.mxu0 0
        %760 = vmatprep.subr.bf16.mxu0 0
        %761 = vmatpush1.bf16.xpose.msra.mxu0 0
        %762 = vmatprep.mubr.bf16.mxu0 0
        %763 = vmatmul.mubr.bf16.gmra.mrb[0].mxu0 %v725
        %v764 = vpop.f32.mrb[0].mxu0
        %v765 = vadd.f32 0.0, %v764
        %v766 = vpop.f32.mrb[0].mxu0
        %v767 = vpop.f32.mrb[0].mxu0
        %v768 = vpop.f32.mrb[0].mxu0
        %769 = vdwg.mxu0
        %v771 = vsel %vm723, %v676, 0
        %v774 = vsel %vm723, %v696, 0
        %776 = vmatprep.subr.bf16.mxu0 0
        %777 = vmatpush1.bf16.xpose.msra.mxu0 %v774
        %778 = vmatprep.subr.bf16.mxu0 0
        %779 = vmatpush1.bf16.xpose.msra.mxu0 0
        %780 = vmatprep.subr.bf16.mxu0 0
        %781 = vmatpush1.bf16.xpose.msra.mxu0 0
        %782 = vmatprep.subr.bf16.mxu0 0
        %783 = vmatpush1.bf16.xpose.msra.mxu0 0
        %784 = vmatprep.subr.bf16.mxu0 0
        %785 = vmatpush1.bf16.xpose.msra.mxu0 0
        %786 = vmatprep.subr.bf16.mxu0 0
        %787 = vmatpush1.bf16.xpose.msra.mxu0 0
        %788 = vmatprep.subr.bf16.mxu0 0
        %789 = vmatpush1.bf16.xpose.msra.mxu0 0
        %790 = vmatprep.subr.bf16.mxu0 0
        %791 = vmatpush1.bf16.xpose.msra.mxu0 0
        %792 = vmatprep.subr.bf16.mxu0 0
        %793 = vmatpush1.bf16.xpose.msra.mxu0 0
        %794 = vmatprep.subr.bf16.mxu0 0
        %795 = vmatpush1.bf16.xpose.msra.mxu0 0
        %796 = vmatprep.subr.bf16.mxu0 0
        %797 = vmatpush1.bf16.xpose.msra.mxu0 0
        %798 = vmatprep.subr.bf16.mxu0 0
        %799 = vmatpush1.bf16.xpose.msra.mxu0 0
        %800 = vmatprep.subr.bf16.mxu0 0
        %801 = vmatpush1.bf16.xpose.msra.mxu0 0
        %802 = vmatprep.subr.bf16.mxu0 0
        %803 = vmatpush1.bf16.xpose.msra.mxu0 0
        %804 = vmatprep.subr.bf16.mxu0 0
        %805 = vmatpush1.bf16.xpose.msra.mxu0 0
        %806 = vmatprep.subr.bf16.mxu0 0
        %807 = vmatpush1.bf16.xpose.msra.mxu0 0
        %808 = vmatprep.mubr.bf16.mxu0 0
        %809 = vmatmul.mubr.bf16.gmra.mrb[0].mxu0 %v771
        %v810 = vpop.f32.mrb[0].mxu0
        %v811 = vadd.f32 0.0, %v810
        %v812 = vpop.f32.mrb[0].mxu0
        %v813 = vpop.f32.mrb[0].mxu0
        %v814 = vpop.f32.mrb[0].mxu0
        %815 = vdwg.mxu0
        %v817 = vsel %vm723, %v677, 0
        %v820 = vsel %vm723, %v697, 0
        %822 = vmatprep.subr.bf16.mxu0 0
        %823 = vmatpush1.bf16.xpose.msra.mxu0 %v820
        %824 = vmatprep.subr.bf16.mxu0 0
        %825 = vmatpush1.bf16.xpose.msra.mxu0 0
        %826 = vmatprep.subr.bf16.mxu0 0
        %827 = vmatpush1.bf16.xpose.msra.mxu0 0
        %828 = vmatprep.subr.bf16.mxu0 0
        %829 = vmatpush1.bf16.xpose.msra.mxu0 0
        %830 = vmatprep.subr.bf16.mxu0 0
        %831 = vmatpush1.bf16.xpose.msra.mxu0 0
        %832 = vmatprep.subr.bf16.mxu0 0
        %833 = vmatpush1.bf16.xpose.msra.mxu0 0
        %834 = vmatprep.subr.bf16.mxu0 0
        %835 = vmatpush1.bf16.xpose.msra.mxu0 0
        %836 = vmatprep.subr.bf16.mxu0 0
        %837 = vmatpush1.bf16.xpose.msra.mxu0 0
        %838 = vmatprep.subr.bf16.mxu0 0
        %839 = vmatpush1.bf16.xpose.msra.mxu0 0
        %840 = vmatprep.subr.bf16.mxu0 0
        %841 = vmatpush1.bf16.xpose.msra.mxu0 0
        %842 = vmatprep.subr.bf16.mxu0 0
        %843 = vmatpush1.bf16.xpose.msra.mxu0 0
        %844 = vmatprep.subr.bf16.mxu0 0
        %845 = vmatpush1.bf16.xpose.msra.mxu0 0
        %846 = vmatprep.subr.bf16.mxu0 0
        %847 = vmatpush1.bf16.xpose.msra.mxu0 0
        %848 = vmatprep.subr.bf16.mxu0 0
        %849 = vmatpush1.bf16.xpose.msra.mxu0 0
        %850 = vmatprep.subr.bf16.mxu0 0
        %851 = vmatpush1.bf16.xpose.msra.mxu0 0
        %852 = vmatprep.subr.bf16.mxu0 0
        %853 = vmatpush1.bf16.xpose.msra.mxu0 0
        %854 = vmatprep.mubr.bf16.mxu0 0
        %855 = vmatmul.mubr.bf16.gmra.mrb[0].mxu0 %v817
        %v856 = vpop.f32.mrb[0].mxu0
        %v857 = vadd.f32 0.0, %v856
        %v858 = vpop.f32.mrb[0].mxu0
        %v859 = vpop.f32.mrb[0].mxu0
        %v860 = vpop.f32.mrb[0].mxu0
        %861 = vdwg.mxu0
        %v863 = vsel %vm723, %v678, 0
        %v866 = vsel %vm723, %v698, 0
        %868 = vmatprep.subr.bf16.mxu0 0
        %869 = vmatpush1.bf16.xpose.msra.mxu0 %v866
        %870 = vmatprep.subr.bf16.mxu0 0
        %871 = vmatpush1.bf16.xpose.msra.mxu0 0
        %872 = vmatprep.subr.bf16.mxu0 0
        %873 = vmatpush1.bf16.xpose.msra.mxu0 0
        %874 = vmatprep.subr.bf16.mxu0 0
        %875 = vmatpush1.bf16.xpose.msra.mxu0 0
        %876 = vmatprep.subr.bf16.mxu0 0
        %877 = vmatpush1.bf16.xpose.msra.mxu0 0
        %878 = vmatprep.subr.bf16.mxu0 0
        %879 = vmatpush1.bf16.xpose.msra.mxu0 0
        %880 = vmatprep.subr.bf16.mxu0 0
        %881 = vmatpush1.bf16.xpose.msra.mxu0 0
        %882 = vmatprep.subr.bf16.mxu0 0
        %883 = vmatpush1.bf16.xpose.msra.mxu0 0
        %884 = vmatprep.subr.bf16.mxu0 0
        %885 = vmatpush1.bf16.xpose.msra.mxu0 0
        %886 = vmatprep.subr.bf16.mxu0 0
        %887 = vmatpush1.bf16.xpose.msra.mxu0 0
        %888 = vmatprep.subr.bf16.mxu0 0
        %889 = vmatpush1.bf16.xpose.msra.mxu0 0
        %890 = vmatprep.subr.bf16.mxu0 0
        %891 = vmatpush1.bf16.xpose.msra.mxu0 0
        %892 = vmatprep.subr.bf16.mxu0 0
        %893 = vmatpush1.bf16.xpose.msra.mxu0 0
        %894 = vmatprep.subr.bf16.mxu0 0
        %895 = vmatpush1.bf16.xpose.msra.mxu0 0
        %896 = vmatprep.subr.bf16.mxu0 0
        %897 = vmatpush1.bf16.xpose.msra.mxu0 0
        %898 = vmatprep.subr.bf16.mxu0 0
        %899 = vmatpush1.bf16.xpose.msra.mxu0 0
        %900 = vmatprep.mubr.bf16.mxu0 0
        %901 = vmatmul.mubr.bf16.gmra.mrb[0].mxu0 %v863
        %v902 = vpop.f32.mrb[0].mxu0
        %v903 = vadd.f32 0.0, %v902
        %v904 = vpop.f32.mrb[0].mxu0
        %v905 = vpop.f32.mrb[0].mxu0
        %v906 = vpop.f32.mrb[0].mxu0
        %907 = vdwg.mxu0
        %v909 = vsel %vm723, %v679, 0
        %v912 = vsel %vm723, %v699, 0
        %914 = vmatprep.subr.bf16.mxu0 0
        %915 = vmatpush1.bf16.xpose.msra.mxu0 %v912
        %916 = vmatprep.subr.bf16.mxu0 0
        %917 = vmatpush1.bf16.xpose.msra.mxu0 0
        %918 = vmatprep.subr.bf16.mxu0 0
        %919 = vmatpush1.bf16.xpose.msra.mxu0 0
        %920 = vmatprep.subr.bf16.mxu0 0
        %921 = vmatpush1.bf16.xpose.msra.mxu0 0
        %922 = vmatprep.subr.bf16.mxu0 0
        %923 = vmatpush1.bf16.xpose.msra.mxu0 0
        %924 = vmatprep.subr.bf16.mxu0 0
        %925 = vmatpush1.bf16.xpose.msra.mxu0 0
        %926 = vmatprep.subr.bf16.mxu0 0
        %927 = vmatpush1.bf16.xpose.msra.mxu0 0
        %928 = vmatprep.subr.bf16.mxu0 0
        %929 = vmatpush1.bf16.xpose.msra.mxu0 0
        %930 = vmatprep.subr.bf16.mxu0 0
        %931 = vmatpush1.bf16.xpose.msra.mxu0 0
        %932 = vmatprep.subr.bf16.mxu0 0
        %933 = vmatpush1.bf16.xpose.msra.mxu0 0
        %934 = vmatprep.subr.bf16.mxu0 0
        %935 = vmatpush1.bf16.xpose.msra.mxu0 0
        %936 = vmatprep.subr.bf16.mxu0 0
        %937 = vmatpush1.bf16.xpose.msra.mxu0 0
        %938 = vmatprep.subr.bf16.mxu0 0
        %939 = vmatpush1.bf16.xpose.msra.mxu0 0
        %940 = vmatprep.subr.bf16.mxu0 0
        %941 = vmatpush1.bf16.xpose.msra.mxu0 0
        %942 = vmatprep.subr.bf16.mxu0 0
        %943 = vmatpush1.bf16.xpose.msra.mxu0 0
        %944 = vmatprep.subr.bf16.mxu0 0
        %945 = vmatpush1.bf16.xpose.msra.mxu0 0
        %946 = vmatprep.mubr.bf16.mxu0 0
        %947 = vmatmul.mubr.bf16.gmra.mrb[0].mxu0 %v909
        %v948 = vpop.f32.mrb[0].mxu0
        %v949 = vadd.f32 0.0, %v948
        %v950 = vpop.f32.mrb[0].mxu0
        %v951 = vpop.f32.mrb[0].mxu0
        %v952 = vpop.f32.mrb[0].mxu0
        %953 = vdwg.mxu0
        %v955 = vsel %vm723, %v680, 0
        %v958 = vsel %vm723, %v700, 0
        %960 = vmatprep.subr.bf16.mxu0 0
        %961 = vmatpush1.bf16.xpose.msra.mxu0 %v958
        %962 = vmatprep.subr.bf16.mxu0 0
        %963 = vmatpush1.bf16.xpose.msra.mxu0 0
        %964 = vmatprep.subr.bf16.mxu0 0
        %965 = vmatpush1.bf16.xpose.msra.mxu0 0
        %966 = vmatprep.subr.bf16.mxu0 0
        %967 = vmatpush1.bf16.xpose.msra.mxu0 0
        %968 = vmatprep.subr.bf16.mxu0 0
        %969 = vmatpush1.bf16.xpose.msra.mxu0 0
        %970 = vmatprep.subr.bf16.mxu0 0
        %971 = vmatpush1.bf16.xpose.msra.mxu0 0
        %972 = vmatprep.subr.bf16.mxu0 0
        %973 = vmatpush1.bf16.xpose.msra.mxu0 0
        %974 = vmatprep.subr.bf16.mxu0 0
        %975 = vmatpush1.bf16.xpose.msra.mxu0 0
        %976 = vmatprep.subr.bf16.mxu0 0
        %977 = vmatpush1.bf16.xpose.msra.mxu0 0
        %978 = vmatprep.subr.bf16.mxu0 0
        %979 = vmatpush1.bf16.xpose.msra.mxu0 0
        %980 = vmatprep.subr.bf16.mxu0 0
        %981 = vmatpush1.bf16.xpose.msra.mxu0 0
        %982 = vmatprep.subr.bf16.mxu0 0
        %983 = vmatpush1.bf16.xpose.msra.mxu0 0
        %984 = vmatprep.subr.bf16.mxu0 0
        %985 = vmatpush1.bf16.xpose.msra.mxu0 0
        %986 = vmatprep.subr.bf16.mxu0 0
        %987 = vmatpush1.bf16.xpose.msra.mxu0 0
        %988 = vmatprep.subr.bf16.mxu0 0
        %989 = vmatpush1.bf16.xpose.msra.mxu0 0
        %990 = vmatprep.subr.bf16.mxu0 0
        %991 = vmatpush1.bf16.xpose.msra.mxu0 0
        %992 = vmatprep.mubr.bf16.mxu0 0
        %993 = vmatmul.mubr.bf16.gmra.mrb[0].mxu0 %v955
        %v994 = vpop.f32.mrb[0].mxu0
        %v995 = vadd.f32 0.0, %v994
        %v996 = vpop.f32.mrb[0].mxu0
        %v997 = vpop.f32.mrb[0].mxu0
        %v998 = vpop.f32.mrb[0].mxu0
        %999 = vdwg.mxu0
        %v1001 = vsel %vm723, %v681, 0
        %v1004 = vsel %vm723, %v701, 0
        %1006 = vmatprep.subr.bf16.mxu0 0
        %1007 = vmatpush1.bf16.xpose.msra.mxu0 %v1004
        %1008 = vmatprep.subr.bf16.mxu0 0
        %1009 = vmatpush1.bf16.xpose.msra.mxu0 0
        %1010 = vmatprep.subr.bf16.mxu0 0
        %1011 = vmatpush1.bf16.xpose.msra.mxu0 0
        %1012 = vmatprep.subr.bf16.mxu0 0
        %1013 = vmatpush1.bf16.xpose.msra.mxu0 0
        %1014 = vmatprep.subr.bf16.mxu0 0
        %1015 = vmatpush1.bf16.xpose.msra.mxu0 0
        %1016 = vmatprep.subr.bf16.mxu0 0
        %1017 = vmatpush1.bf16.xpose.msra.mxu0 0
        %1018 = vmatprep.subr.bf16.mxu0 0
        %1019 = vmatpush1.bf16.xpose.msra.mxu0 0
        %1020 = vmatprep.subr.bf16.mxu0 0
        %1021 = vmatpush1.bf16.xpose.msra.mxu0 0
        %1022 = vmatprep.subr.bf16.mxu0 0
        %1023 = vmatpush1.bf16.xpose.msra.mxu0 0
        %1024 = vmatprep.subr.bf16.mxu0 0
        %1025 = vmatpush1.bf16.xpose.msra.mxu0 0
        %1026 = vmatprep.subr.bf16.mxu0 0
        %1027 = vmatpush1.bf16.xpose.msra.mxu0 0
        %1028 = vmatprep.subr.bf16.mxu0 0
        %1029 = vmatpush1.bf16.xpose.msra.mxu0 0
        %1030 = vmatprep.subr.bf16.mxu0 0
        %1031 = vmatpush1.bf16.xpose.msra.mxu0 0
        %1032 = vmatprep.subr.bf16.mxu0 0
        %1033 = vmatpush1.bf16.xpose.msra.mxu0 0
        %1034 = vmatprep.subr.bf16.mxu0 0
        %1035 = vmatpush1.bf16.xpose.msra.mxu0 0
        %1036 = vmatprep.subr.bf16.mxu0 0
        %1037 = vmatpush1.bf16.xpose.msra.mxu0 0
        %1038 = vmatprep.mubr.bf16.mxu0 0
        %1039 = vmatmul.mubr.bf16.gmra.mrb[0].mxu0 %v1001
        %v1040 = vpop.f32.mrb[0].mxu0
        %v1041 = vadd.f32 0.0, %v1040
        %v1042 = vpop.f32.mrb[0].mxu0
        %v1043 = vpop.f32.mrb[0].mxu0
        %v1044 = vpop.f32.mrb[0].mxu0
        %1045 = vdwg.mxu0
        %v1047 = vsel %vm723, %v682, 0
        %v1050 = vsel %vm723, %v702, 0
        %1052 = vmatprep.subr.bf16.mxu0 0
        %1053 = vmatpush1.bf16.xpose.msra.mxu0 %v1050
        %1054 = vmatprep.subr.bf16.mxu0 0
        %1055 = vmatpush1.bf16.xpose.msra.mxu0 0
        %1056 = vmatprep.subr.bf16.mxu0 0
        %1057 = vmatpush1.bf16.xpose.msra.mxu0 0
        %1058 = vmatprep.subr.bf16.mxu0 0
        %1059 = vmatpush1.bf16.xpose.msra.mxu0 0
        %1060 = vmatprep.subr.bf16.mxu0 0
        %1061 = vmatpush1.bf16.xpose.msra.mxu0 0
        %1062 = vmatprep.subr.bf16.mxu0 0
        %1063 = vmatpush1.bf16.xpose.msra.mxu0 0
        %1064 = vmatprep.subr.bf16.mxu0 0
        %1065 = vmatpush1.bf16.xpose.msra.mxu0 0
        %1066 = vmatprep.subr.bf16.mxu0 0
        %1067 = vmatpush1.bf16.xpose.msra.mxu0 0
        %1068 = vmatprep.subr.bf16.mxu0 0
        %1069 = vmatpush1.bf16.xpose.msra.mxu0 0
        %1070 = vmatprep.subr.bf16.mxu0 0
        %1071 = vmatpush1.bf16.xpose.msra.mxu0 0
        %1072 = vmatprep.subr.bf16.mxu0 0
        %1073 = vmatpush1.bf16.xpose.msra.mxu0 0
        %1074 = vmatprep.subr.bf16.mxu0 0
        %1075 = vmatpush1.bf16.xpose.msra.mxu0 0
        %1076 = vmatprep.subr.bf16.mxu0 0
        %1077 = vmatpush1.bf16.xpose.msra.mxu0 0
        %1078 = vmatprep.subr.bf16.mxu0 0
        %1079 = vmatpush1.bf16.xpose.msra.mxu0 0
        %1080 = vmatprep.subr.bf16.mxu0 0
        %1081 = vmatpush1.bf16.xpose.msra.mxu0 0
        %1082 = vmatprep.subr.bf16.mxu0 0
        %1083 = vmatpush1.bf16.xpose.msra.mxu0 0
        %1084 = vmatprep.mubr.bf16.mxu0 0
        %1085 = vmatmul.mubr.bf16.gmra.mrb[0].mxu0 %v1047
        %v1086 = vpop.f32.mrb[0].mxu0
        %v1087 = vadd.f32 0.0, %v1086
        %v1088 = vpop.f32.mrb[0].mxu0
        %v1089 = vpop.f32.mrb[0].mxu0
        %v1090 = vpop.f32.mrb[0].mxu0
        %1091 = vdwg.mxu0
        %v1092 = vmul.f32 %v765, 0.25
        %v1093 = vmul.f32 %v811, 0.25
        %v1094 = vmul.f32 %v857, 0.25
        %v1095 = vmul.f32 %v903, 0.25
        %v1096 = vmul.f32 %v949, 0.25
        %v1097 = vmul.f32 %v995, 0.25
        %v1098 = vmul.f32 %v1041, 0.25
        %v1099 = vmul.f32 %v1087, 0.25
        %vm1100 = vcmask 27648
        %v1101 = vsel %vm1100, %v1092, -inf
        %1102 = vmax.xlane.f32.xlu0 %v1101
        %v1103 = vpop.xlane.xlu0 %1102
        %v1104 = vsel %vm1100, %v1093, -inf
        %1105 = vmax.xlane.f32.xlu0 %v1104
        %v1106 = vpop.xlane.xlu0 %1105
        %v1107 = vsel %vm1100, %v1094, -inf
        %1108 = vmax.xlane.f32.xlu0 %v1107
        %v1109 = vpop.xlane.xlu0 %1108
        %v1110 = vsel %vm1100, %v1095, -inf
        %1111 = vmax.xlane.f32.xlu0 %v1110
        %v1112 = vpop.xlane.xlu0 %1111
        %v1113 = vsel %vm1100, %v1096, -inf
        %1114 = vmax.xlane.f32.xlu0 %v1113
        %v1115 = vpop.xlane.xlu0 %1114
        %v1116 = vsel %vm1100, %v1097, -inf
        %1117 = vmax.xlane.f32.xlu0 %v1116
        %v1118 = vpop.xlane.xlu0 %1117
        %v1119 = vsel %vm1100, %v1098, -inf
        %1120 = vmax.xlane.f32.xlu0 %v1119
        %v1121 = vpop.xlane.xlu0 %1120
        %v1122 = vsel %vm1100, %v1099, -inf
        %1123 = vmax.xlane.f32.xlu0 %v1122
        %v1124 = vpop.xlane.xlu0 %1123
        %v1125 = vsub.f32 %v1092, %v1103
        %v1126 = vsub.f32 %v1093, %v1106
        %v1127 = vsub.f32 %v1094, %v1109
        %v1128 = vsub.f32 %v1095, %v1112
        %v1129 = vsub.f32 %v1096, %v1115
        %v1130 = vsub.f32 %v1097, %v1118
        %v1131 = vsub.f32 %v1098, %v1121
        %v1132 = vsub.f32 %v1099, %v1124
        %v1133 = vmul.f32 %v1125, 1.442695
        %v1134 = vpow.pop %v1133
        %v1135 = vmul.f32 %v1126, 1.442695
        %v1136 = vpow.pop %v1135
        %v1137 = vmul.f32 %v1127, 1.442695
        %v1138 = vpow.pop %v1137
        %v1139 = vmul.f32 %v1128, 1.442695
        %v1140 = vpow.pop %v1139
        %v1141 = vmul.f32 %v1129, 1.442695
        %v1142 = vpow.pop %v1141
        %v1143 = vmul.f32 %v1130, 1.442695
        %v1144 = vpow.pop %v1143
        %v1145 = vmul.f32 %v1131, 1.442695
        %v1146 = vpow.pop %v1145
        %v1147 = vmul.f32 %v1132, 1.442695
        %v1148 = vpow.pop %v1147
        %v1149 = vsel %vm1100, %v1134, 0.0
        %1150 = vadd.xlane.f32.xlu0 %v1149
        %v1151 = vpop.xlane.xlu0 %1150
        %v1152 = vsel %vm1100, %v1136, 0.0
        %1153 = vadd.xlane.f32.xlu0 %v1152
        %v1154 = vpop.xlane.xlu0 %1153
        %v1155 = vsel %vm1100, %v1138, 0.0
        %1156 = vadd.xlane.f32.xlu0 %v1155
        %v1157 = vpop.xlane.xlu0 %1156
        %v1158 = vsel %vm1100, %v1140, 0.0
        %1159 = vadd.xlane.f32.xlu0 %v1158
        %v1160 = vpop.xlane.xlu0 %1159
        %v1161 = vsel %vm1100, %v1142, 0.0
        %1162 = vadd.xlane.f32.xlu0 %v1161
        %v1163 = vpop.xlane.xlu0 %1162
        %v1164 = vsel %vm1100, %v1144, 0.0
        %1165 = vadd.xlane.f32.xlu0 %v1164
        %v1166 = vpop.xlane.xlu0 %1165
        %v1167 = vsel %vm1100, %v1146, 0.0
        %1168 = vadd.xlane.f32.xlu0 %v1167
        %v1169 = vpop.xlane.xlu0 %1168
        %v1170 = vsel %vm1100, %v1148, 0.0
        %1171 = vadd.xlane.f32.xlu0 %v1170
        %v1172 = vpop.xlane.xlu0 %1171
        %v1173 = vrcp.pop %v1151
        %v1174 = vmul.f32 %v1134, %v1173
        %v1175 = vrcp.pop %v1154
        %v1176 = vmul.f32 %v1136, %v1175
        %v1177 = vrcp.pop %v1157
        %v1178 = vmul.f32 %v1138, %v1177
        %v1179 = vrcp.pop %v1160
        %v1180 = vmul.f32 %v1140, %v1179
        %v1181 = vrcp.pop %v1163
        %v1182 = vmul.f32 %v1142, %v1181
        %v1183 = vrcp.pop %v1166
        %v1184 = vmul.f32 %v1144, %v1183
        %v1185 = vrcp.pop %v1169
        %v1186 = vmul.f32 %v1146, %v1185
        %v1187 = vrcp.pop %v1172
        %v1188 = vmul.f32 %v1148, %v1187
        %v1189 = vpack.c.bf16 %v1174, %v1174
        %v1190 = vpack.c.bf16 %v1176, %v1176
        %v1191 = vpack.c.bf16 %v1178, %v1178
        %v1192 = vpack.c.bf16 %v1180, %v1180
        %v1193 = vpack.c.bf16 %v1182, %v1182
        %v1194 = vpack.c.bf16 %v1184, %v1184
        %v1195 = vpack.c.bf16 %v1186, %v1186
        %v1196 = vpack.c.bf16 %v1188, %v1188
        %vm1197 = vcmask 31744
        %v1199 = vsel %vm1197, %v1189, 0
        %vm1201 = vcmask 1041408
        %v1203 = vsel %vm1201, %v715, 0
        %1205 = vmatprep.subr.bf16.mxu0 0
        %1206 = vmatpush1.bf16.msra.mxu0 %v1203
        %1207 = vmatprep.subr.bf16.mxu0 0
        %1208 = vmatpush1.bf16.msra.mxu0 0
        %1209 = vmatprep.subr.bf16.mxu0 0
        %1210 = vmatpush1.bf16.msra.mxu0 0
        %1211 = vmatprep.subr.bf16.mxu0 0
        %1212 = vmatpush1.bf16.msra.mxu0 0
        %1213 = vmatprep.subr.bf16.mxu0 0
        %1214 = vmatpush1.bf16.msra.mxu0 0
        %1215 = vmatprep.subr.bf16.mxu0 0
        %1216 = vmatpush1.bf16.msra.mxu0 0
        %1217 = vmatprep.subr.bf16.mxu0 0
        %1218 = vmatpush1.bf16.msra.mxu0 0
        %1219 = vmatprep.subr.bf16.mxu0 0
        %1220 = vmatpush1.bf16.msra.mxu0 0
        %1221 = vmatprep.subr.bf16.mxu0 0
        %1222 = vmatpush1.bf16.msra.mxu0 0
        %1223 = vmatprep.subr.bf16.mxu0 0
        %1224 = vmatpush1.bf16.msra.mxu0 0
        %1225 = vmatprep.subr.bf16.mxu0 0
        %1226 = vmatpush1.bf16.msra.mxu0 0
        %1227 = vmatprep.subr.bf16.mxu0 0
        %1228 = vmatpush1.bf16.msra.mxu0 0
        %1229 = vmatprep.subr.bf16.mxu0 0
        %1230 = vmatpush1.bf16.msra.mxu0 0
        %1231 = vmatprep.subr.bf16.mxu0 0
        %1232 = vmatpush1.bf16.msra.mxu0 0
        %1233 = vmatprep.subr.bf16.mxu0 0
        %1234 = vmatpush1.bf16.msra.mxu0 0
        %1235 = vmatprep.subr.bf16.mxu0 0
        %1236 = vmatpush1.bf16.msra.mxu0 0
        %1237 = vmatprep.mubr.bf16.mxu0 0
        %1238 = vmatmul.mubr.bf16.gmra.mrb[0].mxu0 %v1199
        %v1239 = vpop.f32.mrb[0].mxu0
        %v1240 = vadd.f32 0.0, %v1239
        %v1241 = vpop.f32.mrb[0].mxu0
        %v1242 = vpop.f32.mrb[0].mxu0
        %v1243 = vpop.f32.mrb[0].mxu0
        %1244 = vdwg.mxu0
        %v1246 = vsel %vm1197, %v1190, 0
        %v1249 = vsel %vm1201, %v716, 0
        %1251 = vmatprep.subr.bf16.mxu0 0
        %1252 = vmatpush1.bf16.msra.mxu0 %v1249
        %1253 = vmatprep.subr.bf16.mxu0 0
        %1254 = vmatpush1.bf16.msra.mxu0 0
        %1255 = vmatprep.subr.bf16.mxu0 0
        %1256 = vmatpush1.bf16.msra.mxu0 0
        %1257 = vmatprep.subr.bf16.mxu0 0
        %1258 = vmatpush1.bf16.msra.mxu0 0
        %1259 = vmatprep.subr.bf16.mxu0 0
        %1260 = vmatpush1.bf16.msra.mxu0 0
        %1261 = vmatprep.subr.bf16.mxu0 0
        %1262 = vmatpush1.bf16.msra.mxu0 0
        %1263 = vmatprep.subr.bf16.mxu0 0
        %1264 = vmatpush1.bf16.msra.mxu0 0
        %1265 = vmatprep.subr.bf16.mxu0 0
        %1266 = vmatpush1.bf16.msra.mxu0 0
        %1267 = vmatprep.subr.bf16.mxu0 0
        %1268 = vmatpush1.bf16.msra.mxu0 0
        %1269 = vmatprep.subr.bf16.mxu0 0
        %1270 = vmatpush1.bf16.msra.mxu0 0
        %1271 = vmatprep.subr.bf16.mxu0 0
        %1272 = vmatpush1.bf16.msra.mxu0 0
        %1273 = vmatprep.subr.bf16.mxu0 0
        %1274 = vmatpush1.bf16.msra.mxu0 0
        %1275 = vmatprep.subr.bf16.mxu0 0
        %1276 = vmatpush1.bf16.msra.mxu0 0
        %1277 = vmatprep.subr.bf16.mxu0 0
        %1278 = vmatpush1.bf16.msra.mxu0 0
        %1279 = vmatprep.subr.bf16.mxu0 0
        %1280 = vmatpush1.bf16.msra.mxu0 0
        %1281 = vmatprep.subr.bf16.mxu0 0
        %1282 = vmatpush1.bf16.msra.mxu0 0
        %1283 = vmatprep.mubr.bf16.mxu0 0
        %1284 = vmatmul.mubr.bf16.gmra.mrb[0].mxu0 %v1246
        %v1285 = vpop.f32.mrb[0].mxu0
        %v1286 = vadd.f32 0.0, %v1285
        %v1287 = vpop.f32.mrb[0].mxu0
        %v1288 = vpop.f32.mrb[0].mxu0
        %v1289 = vpop.f32.mrb[0].mxu0
        %1290 = vdwg.mxu0
        %v1292 = vsel %vm1197, %v1191, 0
        %v1295 = vsel %vm1201, %v717, 0
        %1297 = vmatprep.subr.bf16.mxu0 0
        %1298 = vmatpush1.bf16.msra.mxu0 %v1295
        %1299 = vmatprep.subr.bf16.mxu0 0
        %1300 = vmatpush1.bf16.msra.mxu0 0
        %1301 = vmatprep.subr.bf16.mxu0 0
        %1302 = vmatpush1.bf16.msra.mxu0 0
        %1303 = vmatprep.subr.bf16.mxu0 0
        %1304 = vmatpush1.bf16.msra.mxu0 0
        %1305 = vmatprep.subr.bf16.mxu0 0
        %1306 = vmatpush1.bf16.msra.mxu0 0
        %1307 = vmatprep.subr.bf16.mxu0 0
        %1308 = vmatpush1.bf16.msra.mxu0 0
        %1309 = vmatprep.subr.bf16.mxu0 0
        %1310 = vmatpush1.bf16.msra.mxu0 0
        %1311 = vmatprep.subr.bf16.mxu0 0
        %1312 = vmatpush1.bf16.msra.mxu0 0
        %1313 = vmatprep.subr.bf16.mxu0 0
        %1314 = vmatpush1.bf16.msra.mxu0 0
        %1315 = vmatprep.subr.bf16.mxu0 0
        %1316 = vmatpush1.bf16.msra.mxu0 0
        %1317 = vmatprep.subr.bf16.mxu0 0
        %1318 = vmatpush1.bf16.msra.mxu0 0
        %1319 = vmatprep.subr.bf16.mxu0 0
        %1320 = vmatpush1.bf16.msra.mxu0 0
        %1321 = vmatprep.subr.bf16.mxu0 0
        %1322 = vmatpush1.bf16.msra.mxu0 0
        %1323 = vmatprep.subr.bf16.mxu0 0
        %1324 = vmatpush1.bf16.msra.mxu0 0
        %1325 = vmatprep.subr.bf16.mxu0 0
        %1326 = vmatpush1.bf16.msra.mxu0 0
        %1327 = vmatprep.subr.bf16.mxu0 0
        %1328 = vmatpush1.bf16.msra.mxu0 0
        %1329 = vmatprep.mubr.bf16.mxu0 0
        %1330 = vmatmul.mubr.bf16.gmra.mrb[0].mxu0 %v1292
        %v1331 = vpop.f32.mrb[0].mxu0
        %v1332 = vadd.f32 0.0, %v1331
        %v1333 = vpop.f32.mrb[0].mxu0
        %v1334 = vpop.f32.mrb[0].mxu0
        %v1335 = vpop.f32.mrb[0].mxu0
        %1336 = vdwg.mxu0
        %v1338 = vsel %vm1197, %v1192, 0
        %v1341 = vsel %vm1201, %v718, 0
        %1343 = vmatprep.subr.bf16.mxu0 0
        %1344 = vmatpush1.bf16.msra.mxu0 %v1341
        %1345 = vmatprep.subr.bf16.mxu0 0
        %1346 = vmatpush1.bf16.msra.mxu0 0
        %1347 = vmatprep.subr.bf16.mxu0 0
        %1348 = vmatpush1.bf16.msra.mxu0 0
        %1349 = vmatprep.subr.bf16.mxu0 0
        %1350 = vmatpush1.bf16.msra.mxu0 0
        %1351 = vmatprep.subr.bf16.mxu0 0
        %1352 = vmatpush1.bf16.msra.mxu0 0
        %1353 = vmatprep.subr.bf16.mxu0 0
        %1354 = vmatpush1.bf16.msra.mxu0 0
        %1355 = vmatprep.subr.bf16.mxu0 0
        %1356 = vmatpush1.bf16.msra.mxu0 0
        %1357 = vmatprep.subr.bf16.mxu0 0
        %1358 = vmatpush1.bf16.msra.mxu0 0
        %1359 = vmatprep.subr.bf16.mxu0 0
        %1360 = vmatpush1.bf16.msra.mxu0 0
        %1361 = vmatprep.subr.bf16.mxu0 0
        %1362 = vmatpush1.bf16.msra.mxu0 0
        %1363 = vmatprep.subr.bf16.mxu0 0
        %1364 = vmatpush1.bf16.msra.mxu0 0
        %1365 = vmatprep.subr.bf16.mxu0 0
        %1366 = vmatpush1.bf16.msra.mxu0 0
        %1367 = vmatprep.subr.bf16.mxu0 0
        %1368 = vmatpush1.bf16.msra.mxu0 0
        %1369 = vmatprep.subr.bf16.mxu0 0
        %1370 = vmatpush1.bf16.msra.mxu0 0
        %1371 = vmatprep.subr.bf16.mxu0 0
        %1372 = vmatpush1.bf16.msra.mxu0 0
        %1373 = vmatprep.subr.bf16.mxu0 0
        %1374 = vmatpush1.bf16.msra.mxu0 0
        %1375 = vmatprep.mubr.bf16.mxu0 0
        %1376 = vmatmul.mubr.bf16.gmra.mrb[0].mxu0 %v1338
        %v1377 = vpop.f32.mrb[0].mxu0
        %v1378 = vadd.f32 0.0, %v1377
        %v1379 = vpop.f32.mrb[0].mxu0
        %v1380 = vpop.f32.mrb[0].mxu0
        %v1381 = vpop.f32.mrb[0].mxu0
        %1382 = vdwg.mxu0
        %v1384 = vsel %vm1197, %v1193, 0
        %v1387 = vsel %vm1201, %v719, 0
        %1389 = vmatprep.subr.bf16.mxu0 0
        %1390 = vmatpush1.bf16.msra.mxu0 %v1387
        %1391 = vmatprep.subr.bf16.mxu0 0
        %1392 = vmatpush1.bf16.msra.mxu0 0
        %1393 = vmatprep.subr.bf16.mxu0 0
        %1394 = vmatpush1.bf16.msra.mxu0 0
        %1395 = vmatprep.subr.bf16.mxu0 0
        %1396 = vmatpush1.bf16.msra.mxu0 0
        %1397 = vmatprep.subr.bf16.mxu0 0
        %1398 = vmatpush1.bf16.msra.mxu0 0
        %1399 = vmatprep.subr.bf16.mxu0 0
        %1400 = vmatpush1.bf16.msra.mxu0 0
        %1401 = vmatprep.subr.bf16.mxu0 0
        %1402 = vmatpush1.bf16.msra.mxu0 0
        %1403 = vmatprep.subr.bf16.mxu0 0
        %1404 = vmatpush1.bf16.msra.mxu0 0
        %1405 = vmatprep.subr.bf16.mxu0 0
        %1406 = vmatpush1.bf16.msra.mxu0 0
        %1407 = vmatprep.subr.bf16.mxu0 0
        %1408 = vmatpush1.bf16.msra.mxu0 0
        %1409 = vmatprep.subr.bf16.mxu0 0
        %1410 = vmatpush1.bf16.msra.mxu0 0
        %1411 = vmatprep.subr.bf16.mxu0 0
        %1412 = vmatpush1.bf16.msra.mxu0 0
        %1413 = vmatprep.subr.bf16.mxu0 0
        %1414 = vmatpush1.bf16.msra.mxu0 0
        %1415 = vmatprep.subr.bf16.mxu0 0
        %1416 = vmatpush1.bf16.msra.mxu0 0
        %1417 = vmatprep.subr.bf16.mxu0 0
        %1418 = vmatpush1.bf16.msra.mxu0 0
        %1419 = vmatprep.subr.bf16.mxu0 0
        %1420 = vmatpush1.bf16.msra.mxu0 0
        %1421 = vmatprep.mubr.bf16.mxu0 0
        %1422 = vmatmul.mubr.bf16.gmra.mrb[0].mxu0 %v1384
        %v1423 = vpop.f32.mrb[0].mxu0
        %v1424 = vadd.f32 0.0, %v1423
        %v1425 = vpop.f32.mrb[0].mxu0
        %v1426 = vpop.f32.mrb[0].mxu0
        %v1427 = vpop.f32.mrb[0].mxu0
        %1428 = vdwg.mxu0
        %v1430 = vsel %vm1197, %v1194, 0
        %v1433 = vsel %vm1201, %v720, 0
        %1435 = vmatprep.subr.bf16.mxu0 0
        %1436 = vmatpush1.bf16.msra.mxu0 %v1433
        %1437 = vmatprep.subr.bf16.mxu0 0
        %1438 = vmatpush1.bf16.msra.mxu0 0
        %1439 = vmatprep.subr.bf16.mxu0 0
        %1440 = vmatpush1.bf16.msra.mxu0 0
        %1441 = vmatprep.subr.bf16.mxu0 0
        %1442 = vmatpush1.bf16.msra.mxu0 0
        %1443 = vmatprep.subr.bf16.mxu0 0
        %1444 = vmatpush1.bf16.msra.mxu0 0
        %1445 = vmatprep.subr.bf16.mxu0 0
        %1446 = vmatpush1.bf16.msra.mxu0 0
        %1447 = vmatprep.subr.bf16.mxu0 0
        %1448 = vmatpush1.bf16.msra.mxu0 0
        %1449 = vmatprep.subr.bf16.mxu0 0
        %1450 = vmatpush1.bf16.msra.mxu0 0
        %1451 = vmatprep.subr.bf16.mxu0 0
        %1452 = vmatpush1.bf16.msra.mxu0 0
        %1453 = vmatprep.subr.bf16.mxu0 0
        %1454 = vmatpush1.bf16.msra.mxu0 0
        %1455 = vmatprep.subr.bf16.mxu0 0
        %1456 = vmatpush1.bf16.msra.mxu0 0
        %1457 = vmatprep.subr.bf16.mxu0 0
        %1458 = vmatpush1.bf16.msra.mxu0 0
        %1459 = vmatprep.subr.bf16.mxu0 0
        %1460 = vmatpush1.bf16.msra.mxu0 0
        %1461 = vmatprep.subr.bf16.mxu0 0
        %1462 = vmatpush1.bf16.msra.mxu0 0
        %1463 = vmatprep.subr.bf16.mxu0 0
        %1464 = vmatpush1.bf16.msra.mxu0 0
        %1465 = vmatprep.subr.bf16.mxu0 0
        %1466 = vmatpush1.bf16.msra.mxu0 0
        %1467 = vmatprep.mubr.bf16.mxu0 0
        %1468 = vmatmul.mubr.bf16.gmra.mrb[0].mxu0 %v1430
        %v1469 = vpop.f32.mrb[0].mxu0
        %v1470 = vadd.f32 0.0, %v1469
        %v1471 = vpop.f32.mrb[0].mxu0
        %v1472 = vpop.f32.mrb[0].mxu0
        %v1473 = vpop.f32.mrb[0].mxu0
        %1474 = vdwg.mxu0
        %v1476 = vsel %vm1197, %v1195, 0
        %v1479 = vsel %vm1201, %v721, 0
        %1481 = vmatprep.subr.bf16.mxu0 0
        %1482 = vmatpush1.bf16.msra.mxu0 %v1479
        %1483 = vmatprep.subr.bf16.mxu0 0
        %1484 = vmatpush1.bf16.msra.mxu0 0
        %1485 = vmatprep.subr.bf16.mxu0 0
        %1486 = vmatpush1.bf16.msra.mxu0 0
        %1487 = vmatprep.subr.bf16.mxu0 0
        %1488 = vmatpush1.bf16.msra.mxu0 0
        %1489 = vmatprep.subr.bf16.mxu0 0
        %1490 = vmatpush1.bf16.msra.mxu0 0
        %1491 = vmatprep.subr.bf16.mxu0 0
        %1492 = vmatpush1.bf16.msra.mxu0 0
        %1493 = vmatprep.subr.bf16.mxu0 0
        %1494 = vmatpush1.bf16.msra.mxu0 0
        %1495 = vmatprep.subr.bf16.mxu0 0
        %1496 = vmatpush1.bf16.msra.mxu0 0
        %1497 = vmatprep.subr.bf16.mxu0 0
        %1498 = vmatpush1.bf16.msra.mxu0 0
        %1499 = vmatprep.subr.bf16.mxu0 0
        %1500 = vmatpush1.bf16.msra.mxu0 0
        %1501 = vmatprep.subr.bf16.mxu0 0
        %1502 = vmatpush1.bf16.msra.mxu0 0
        %1503 = vmatprep.subr.bf16.mxu0 0
        %1504 = vmatpush1.bf16.msra.mxu0 0
        %1505 = vmatprep.subr.bf16.mxu0 0
        %1506 = vmatpush1.bf16.msra.mxu0 0
        %1507 = vmatprep.subr.bf16.mxu0 0
        %1508 = vmatpush1.bf16.msra.mxu0 0
        %1509 = vmatprep.subr.bf16.mxu0 0
        %1510 = vmatpush1.bf16.msra.mxu0 0
        %1511 = vmatprep.subr.bf16.mxu0 0
        %1512 = vmatpush1.bf16.msra.mxu0 0
        %1513 = vmatprep.mubr.bf16.mxu0 0
        %1514 = vmatmul.mubr.bf16.gmra.mrb[0].mxu0 %v1476
        %v1515 = vpop.f32.mrb[0].mxu0
        %v1516 = vadd.f32 0.0, %v1515
        %v1517 = vpop.f32.mrb[0].mxu0
        %v1518 = vpop.f32.mrb[0].mxu0
        %v1519 = vpop.f32.mrb[0].mxu0
        %1520 = vdwg.mxu0
        %v1522 = vsel %vm1197, %v1196, 0
        %v1525 = vsel %vm1201, %v722, 0
        %1527 = vmatprep.subr.bf16.mxu0 0
        %1528 = vmatpush1.bf16.msra.mxu0 %v1525
        %1529 = vmatprep.subr.bf16.mxu0 0
        %1530 = vmatpush1.bf16.msra.mxu0 0
        %1531 = vmatprep.subr.bf16.mxu0 0
        %1532 = vmatpush1.bf16.msra.mxu0 0
        %1533 = vmatprep.subr.bf16.mxu0 0
        %1534 = vmatpush1.bf16.msra.mxu0 0
        %1535 = vmatprep.subr.bf16.mxu0 0
        %1536 = vmatpush1.bf16.msra.mxu0 0
        %1537 = vmatprep.subr.bf16.mxu0 0
        %1538 = vmatpush1.bf16.msra.mxu0 0
        %1539 = vmatprep.subr.bf16.mxu0 0
        %1540 = vmatpush1.bf16.msra.mxu0 0
        %1541 = vmatprep.subr.bf16.mxu0 0
        %1542 = vmatpush1.bf16.msra.mxu0 0
        %1543 = vmatprep.subr.bf16.mxu0 0
        %1544 = vmatpush1.bf16.msra.mxu0 0
        %1545 = vmatprep.subr.bf16.mxu0 0
        %1546 = vmatpush1.bf16.msra.mxu0 0
        %1547 = vmatprep.subr.bf16.mxu0 0
        %1548 = vmatpush1.bf16.msra.mxu0 0
        %1549 = vmatprep.subr.bf16.mxu0 0
        %1550 = vmatpush1.bf16.msra.mxu0 0
        %1551 = vmatprep.subr.bf16.mxu0 0
        %1552 = vmatpush1.bf16.msra.mxu0 0
        %1553 = vmatprep.subr.bf16.mxu0 0
        %1554 = vmatpush1.bf16.msra.mxu0 0
        %1555 = vmatprep.subr.bf16.mxu0 0
        %1556 = vmatpush1.bf16.msra.mxu0 0
        %1557 = vmatprep.subr.bf16.mxu0 0
        %1558 = vmatpush1.bf16.msra.mxu0 0
        %1559 = vmatprep.mubr.bf16.mxu0 0
        %1560 = vmatmul.mubr.bf16.gmra.mrb[0].mxu0 %v1522
        %v1561 = vpop.f32.mrb[0].mxu0
        %v1562 = vadd.f32 0.0, %v1561
        %v1563 = vpop.f32.mrb[0].mxu0
        %v1564 = vpop.f32.mrb[0].mxu0
        %v1565 = vpop.f32.mrb[0].mxu0
        %1566 = vdwg.mxu0
        %v1575 = vcombine.low %v1240, %v1286
        %v1576 = vcombine.low %v1332, %v1378
        %v1577 = vcombine.low %v1424, %v1470
        %v1578 = vcombine.low %v1516, %v1562
        %v1583 = vpack.c.bf16 %v1576, %v1575
        %v1584 = vpack.c.bf16 %v1578, %v1577
        %v1585 = vld [vmem:[%s4] sm:$0xf]
        %v1586 = vld [vmem:[%s4 + $0x4] sm:$0xf]
        %v1587 = vld [vmem:[%s4 + $0x8] sm:$0xf]
        %v1588 = vld [vmem:[%s4 + $0xc] sm:$0xf]
        %s1589 = scalar_lea.vmem %s2, 8
        %v1590 = vld [vmem:[%s1589] sm:$0xf]
        %v1591 = vld [vmem:[%s1589 + $0x4] sm:$0xf]
        %s1592 = scalar_lea.vmem %s3, 1
        %v1593 = vld [vmem:[%s1592] sm:$0x1]
        %v1595 = vlaneseq
        %v1596 = vshrl.u32 %v1595, 7
        %v1597 = vsub.s32 0, %v1596
        %v1598 = vrot.slane %v1593, %v1597
        %v1602 = vunpack.c.l.b16 %v1590
        %v1603 = vunpack.c.l.b16 %v1591
        %v1604 = vpack.c.b16 %v1603, %v1602
        %v1606 = vsel %vm468, %v1604, 0
        %1608 = vmatprep.subr.bf16.mxu0 0
        %1609 = vmatpush1.bf16.xpose.msra.mxu0 %v1606
        %1610 = vmatprep.subr.bf16.mxu0 0
        %1611 = vmatpush1.bf16.xpose.msra.mxu0 0
        %1612 = vmatprep.subr.bf16.mxu0 0
        %1613 = vmatpush1.bf16.xpose.msra.mxu0 0
        %1614 = vmatprep.subr.bf16.mxu0 0
        %1615 = vmatpush1.bf16.xpose.msra.mxu0 0
        %1616 = vmatprep.subr.bf16.mxu0 0
        %1617 = vmatpush1.bf16.xpose.msra.mxu0 0
        %1618 = vmatprep.subr.bf16.mxu0 0
        %1619 = vmatpush1.bf16.xpose.msra.mxu0 0
        %1620 = vmatprep.subr.bf16.mxu0 0
        %1621 = vmatpush1.bf16.xpose.msra.mxu0 0
        %1622 = vmatprep.subr.bf16.mxu0 0
        %1623 = vmatpush1.bf16.xpose.msra.mxu0 0
        %1624 = vmatprep.subr.bf16.mxu0 0
        %1625 = vmatpush1.bf16.xpose.msra.mxu0 0
        %1626 = vmatprep.subr.bf16.mxu0 0
        %1627 = vmatpush1.bf16.xpose.msra.mxu0 0
        %1628 = vmatprep.subr.bf16.mxu0 0
        %1629 = vmatpush1.bf16.xpose.msra.mxu0 0
        %1630 = vmatprep.subr.bf16.mxu0 0
        %1631 = vmatpush1.bf16.xpose.msra.mxu0 0
        %1632 = vmatprep.subr.bf16.mxu0 0
        %1633 = vmatpush1.bf16.xpose.msra.mxu0 0
        %1634 = vmatprep.subr.bf16.mxu0 0
        %1635 = vmatpush1.bf16.xpose.msra.mxu0 0
        %1636 = vmatprep.subr.bf16.mxu0 0
        %1637 = vmatpush1.bf16.xpose.msra.mxu0 0
        %1638 = vmatprep.subr.bf16.mxu0 0
        %1639 = vmatpush1.bf16.xpose.msra.mxu0 0
        %1640 = vmatprep.mubr.bf16.mxu0 0
        %1641 = vmatmul.mubr.bf16.gmra.mrb[0].mxu0 %v470
        %v1642 = vpop.f32.mrb[0].mxu0
        %v1643 = vadd.f32 %v1598, %v1642
        %v1644 = vpop.f32.mrb[0].mxu0
        %v1645 = vpop.f32.mrb[0].mxu0
        %v1646 = vadd.f32 %v1598, %v1645
        %v1647 = vpop.f32.mrb[0].mxu0
        %1648 = vmatprep.mubr.bf16.mxu0 0
        %1649 = vmatmul.mubr.bf16.gmra.mrb[0].mxu0 %v473
        %v1650 = vpop.f32.mrb[0].mxu0
        %v1651 = vadd.f32 %v1598, %v1650
        %v1652 = vpop.f32.mrb[0].mxu0
        %v1653 = vpop.f32.mrb[0].mxu0
        %v1654 = vadd.f32 %v1598, %v1653
        %v1655 = vpop.f32.mrb[0].mxu0
        %1656 = vdwg.mxu0
        %s1657 = scalar_lea.vmem %s2, 24
        %v1658 = vld [vmem:[%s1657] sm:$0xf]
        %v1659 = vld [vmem:[%s1657 + $0x4] sm:$0xf]
        %s1660 = scalar_lea.vmem %s3, 3
        %v1661 = vld [vmem:[%s1660] sm:$0x1]
        %v1663 = vlaneseq
        %v1664 = vshrl.u32 %v1663, 7
        %v1665 = vsub.s32 0, %v1664
        %v1666 = vrot.slane %v1661, %v1665
        %v1670 = vunpack.c.l.b16 %v1658
        %v1671 = vunpack.c.l.b16 %v1659
        %v1672 = vpack.c.b16 %v1671, %v1670
        %v1674 = vsel %vm468, %v1672, 0
        %1676 = vmatprep.subr.bf16.mxu0 0
        %1677 = vmatpush1.bf16.xpose.msra.mxu0 %v1674
        %1678 = vmatprep.subr.bf16.mxu0 0
        %1679 = vmatpush1.bf16.xpose.msra.mxu0 0
        %1680 = vmatprep.subr.bf16.mxu0 0
        %1681 = vmatpush1.bf16.xpose.msra.mxu0 0
        %1682 = vmatprep.subr.bf16.mxu0 0
        %1683 = vmatpush1.bf16.xpose.msra.mxu0 0
        %1684 = vmatprep.subr.bf16.mxu0 0
        %1685 = vmatpush1.bf16.xpose.msra.mxu0 0
        %1686 = vmatprep.subr.bf16.mxu0 0
        %1687 = vmatpush1.bf16.xpose.msra.mxu0 0
        %1688 = vmatprep.subr.bf16.mxu0 0
        %1689 = vmatpush1.bf16.xpose.msra.mxu0 0
        %1690 = vmatprep.subr.bf16.mxu0 0
        %1691 = vmatpush1.bf16.xpose.msra.mxu0 0
        %1692 = vmatprep.subr.bf16.mxu0 0
        %1693 = vmatpush1.bf16.xpose.msra.mxu0 0
        %1694 = vmatprep.subr.bf16.mxu0 0
        %1695 = vmatpush1.bf16.xpose.msra.mxu0 0
        %1696 = vmatprep.subr.bf16.mxu0 0
        %1697 = vmatpush1.bf16.xpose.msra.mxu0 0
        %1698 = vmatprep.subr.bf16.mxu0 0
        %1699 = vmatpush1.bf16.xpose.msra.mxu0 0
        %1700 = vmatprep.subr.bf16.mxu0 0
        %1701 = vmatpush1.bf16.xpose.msra.mxu0 0
        %1702 = vmatprep.subr.bf16.mxu0 0
        %1703 = vmatpush1.bf16.xpose.msra.mxu0 0
        %1704 = vmatprep.subr.bf16.mxu0 0
        %1705 = vmatpush1.bf16.xpose.msra.mxu0 0
        %1706 = vmatprep.subr.bf16.mxu0 0
        %1707 = vmatpush1.bf16.xpose.msra.mxu0 0
        %1708 = vmatprep.mubr.bf16.mxu0 0
        %1709 = vmatmul.mubr.bf16.gmra.mrb[0].mxu0 %v470
        %v1710 = vpop.f32.mrb[0].mxu0
        %v1711 = vadd.f32 %v1666, %v1710
        %v1712 = vpop.f32.mrb[0].mxu0
        %v1713 = vpop.f32.mrb[0].mxu0
        %v1714 = vadd.f32 %v1666, %v1713
        %v1715 = vpop.f32.mrb[0].mxu0
        %1716 = vmatprep.mubr.bf16.mxu0 0
        %1717 = vmatmul.mubr.bf16.gmra.mrb[0].mxu0 %v473
        %v1718 = vpop.f32.mrb[0].mxu0
        %v1719 = vadd.f32 %v1666, %v1718
        %v1720 = vpop.f32.mrb[0].mxu0
        %v1721 = vpop.f32.mrb[0].mxu0
        %v1722 = vadd.f32 %v1666, %v1721
        %v1723 = vpop.f32.mrb[0].mxu0
        %1724 = vdwg.mxu0
        %s1725 = scalar_lea.vmem %s2, 40
        %v1726 = vld [vmem:[%s1725] sm:$0xf]
        %v1727 = vld [vmem:[%s1725 + $0x4] sm:$0xf]
        %s1728 = scalar_lea.vmem %s3, 5
        %v1729 = vld [vmem:[%s1728] sm:$0x1]
        %v1731 = vlaneseq
        %v1732 = vshrl.u32 %v1731, 7
        %v1733 = vsub.s32 0, %v1732
        %v1734 = vrot.slane %v1729, %v1733
        %v1738 = vunpack.c.l.b16 %v1726
        %v1739 = vunpack.c.l.b16 %v1727
        %v1740 = vpack.c.b16 %v1739, %v1738
        %v1742 = vsel %vm468, %v1740, 0
        %1744 = vmatprep.subr.bf16.mxu0 0
        %1745 = vmatpush1.bf16.xpose.msra.mxu0 %v1742
        %1746 = vmatprep.subr.bf16.mxu0 0
        %1747 = vmatpush1.bf16.xpose.msra.mxu0 0
        %1748 = vmatprep.subr.bf16.mxu0 0
        %1749 = vmatpush1.bf16.xpose.msra.mxu0 0
        %1750 = vmatprep.subr.bf16.mxu0 0
        %1751 = vmatpush1.bf16.xpose.msra.mxu0 0
        %1752 = vmatprep.subr.bf16.mxu0 0
        %1753 = vmatpush1.bf16.xpose.msra.mxu0 0
        %1754 = vmatprep.subr.bf16.mxu0 0
        %1755 = vmatpush1.bf16.xpose.msra.mxu0 0
        %1756 = vmatprep.subr.bf16.mxu0 0
        %1757 = vmatpush1.bf16.xpose.msra.mxu0 0
        %1758 = vmatprep.subr.bf16.mxu0 0
        %1759 = vmatpush1.bf16.xpose.msra.mxu0 0
        %1760 = vmatprep.subr.bf16.mxu0 0
        %1761 = vmatpush1.bf16.xpose.msra.mxu0 0
        %1762 = vmatprep.subr.bf16.mxu0 0
        %1763 = vmatpush1.bf16.xpose.msra.mxu0 0
        %1764 = vmatprep.subr.bf16.mxu0 0
        %1765 = vmatpush1.bf16.xpose.msra.mxu0 0
        %1766 = vmatprep.subr.bf16.mxu0 0
        %1767 = vmatpush1.bf16.xpose.msra.mxu0 0
        %1768 = vmatprep.subr.bf16.mxu0 0
        %1769 = vmatpush1.bf16.xpose.msra.mxu0 0
        %1770 = vmatprep.subr.bf16.mxu0 0
        %1771 = vmatpush1.bf16.xpose.msra.mxu0 0
        %1772 = vmatprep.subr.bf16.mxu0 0
        %1773 = vmatpush1.bf16.xpose.msra.mxu0 0
        %1774 = vmatprep.subr.bf16.mxu0 0
        %1775 = vmatpush1.bf16.xpose.msra.mxu0 0
        %1776 = vmatprep.mubr.bf16.mxu0 0
        %1777 = vmatmul.mubr.bf16.gmra.mrb[0].mxu0 %v470
        %v1778 = vpop.f32.mrb[0].mxu0
        %v1779 = vadd.f32 %v1734, %v1778
        %v1780 = vpop.f32.mrb[0].mxu0
        %v1781 = vpop.f32.mrb[0].mxu0
        %v1782 = vadd.f32 %v1734, %v1781
        %v1783 = vpop.f32.mrb[0].mxu0
        %1784 = vmatprep.mubr.bf16.mxu0 0
        %1785 = vmatmul.mubr.bf16.gmra.mrb[0].mxu0 %v473
        %v1786 = vpop.f32.mrb[0].mxu0
        %v1787 = vadd.f32 %v1734, %v1786
        %v1788 = vpop.f32.mrb[0].mxu0
        %v1789 = vpop.f32.mrb[0].mxu0
        %v1790 = vadd.f32 %v1734, %v1789
        %v1791 = vpop.f32.mrb[0].mxu0
        %1792 = vdwg.mxu0
        %v1797 = vcombine.high %v1643, %v1643
        %v1798 = vcombine.high %v1646, %v1646
        %v1799 = vcombine.high %v1651, %v1651
        %v1800 = vcombine.high %v1654, %v1654
        %v1805 = vpack.c.bf16 %v1643, %v1643
        %v1806 = vpack.c.bf16 %v1797, %v1797
        %v1807 = vpack.c.bf16 %v1646, %v1646
        %v1808 = vpack.c.bf16 %v1798, %v1798
        %v1809 = vpack.c.bf16 %v1651, %v1651
        %v1810 = vpack.c.bf16 %v1799, %v1799
        %v1811 = vpack.c.bf16 %v1654, %v1654
        %v1812 = vpack.c.bf16 %v1800, %v1800
        %v1817 = vcombine.high %v1711, %v1711
        %v1818 = vcombine.high %v1714, %v1714
        %v1819 = vcombine.high %v1719, %v1719
        %v1820 = vcombine.high %v1722, %v1722
        %v1825 = vpack.c.bf16 %v1711, %v1711
        %v1826 = vpack.c.bf16 %v1817, %v1817
        %v1827 = vpack.c.bf16 %v1714, %v1714
        %v1828 = vpack.c.bf16 %v1818, %v1818
        %v1829 = vpack.c.bf16 %v1719, %v1719
        %v1830 = vpack.c.bf16 %v1819, %v1819
        %v1831 = vpack.c.bf16 %v1722, %v1722
        %v1832 = vpack.c.bf16 %v1820, %v1820
        %v1837 = vcombine.high %v1779, %v1779
        %v1838 = vcombine.high %v1782, %v1782
        %v1839 = vcombine.high %v1787, %v1787
        %v1840 = vcombine.high %v1790, %v1790
        %v1845 = vpack.c.bf16 %v1779, %v1779
        %v1846 = vpack.c.bf16 %v1837, %v1837
        %v1847 = vpack.c.bf16 %v1782, %v1782
        %v1848 = vpack.c.bf16 %v1838, %v1838
        %v1849 = vpack.c.bf16 %v1787, %v1787
        %v1850 = vpack.c.bf16 %v1839, %v1839
        %v1851 = vpack.c.bf16 %v1790, %v1790
        %v1852 = vpack.c.bf16 %v1840, %v1840
        %v1854 = vsel %vm723, %v1805, 0
        %v1857 = vsel %vm723, %v1825, 0
        %1859 = vmatprep.subr.bf16.mxu0 0
        %1860 = vmatpush1.bf16.xpose.msra.mxu0 %v1857
        %1861 = vmatprep.subr.bf16.mxu0 0
        %1862 = vmatpush1.bf16.xpose.msra.mxu0 0
        %1863 = vmatprep.subr.bf16.mxu0 0
        %1864 = vmatpush1.bf16.xpose.msra.mxu0 0
        %1865 = vmatprep.subr.bf16.mxu0 0
        %1866 = vmatpush1.bf16.xpose.msra.mxu0 0
        %1867 = vmatprep.subr.bf16.mxu0 0
        %1868 = vmatpush1.bf16.xpose.msra.mxu0 0
        %1869 = vmatprep.subr.bf16.mxu0 0
        %1870 = vmatpush1.bf16.xpose.msra.mxu0 0
        %1871 = vmatprep.subr.bf16.mxu0 0
        %1872 = vmatpush1.bf16.xpose.msra.mxu0 0
        %1873 = vmatprep.subr.bf16.mxu0 0
        %1874 = vmatpush1.bf16.xpose.msra.mxu0 0
        %1875 = vmatprep.subr.bf16.mxu0 0
        %1876 = vmatpush1.bf16.xpose.msra.mxu0 0
        %1877 = vmatprep.subr.bf16.mxu0 0
        %1878 = vmatpush1.bf16.xpose.msra.mxu0 0
        %1879 = vmatprep.subr.bf16.mxu0 0
        %1880 = vmatpush1.bf16.xpose.msra.mxu0 0
        %1881 = vmatprep.subr.bf16.mxu0 0
        %1882 = vmatpush1.bf16.xpose.msra.mxu0 0
        %1883 = vmatprep.subr.bf16.mxu0 0
        %1884 = vmatpush1.bf16.xpose.msra.mxu0 0
        %1885 = vmatprep.subr.bf16.mxu0 0
        %1886 = vmatpush1.bf16.xpose.msra.mxu0 0
        %1887 = vmatprep.subr.bf16.mxu0 0
        %1888 = vmatpush1.bf16.xpose.msra.mxu0 0
        %1889 = vmatprep.subr.bf16.mxu0 0
        %1890 = vmatpush1.bf16.xpose.msra.mxu0 0
        %1891 = vmatprep.mubr.bf16.mxu0 0
        %1892 = vmatmul.mubr.bf16.gmra.mrb[0].mxu0 %v1854
        %v1893 = vpop.f32.mrb[0].mxu0
        %v1894 = vadd.f32 0.0, %v1893
        %v1895 = vpop.f32.mrb[0].mxu0
        %v1896 = vpop.f32.mrb[0].mxu0
        %v1897 = vpop.f32.mrb[0].mxu0
        %1898 = vdwg.mxu0
        %v1900 = vsel %vm723, %v1806, 0
        %v1903 = vsel %vm723, %v1826, 0
        %1905 = vmatprep.subr.bf16.mxu0 0
        %1906 = vmatpush1.bf16.xpose.msra.mxu0 %v1903
        %1907 = vmatprep.subr.bf16.mxu0 0
        %1908 = vmatpush1.bf16.xpose.msra.mxu0 0
        %1909 = vmatprep.subr.bf16.mxu0 0
        %1910 = vmatpush1.bf16.xpose.msra.mxu0 0
        %1911 = vmatprep.subr.bf16.mxu0 0
        %1912 = vmatpush1.bf16.xpose.msra.mxu0 0
        %1913 = vmatprep.subr.bf16.mxu0 0
        %1914 = vmatpush1.bf16.xpose.msra.mxu0 0
        %1915 = vmatprep.subr.bf16.mxu0 0
        %1916 = vmatpush1.bf16.xpose.msra.mxu0 0
        %1917 = vmatprep.subr.bf16.mxu0 0
        %1918 = vmatpush1.bf16.xpose.msra.mxu0 0
        %1919 = vmatprep.subr.bf16.mxu0 0
        %1920 = vmatpush1.bf16.xpose.msra.mxu0 0
        %1921 = vmatprep.subr.bf16.mxu0 0
        %1922 = vmatpush1.bf16.xpose.msra.mxu0 0
        %1923 = vmatprep.subr.bf16.mxu0 0
        %1924 = vmatpush1.bf16.xpose.msra.mxu0 0
        %1925 = vmatprep.subr.bf16.mxu0 0
        %1926 = vmatpush1.bf16.xpose.msra.mxu0 0
        %1927 = vmatprep.subr.bf16.mxu0 0
        %1928 = vmatpush1.bf16.xpose.msra.mxu0 0
        %1929 = vmatprep.subr.bf16.mxu0 0
        %1930 = vmatpush1.bf16.xpose.msra.mxu0 0
        %1931 = vmatprep.subr.bf16.mxu0 0
        %1932 = vmatpush1.bf16.xpose.msra.mxu0 0
        %1933 = vmatprep.subr.bf16.mxu0 0
        %1934 = vmatpush1.bf16.xpose.msra.mxu0 0
        %1935 = vmatprep.subr.bf16.mxu0 0
        %1936 = vmatpush1.bf16.xpose.msra.mxu0 0
        %1937 = vmatprep.mubr.bf16.mxu0 0
        %1938 = vmatmul.mubr.bf16.gmra.mrb[0].mxu0 %v1900
        %v1939 = vpop.f32.mrb[0].mxu0
        %v1940 = vadd.f32 0.0, %v1939
        %v1941 = vpop.f32.mrb[0].mxu0
        %v1942 = vpop.f32.mrb[0].mxu0
        %v1943 = vpop.f32.mrb[0].mxu0
        %1944 = vdwg.mxu0
        %v1946 = vsel %vm723, %v1807, 0
        %v1949 = vsel %vm723, %v1827, 0
        %1951 = vmatprep.subr.bf16.mxu0 0
        %1952 = vmatpush1.bf16.xpose.msra.mxu0 %v1949
        %1953 = vmatprep.subr.bf16.mxu0 0
        %1954 = vmatpush1.bf16.xpose.msra.mxu0 0
        %1955 = vmatprep.subr.bf16.mxu0 0
        %1956 = vmatpush1.bf16.xpose.msra.mxu0 0
        %1957 = vmatprep.subr.bf16.mxu0 0
        %1958 = vmatpush1.bf16.xpose.msra.mxu0 0
        %1959 = vmatprep.subr.bf16.mxu0 0
        %1960 = vmatpush1.bf16.xpose.msra.mxu0 0
        %1961 = vmatprep.subr.bf16.mxu0 0
        %1962 = vmatpush1.bf16.xpose.msra.mxu0 0
        %1963 = vmatprep.subr.bf16.mxu0 0
        %1964 = vmatpush1.bf16.xpose.msra.mxu0 0
        %1965 = vmatprep.subr.bf16.mxu0 0
        %1966 = vmatpush1.bf16.xpose.msra.mxu0 0
        %1967 = vmatprep.subr.bf16.mxu0 0
        %1968 = vmatpush1.bf16.xpose.msra.mxu0 0
        %1969 = vmatprep.subr.bf16.mxu0 0
        %1970 = vmatpush1.bf16.xpose.msra.mxu0 0
        %1971 = vmatprep.subr.bf16.mxu0 0
        %1972 = vmatpush1.bf16.xpose.msra.mxu0 0
        %1973 = vmatprep.subr.bf16.mxu0 0
        %1974 = vmatpush1.bf16.xpose.msra.mxu0 0
        %1975 = vmatprep.subr.bf16.mxu0 0
        %1976 = vmatpush1.bf16.xpose.msra.mxu0 0
        %1977 = vmatprep.subr.bf16.mxu0 0
        %1978 = vmatpush1.bf16.xpose.msra.mxu0 0
        %1979 = vmatprep.subr.bf16.mxu0 0
        %1980 = vmatpush1.bf16.xpose.msra.mxu0 0
        %1981 = vmatprep.subr.bf16.mxu0 0
        %1982 = vmatpush1.bf16.xpose.msra.mxu0 0
        %1983 = vmatprep.mubr.bf16.mxu0 0
        %1984 = vmatmul.mubr.bf16.gmra.mrb[0].mxu0 %v1946
        %v1985 = vpop.f32.mrb[0].mxu0
        %v1986 = vadd.f32 0.0, %v1985
        %v1987 = vpop.f32.mrb[0].mxu0
        %v1988 = vpop.f32.mrb[0].mxu0
        %v1989 = vpop.f32.mrb[0].mxu0
        %1990 = vdwg.mxu0
        %v1992 = vsel %vm723, %v1808, 0
        %v1995 = vsel %vm723, %v1828, 0
        %1997 = vmatprep.subr.bf16.mxu0 0
        %1998 = vmatpush1.bf16.xpose.msra.mxu0 %v1995
        %1999 = vmatprep.subr.bf16.mxu0 0
        %2000 = vmatpush1.bf16.xpose.msra.mxu0 0
        %2001 = vmatprep.subr.bf16.mxu0 0
        %2002 = vmatpush1.bf16.xpose.msra.mxu0 0
        %2003 = vmatprep.subr.bf16.mxu0 0
        %2004 = vmatpush1.bf16.xpose.msra.mxu0 0
        %2005 = vmatprep.subr.bf16.mxu0 0
        %2006 = vmatpush1.bf16.xpose.msra.mxu0 0
        %2007 = vmatprep.subr.bf16.mxu0 0
        %2008 = vmatpush1.bf16.xpose.msra.mxu0 0
        %2009 = vmatprep.subr.bf16.mxu0 0
        %2010 = vmatpush1.bf16.xpose.msra.mxu0 0
        %2011 = vmatprep.subr.bf16.mxu0 0
        %2012 = vmatpush1.bf16.xpose.msra.mxu0 0
        %2013 = vmatprep.subr.bf16.mxu0 0
        %2014 = vmatpush1.bf16.xpose.msra.mxu0 0
        %2015 = vmatprep.subr.bf16.mxu0 0
        %2016 = vmatpush1.bf16.xpose.msra.mxu0 0
        %2017 = vmatprep.subr.bf16.mxu0 0
        %2018 = vmatpush1.bf16.xpose.msra.mxu0 0
        %2019 = vmatprep.subr.bf16.mxu0 0
        %2020 = vmatpush1.bf16.xpose.msra.mxu0 0
        %2021 = vmatprep.subr.bf16.mxu0 0
        %2022 = vmatpush1.bf16.xpose.msra.mxu0 0
        %2023 = vmatprep.subr.bf16.mxu0 0
        %2024 = vmatpush1.bf16.xpose.msra.mxu0 0
        %2025 = vmatprep.subr.bf16.mxu0 0
        %2026 = vmatpush1.bf16.xpose.msra.mxu0 0
        %2027 = vmatprep.subr.bf16.mxu0 0
        %2028 = vmatpush1.bf16.xpose.msra.mxu0 0
        %2029 = vmatprep.mubr.bf16.mxu0 0
        %2030 = vmatmul.mubr.bf16.gmra.mrb[0].mxu0 %v1992
        %v2031 = vpop.f32.mrb[0].mxu0
        %v2032 = vadd.f32 0.0, %v2031
        %v2033 = vpop.f32.mrb[0].mxu0
        %v2034 = vpop.f32.mrb[0].mxu0
        %v2035 = vpop.f32.mrb[0].mxu0
        %2036 = vdwg.mxu0
        %v2038 = vsel %vm723, %v1809, 0
        %v2041 = vsel %vm723, %v1829, 0
        %2043 = vmatprep.subr.bf16.mxu0 0
        %2044 = vmatpush1.bf16.xpose.msra.mxu0 %v2041
        %2045 = vmatprep.subr.bf16.mxu0 0
        %2046 = vmatpush1.bf16.xpose.msra.mxu0 0
        %2047 = vmatprep.subr.bf16.mxu0 0
        %2048 = vmatpush1.bf16.xpose.msra.mxu0 0
        %2049 = vmatprep.subr.bf16.mxu0 0
        %2050 = vmatpush1.bf16.xpose.msra.mxu0 0
        %2051 = vmatprep.subr.bf16.mxu0 0
        %2052 = vmatpush1.bf16.xpose.msra.mxu0 0
        %2053 = vmatprep.subr.bf16.mxu0 0
        %2054 = vmatpush1.bf16.xpose.msra.mxu0 0
        %2055 = vmatprep.subr.bf16.mxu0 0
        %2056 = vmatpush1.bf16.xpose.msra.mxu0 0
        %2057 = vmatprep.subr.bf16.mxu0 0
        %2058 = vmatpush1.bf16.xpose.msra.mxu0 0
        %2059 = vmatprep.subr.bf16.mxu0 0
        %2060 = vmatpush1.bf16.xpose.msra.mxu0 0
        %2061 = vmatprep.subr.bf16.mxu0 0
        %2062 = vmatpush1.bf16.xpose.msra.mxu0 0
        %2063 = vmatprep.subr.bf16.mxu0 0
        %2064 = vmatpush1.bf16.xpose.msra.mxu0 0
        %2065 = vmatprep.subr.bf16.mxu0 0
        %2066 = vmatpush1.bf16.xpose.msra.mxu0 0
        %2067 = vmatprep.subr.bf16.mxu0 0
        %2068 = vmatpush1.bf16.xpose.msra.mxu0 0
        %2069 = vmatprep.subr.bf16.mxu0 0
        %2070 = vmatpush1.bf16.xpose.msra.mxu0 0
        %2071 = vmatprep.subr.bf16.mxu0 0
        %2072 = vmatpush1.bf16.xpose.msra.mxu0 0
        %2073 = vmatprep.subr.bf16.mxu0 0
        %2074 = vmatpush1.bf16.xpose.msra.mxu0 0
        %2075 = vmatprep.mubr.bf16.mxu0 0
        %2076 = vmatmul.mubr.bf16.gmra.mrb[0].mxu0 %v2038
        %v2077 = vpop.f32.mrb[0].mxu0
        %v2078 = vadd.f32 0.0, %v2077
        %v2079 = vpop.f32.mrb[0].mxu0
        %v2080 = vpop.f32.mrb[0].mxu0
        %v2081 = vpop.f32.mrb[0].mxu0
        %2082 = vdwg.mxu0
        %v2084 = vsel %vm723, %v1810, 0
        %v2087 = vsel %vm723, %v1830, 0
        %2089 = vmatprep.subr.bf16.mxu0 0
        %2090 = vmatpush1.bf16.xpose.msra.mxu0 %v2087
        %2091 = vmatprep.subr.bf16.mxu0 0
        %2092 = vmatpush1.bf16.xpose.msra.mxu0 0
        %2093 = vmatprep.subr.bf16.mxu0 0
        %2094 = vmatpush1.bf16.xpose.msra.mxu0 0
        %2095 = vmatprep.subr.bf16.mxu0 0
        %2096 = vmatpush1.bf16.xpose.msra.mxu0 0
        %2097 = vmatprep.subr.bf16.mxu0 0
        %2098 = vmatpush1.bf16.xpose.msra.mxu0 0
        %2099 = vmatprep.subr.bf16.mxu0 0
        %2100 = vmatpush1.bf16.xpose.msra.mxu0 0
        %2101 = vmatprep.subr.bf16.mxu0 0
        %2102 = vmatpush1.bf16.xpose.msra.mxu0 0
        %2103 = vmatprep.subr.bf16.mxu0 0
        %2104 = vmatpush1.bf16.xpose.msra.mxu0 0
        %2105 = vmatprep.subr.bf16.mxu0 0
        %2106 = vmatpush1.bf16.xpose.msra.mxu0 0
        %2107 = vmatprep.subr.bf16.mxu0 0
        %2108 = vmatpush1.bf16.xpose.msra.mxu0 0
        %2109 = vmatprep.subr.bf16.mxu0 0
        %2110 = vmatpush1.bf16.xpose.msra.mxu0 0
        %2111 = vmatprep.subr.bf16.mxu0 0
        %2112 = vmatpush1.bf16.xpose.msra.mxu0 0
        %2113 = vmatprep.subr.bf16.mxu0 0
        %2114 = vmatpush1.bf16.xpose.msra.mxu0 0
        %2115 = vmatprep.subr.bf16.mxu0 0
        %2116 = vmatpush1.bf16.xpose.msra.mxu0 0
        %2117 = vmatprep.subr.bf16.mxu0 0
        %2118 = vmatpush1.bf16.xpose.msra.mxu0 0
        %2119 = vmatprep.subr.bf16.mxu0 0
        %2120 = vmatpush1.bf16.xpose.msra.mxu0 0
        %2121 = vmatprep.mubr.bf16.mxu0 0
        %2122 = vmatmul.mubr.bf16.gmra.mrb[0].mxu0 %v2084
        %v2123 = vpop.f32.mrb[0].mxu0
        %v2124 = vadd.f32 0.0, %v2123
        %v2125 = vpop.f32.mrb[0].mxu0
        %v2126 = vpop.f32.mrb[0].mxu0
        %v2127 = vpop.f32.mrb[0].mxu0
        %2128 = vdwg.mxu0
        %v2130 = vsel %vm723, %v1811, 0
        %v2133 = vsel %vm723, %v1831, 0
        %2135 = vmatprep.subr.bf16.mxu0 0
        %2136 = vmatpush1.bf16.xpose.msra.mxu0 %v2133
        %2137 = vmatprep.subr.bf16.mxu0 0
        %2138 = vmatpush1.bf16.xpose.msra.mxu0 0
        %2139 = vmatprep.subr.bf16.mxu0 0
        %2140 = vmatpush1.bf16.xpose.msra.mxu0 0
        %2141 = vmatprep.subr.bf16.mxu0 0
        %2142 = vmatpush1.bf16.xpose.msra.mxu0 0
        %2143 = vmatprep.subr.bf16.mxu0 0
        %2144 = vmatpush1.bf16.xpose.msra.mxu0 0
        %2145 = vmatprep.subr.bf16.mxu0 0
        %2146 = vmatpush1.bf16.xpose.msra.mxu0 0
        %2147 = vmatprep.subr.bf16.mxu0 0
        %2148 = vmatpush1.bf16.xpose.msra.mxu0 0
        %2149 = vmatprep.subr.bf16.mxu0 0
        %2150 = vmatpush1.bf16.xpose.msra.mxu0 0
        %2151 = vmatprep.subr.bf16.mxu0 0
        %2152 = vmatpush1.bf16.xpose.msra.mxu0 0
        %2153 = vmatprep.subr.bf16.mxu0 0
        %2154 = vmatpush1.bf16.xpose.msra.mxu0 0
        %2155 = vmatprep.subr.bf16.mxu0 0
        %2156 = vmatpush1.bf16.xpose.msra.mxu0 0
        %2157 = vmatprep.subr.bf16.mxu0 0
        %2158 = vmatpush1.bf16.xpose.msra.mxu0 0
        %2159 = vmatprep.subr.bf16.mxu0 0
        %2160 = vmatpush1.bf16.xpose.msra.mxu0 0
        %2161 = vmatprep.subr.bf16.mxu0 0
        %2162 = vmatpush1.bf16.xpose.msra.mxu0 0
        %2163 = vmatprep.subr.bf16.mxu0 0
        %2164 = vmatpush1.bf16.xpose.msra.mxu0 0
        %2165 = vmatprep.subr.bf16.mxu0 0
        %2166 = vmatpush1.bf16.xpose.msra.mxu0 0
        %2167 = vmatprep.mubr.bf16.mxu0 0
        %2168 = vmatmul.mubr.bf16.gmra.mrb[0].mxu0 %v2130
        %v2169 = vpop.f32.mrb[0].mxu0
        %v2170 = vadd.f32 0.0, %v2169
        %v2171 = vpop.f32.mrb[0].mxu0
        %v2172 = vpop.f32.mrb[0].mxu0
        %v2173 = vpop.f32.mrb[0].mxu0
        %2174 = vdwg.mxu0
        %v2176 = vsel %vm723, %v1812, 0
        %v2179 = vsel %vm723, %v1832, 0
        %2181 = vmatprep.subr.bf16.mxu0 0
        %2182 = vmatpush1.bf16.xpose.msra.mxu0 %v2179
        %2183 = vmatprep.subr.bf16.mxu0 0
        %2184 = vmatpush1.bf16.xpose.msra.mxu0 0
        %2185 = vmatprep.subr.bf16.mxu0 0
        %2186 = vmatpush1.bf16.xpose.msra.mxu0 0
        %2187 = vmatprep.subr.bf16.mxu0 0
        %2188 = vmatpush1.bf16.xpose.msra.mxu0 0
        %2189 = vmatprep.subr.bf16.mxu0 0
        %2190 = vmatpush1.bf16.xpose.msra.mxu0 0
        %2191 = vmatprep.subr.bf16.mxu0 0
        %2192 = vmatpush1.bf16.xpose.msra.mxu0 0
        %2193 = vmatprep.subr.bf16.mxu0 0
        %2194 = vmatpush1.bf16.xpose.msra.mxu0 0
        %2195 = vmatprep.subr.bf16.mxu0 0
        %2196 = vmatpush1.bf16.xpose.msra.mxu0 0
        %2197 = vmatprep.subr.bf16.mxu0 0
        %2198 = vmatpush1.bf16.xpose.msra.mxu0 0
        %2199 = vmatprep.subr.bf16.mxu0 0
        %2200 = vmatpush1.bf16.xpose.msra.mxu0 0
        %2201 = vmatprep.subr.bf16.mxu0 0
        %2202 = vmatpush1.bf16.xpose.msra.mxu0 0
        %2203 = vmatprep.subr.bf16.mxu0 0
        %2204 = vmatpush1.bf16.xpose.msra.mxu0 0
        %2205 = vmatprep.subr.bf16.mxu0 0
        %2206 = vmatpush1.bf16.xpose.msra.mxu0 0
        %2207 = vmatprep.subr.bf16.mxu0 0
        %2208 = vmatpush1.bf16.xpose.msra.mxu0 0
        %2209 = vmatprep.subr.bf16.mxu0 0
        %2210 = vmatpush1.bf16.xpose.msra.mxu0 0
        %2211 = vmatprep.subr.bf16.mxu0 0
        %2212 = vmatpush1.bf16.xpose.msra.mxu0 0
        %2213 = vmatprep.mubr.bf16.mxu0 0
        %2214 = vmatmul.mubr.bf16.gmra.mrb[0].mxu0 %v2176
        %v2215 = vpop.f32.mrb[0].mxu0
        %v2216 = vadd.f32 0.0, %v2215
        %v2217 = vpop.f32.mrb[0].mxu0
        %v2218 = vpop.f32.mrb[0].mxu0
        %v2219 = vpop.f32.mrb[0].mxu0
        %2220 = vdwg.mxu0
        %v2221 = vmul.f32 %v1894, 0.25
        %v2222 = vmul.f32 %v1940, 0.25
        %v2223 = vmul.f32 %v1986, 0.25
        %v2224 = vmul.f32 %v2032, 0.25
        %v2225 = vmul.f32 %v2078, 0.25
        %v2226 = vmul.f32 %v2124, 0.25
        %v2227 = vmul.f32 %v2170, 0.25
        %v2228 = vmul.f32 %v2216, 0.25
        %v2229 = vsel %vm1100, %v2221, -inf
        %2230 = vmax.xlane.f32.xlu0 %v2229
        %v2231 = vpop.xlane.xlu0 %2230
        %v2232 = vsel %vm1100, %v2222, -inf
        %2233 = vmax.xlane.f32.xlu0 %v2232
        %v2234 = vpop.xlane.xlu0 %2233
        %v2235 = vsel %vm1100, %v2223, -inf
        %2236 = vmax.xlane.f32.xlu0 %v2235
        %v2237 = vpop.xlane.xlu0 %2236
        %v2238 = vsel %vm1100, %v2224, -inf
        %2239 = vmax.xlane.f32.xlu0 %v2238
        %v2240 = vpop.xlane.xlu0 %2239
        %v2241 = vsel %vm1100, %v2225, -inf
        %2242 = vmax.xlane.f32.xlu0 %v2241
        %v2243 = vpop.xlane.xlu0 %2242
        %v2244 = vsel %vm1100, %v2226, -inf
        %2245 = vmax.xlane.f32.xlu0 %v2244
        %v2246 = vpop.xlane.xlu0 %2245
        %v2247 = vsel %vm1100, %v2227, -inf
        %2248 = vmax.xlane.f32.xlu0 %v2247
        %v2249 = vpop.xlane.xlu0 %2248
        %v2250 = vsel %vm1100, %v2228, -inf
        %2251 = vmax.xlane.f32.xlu0 %v2250
        %v2252 = vpop.xlane.xlu0 %2251
        %v2253 = vsub.f32 %v2221, %v2231
        %v2254 = vsub.f32 %v2222, %v2234
        %v2255 = vsub.f32 %v2223, %v2237
        %v2256 = vsub.f32 %v2224, %v2240
        %v2257 = vsub.f32 %v2225, %v2243
        %v2258 = vsub.f32 %v2226, %v2246
        %v2259 = vsub.f32 %v2227, %v2249
        %v2260 = vsub.f32 %v2228, %v2252
        %v2261 = vmul.f32 %v2253, 1.442695
        %v2262 = vpow.pop %v2261
        %v2263 = vmul.f32 %v2254, 1.442695
        %v2264 = vpow.pop %v2263
        %v2265 = vmul.f32 %v2255, 1.442695
        %v2266 = vpow.pop %v2265
        %v2267 = vmul.f32 %v2256, 1.442695
        %v2268 = vpow.pop %v2267
        %v2269 = vmul.f32 %v2257, 1.442695
        %v2270 = vpow.pop %v2269
        %v2271 = vmul.f32 %v2258, 1.442695
        %v2272 = vpow.pop %v2271
        %v2273 = vmul.f32 %v2259, 1.442695
        %v2274 = vpow.pop %v2273
        %v2275 = vmul.f32 %v2260, 1.442695
        %v2276 = vpow.pop %v2275
        %v2277 = vsel %vm1100, %v2262, 0.0
        %2278 = vadd.xlane.f32.xlu0 %v2277
        %v2279 = vpop.xlane.xlu0 %2278
        %v2280 = vsel %vm1100, %v2264, 0.0
        %2281 = vadd.xlane.f32.xlu0 %v2280
        %v2282 = vpop.xlane.xlu0 %2281
        %v2283 = vsel %vm1100, %v2266, 0.0
        %2284 = vadd.xlane.f32.xlu0 %v2283
        %v2285 = vpop.xlane.xlu0 %2284
        %v2286 = vsel %vm1100, %v2268, 0.0
        %2287 = vadd.xlane.f32.xlu0 %v2286
        %v2288 = vpop.xlane.xlu0 %2287
        %v2289 = vsel %vm1100, %v2270, 0.0
        %2290 = vadd.xlane.f32.xlu0 %v2289
        %v2291 = vpop.xlane.xlu0 %2290
        %v2292 = vsel %vm1100, %v2272, 0.0
        %2293 = vadd.xlane.f32.xlu0 %v2292
        %v2294 = vpop.xlane.xlu0 %2293
        %v2295 = vsel %vm1100, %v2274, 0.0
        %2296 = vadd.xlane.f32.xlu0 %v2295
        %v2297 = vpop.xlane.xlu0 %2296
        %v2298 = vsel %vm1100, %v2276, 0.0
        %2299 = vadd.xlane.f32.xlu0 %v2298
        %v2300 = vpop.xlane.xlu0 %2299
        %v2301 = vrcp.pop %v2279
        %v2302 = vmul.f32 %v2262, %v2301
        %v2303 = vrcp.pop %v2282
        %v2304 = vmul.f32 %v2264, %v2303
        %v2305 = vrcp.pop %v2285
        %v2306 = vmul.f32 %v2266, %v2305
        %v2307 = vrcp.pop %v2288
        %v2308 = vmul.f32 %v2268, %v2307
        %v2309 = vrcp.pop %v2291
        %v2310 = vmul.f32 %v2270, %v2309
        %v2311 = vrcp.pop %v2294
        %v2312 = vmul.f32 %v2272, %v2311
        %v2313 = vrcp.pop %v2297
        %v2314 = vmul.f32 %v2274, %v2313
        %v2315 = vrcp.pop %v2300
        %v2316 = vmul.f32 %v2276, %v2315
        %v2317 = vpack.c.bf16 %v2302, %v2302
        %v2318 = vpack.c.bf16 %v2304, %v2304
        %v2319 = vpack.c.bf16 %v2306, %v2306
        %v2320 = vpack.c.bf16 %v2308, %v2308
        %v2321 = vpack.c.bf16 %v2310, %v2310
        %v2322 = vpack.c.bf16 %v2312, %v2312
        %v2323 = vpack.c.bf16 %v2314, %v2314
        %v2324 = vpack.c.bf16 %v2316, %v2316
        %v2326 = vsel %vm1197, %v2317, 0
        %v2329 = vsel %vm1201, %v1845, 0
        %2331 = vmatprep.subr.bf16.mxu0 0
        %2332 = vmatpush1.bf16.msra.mxu0 %v2329
        %2333 = vmatprep.subr.bf16.mxu0 0
        %2334 = vmatpush1.bf16.msra.mxu0 0
        %2335 = vmatprep.subr.bf16.mxu0 0
        %2336 = vmatpush1.bf16.msra.mxu0 0
        %2337 = vmatprep.subr.bf16.mxu0 0
        %2338 = vmatpush1.bf16.msra.mxu0 0
        %2339 = vmatprep.subr.bf16.mxu0 0
        %2340 = vmatpush1.bf16.msra.mxu0 0
        %2341 = vmatprep.subr.bf16.mxu0 0
        %2342 = vmatpush1.bf16.msra.mxu0 0
        %2343 = vmatprep.subr.bf16.mxu0 0
        %2344 = vmatpush1.bf16.msra.mxu0 0
        %2345 = vmatprep.subr.bf16.mxu0 0
        %2346 = vmatpush1.bf16.msra.mxu0 0
        %2347 = vmatprep.subr.bf16.mxu0 0
        %2348 = vmatpush1.bf16.msra.mxu0 0
        %2349 = vmatprep.subr.bf16.mxu0 0
        %2350 = vmatpush1.bf16.msra.mxu0 0
        %2351 = vmatprep.subr.bf16.mxu0 0
        %2352 = vmatpush1.bf16.msra.mxu0 0
        %2353 = vmatprep.subr.bf16.mxu0 0
        %2354 = vmatpush1.bf16.msra.mxu0 0
        %2355 = vmatprep.subr.bf16.mxu0 0
        %2356 = vmatpush1.bf16.msra.mxu0 0
        %2357 = vmatprep.subr.bf16.mxu0 0
        %2358 = vmatpush1.bf16.msra.mxu0 0
        %2359 = vmatprep.subr.bf16.mxu0 0
        %2360 = vmatpush1.bf16.msra.mxu0 0
        %2361 = vmatprep.subr.bf16.mxu0 0
        %2362 = vmatpush1.bf16.msra.mxu0 0
        %2363 = vmatprep.mubr.bf16.mxu0 0
        %2364 = vmatmul.mubr.bf16.gmra.mrb[0].mxu0 %v2326
        %v2365 = vpop.f32.mrb[0].mxu0
        %v2366 = vadd.f32 0.0, %v2365
        %v2367 = vpop.f32.mrb[0].mxu0
        %v2368 = vpop.f32.mrb[0].mxu0
        %v2369 = vpop.f32.mrb[0].mxu0
        %2370 = vdwg.mxu0
        %v2372 = vsel %vm1197, %v2318, 0
        %v2375 = vsel %vm1201, %v1846, 0
        %2377 = vmatprep.subr.bf16.mxu0 0
        %2378 = vmatpush1.bf16.msra.mxu0 %v2375
        %2379 = vmatprep.subr.bf16.mxu0 0
        %2380 = vmatpush1.bf16.msra.mxu0 0
        %2381 = vmatprep.subr.bf16.mxu0 0
        %2382 = vmatpush1.bf16.msra.mxu0 0
        %2383 = vmatprep.subr.bf16.mxu0 0
        %2384 = vmatpush1.bf16.msra.mxu0 0
        %2385 = vmatprep.subr.bf16.mxu0 0
        %2386 = vmatpush1.bf16.msra.mxu0 0
        %2387 = vmatprep.subr.bf16.mxu0 0
        %2388 = vmatpush1.bf16.msra.mxu0 0
        %2389 = vmatprep.subr.bf16.mxu0 0
        %2390 = vmatpush1.bf16.msra.mxu0 0
        %2391 = vmatprep.subr.bf16.mxu0 0
        %2392 = vmatpush1.bf16.msra.mxu0 0
        %2393 = vmatprep.subr.bf16.mxu0 0
        %2394 = vmatpush1.bf16.msra.mxu0 0
        %2395 = vmatprep.subr.bf16.mxu0 0
        %2396 = vmatpush1.bf16.msra.mxu0 0
        %2397 = vmatprep.subr.bf16.mxu0 0
        %2398 = vmatpush1.bf16.msra.mxu0 0
        %2399 = vmatprep.subr.bf16.mxu0 0
        %2400 = vmatpush1.bf16.msra.mxu0 0
        %2401 = vmatprep.subr.bf16.mxu0 0
        %2402 = vmatpush1.bf16.msra.mxu0 0
        %2403 = vmatprep.subr.bf16.mxu0 0
        %2404 = vmatpush1.bf16.msra.mxu0 0
        %2405 = vmatprep.subr.bf16.mxu0 0
        %2406 = vmatpush1.bf16.msra.mxu0 0
        %2407 = vmatprep.subr.bf16.mxu0 0
        %2408 = vmatpush1.bf16.msra.mxu0 0
        %2409 = vmatprep.mubr.bf16.mxu0 0
        %2410 = vmatmul.mubr.bf16.gmra.mrb[0].mxu0 %v2372
        %v2411 = vpop.f32.mrb[0].mxu0
        %v2412 = vadd.f32 0.0, %v2411
        %v2413 = vpop.f32.mrb[0].mxu0
        %v2414 = vpop.f32.mrb[0].mxu0
        %v2415 = vpop.f32.mrb[0].mxu0
        %2416 = vdwg.mxu0
        %v2418 = vsel %vm1197, %v2319, 0
        %v2421 = vsel %vm1201, %v1847, 0
        %2423 = vmatprep.subr.bf16.mxu0 0
        %2424 = vmatpush1.bf16.msra.mxu0 %v2421
        %2425 = vmatprep.subr.bf16.mxu0 0
        %2426 = vmatpush1.bf16.msra.mxu0 0
        %2427 = vmatprep.subr.bf16.mxu0 0
        %2428 = vmatpush1.bf16.msra.mxu0 0
        %2429 = vmatprep.subr.bf16.mxu0 0
        %2430 = vmatpush1.bf16.msra.mxu0 0
        %2431 = vmatprep.subr.bf16.mxu0 0
        %2432 = vmatpush1.bf16.msra.mxu0 0
        %2433 = vmatprep.subr.bf16.mxu0 0
        %2434 = vmatpush1.bf16.msra.mxu0 0
        %2435 = vmatprep.subr.bf16.mxu0 0
        %2436 = vmatpush1.bf16.msra.mxu0 0
        %2437 = vmatprep.subr.bf16.mxu0 0
        %2438 = vmatpush1.bf16.msra.mxu0 0
        %2439 = vmatprep.subr.bf16.mxu0 0
        %2440 = vmatpush1.bf16.msra.mxu0 0
        %2441 = vmatprep.subr.bf16.mxu0 0
        %2442 = vmatpush1.bf16.msra.mxu0 0
        %2443 = vmatprep.subr.bf16.mxu0 0
        %2444 = vmatpush1.bf16.msra.mxu0 0
        %2445 = vmatprep.subr.bf16.mxu0 0
        %2446 = vmatpush1.bf16.msra.mxu0 0
        %2447 = vmatprep.subr.bf16.mxu0 0
        %2448 = vmatpush1.bf16.msra.mxu0 0
        %2449 = vmatprep.subr.bf16.mxu0 0
        %2450 = vmatpush1.bf16.msra.mxu0 0
        %2451 = vmatprep.subr.bf16.mxu0 0
        %2452 = vmatpush1.bf16.msra.mxu0 0
        %2453 = vmatprep.subr.bf16.mxu0 0
        %2454 = vmatpush1.bf16.msra.mxu0 0
        %2455 = vmatprep.mubr.bf16.mxu0 0
        %2456 = vmatmul.mubr.bf16.gmra.mrb[0].mxu0 %v2418
        %v2457 = vpop.f32.mrb[0].mxu0
        %v2458 = vadd.f32 0.0, %v2457
        %v2459 = vpop.f32.mrb[0].mxu0
        %v2460 = vpop.f32.mrb[0].mxu0
        %v2461 = vpop.f32.mrb[0].mxu0
        %2462 = vdwg.mxu0
        %v2464 = vsel %vm1197, %v2320, 0
        %v2467 = vsel %vm1201, %v1848, 0
        %2469 = vmatprep.subr.bf16.mxu0 0
        %2470 = vmatpush1.bf16.msra.mxu0 %v2467
        %2471 = vmatprep.subr.bf16.mxu0 0
        %2472 = vmatpush1.bf16.msra.mxu0 0
        %2473 = vmatprep.subr.bf16.mxu0 0
        %2474 = vmatpush1.bf16.msra.mxu0 0
        %2475 = vmatprep.subr.bf16.mxu0 0
        %2476 = vmatpush1.bf16.msra.mxu0 0
        %2477 = vmatprep.subr.bf16.mxu0 0
        %2478 = vmatpush1.bf16.msra.mxu0 0
        %2479 = vmatprep.subr.bf16.mxu0 0
        %2480 = vmatpush1.bf16.msra.mxu0 0
        %2481 = vmatprep.subr.bf16.mxu0 0
        %2482 = vmatpush1.bf16.msra.mxu0 0
        %2483 = vmatprep.subr.bf16.mxu0 0
        %2484 = vmatpush1.bf16.msra.mxu0 0
        %2485 = vmatprep.subr.bf16.mxu0 0
        %2486 = vmatpush1.bf16.msra.mxu0 0
        %2487 = vmatprep.subr.bf16.mxu0 0
        %2488 = vmatpush1.bf16.msra.mxu0 0
        %2489 = vmatprep.subr.bf16.mxu0 0
        %2490 = vmatpush1.bf16.msra.mxu0 0
        %2491 = vmatprep.subr.bf16.mxu0 0
        %2492 = vmatpush1.bf16.msra.mxu0 0
        %2493 = vmatprep.subr.bf16.mxu0 0
        %2494 = vmatpush1.bf16.msra.mxu0 0
        %2495 = vmatprep.subr.bf16.mxu0 0
        %2496 = vmatpush1.bf16.msra.mxu0 0
        %2497 = vmatprep.subr.bf16.mxu0 0
        %2498 = vmatpush1.bf16.msra.mxu0 0
        %2499 = vmatprep.subr.bf16.mxu0 0
        %2500 = vmatpush1.bf16.msra.mxu0 0
        %2501 = vmatprep.mubr.bf16.mxu0 0
        %2502 = vmatmul.mubr.bf16.gmra.mrb[0].mxu0 %v2464
        %v2503 = vpop.f32.mrb[0].mxu0
        %v2504 = vadd.f32 0.0, %v2503
        %v2505 = vpop.f32.mrb[0].mxu0
        %v2506 = vpop.f32.mrb[0].mxu0
        %v2507 = vpop.f32.mrb[0].mxu0
        %2508 = vdwg.mxu0
        %v2510 = vsel %vm1197, %v2321, 0
        %v2513 = vsel %vm1201, %v1849, 0
        %2515 = vmatprep.subr.bf16.mxu0 0
        %2516 = vmatpush1.bf16.msra.mxu0 %v2513
        %2517 = vmatprep.subr.bf16.mxu0 0
        %2518 = vmatpush1.bf16.msra.mxu0 0
        %2519 = vmatprep.subr.bf16.mxu0 0
        %2520 = vmatpush1.bf16.msra.mxu0 0
        %2521 = vmatprep.subr.bf16.mxu0 0
        %2522 = vmatpush1.bf16.msra.mxu0 0
        %2523 = vmatprep.subr.bf16.mxu0 0
        %2524 = vmatpush1.bf16.msra.mxu0 0
        %2525 = vmatprep.subr.bf16.mxu0 0
        %2526 = vmatpush1.bf16.msra.mxu0 0
        %2527 = vmatprep.subr.bf16.mxu0 0
        %2528 = vmatpush1.bf16.msra.mxu0 0
        %2529 = vmatprep.subr.bf16.mxu0 0
        %2530 = vmatpush1.bf16.msra.mxu0 0
        %2531 = vmatprep.subr.bf16.mxu0 0
        %2532 = vmatpush1.bf16.msra.mxu0 0
        %2533 = vmatprep.subr.bf16.mxu0 0
        %2534 = vmatpush1.bf16.msra.mxu0 0
        %2535 = vmatprep.subr.bf16.mxu0 0
        %2536 = vmatpush1.bf16.msra.mxu0 0
        %2537 = vmatprep.subr.bf16.mxu0 0
        %2538 = vmatpush1.bf16.msra.mxu0 0
        %2539 = vmatprep.subr.bf16.mxu0 0
        %2540 = vmatpush1.bf16.msra.mxu0 0
        %2541 = vmatprep.subr.bf16.mxu0 0
        %2542 = vmatpush1.bf16.msra.mxu0 0
        %2543 = vmatprep.subr.bf16.mxu0 0
        %2544 = vmatpush1.bf16.msra.mxu0 0
        %2545 = vmatprep.subr.bf16.mxu0 0
        %2546 = vmatpush1.bf16.msra.mxu0 0
        %2547 = vmatprep.mubr.bf16.mxu0 0
        %2548 = vmatmul.mubr.bf16.gmra.mrb[0].mxu0 %v2510
        %v2549 = vpop.f32.mrb[0].mxu0
        %v2550 = vadd.f32 0.0, %v2549
        %v2551 = vpop.f32.mrb[0].mxu0
        %v2552 = vpop.f32.mrb[0].mxu0
        %v2553 = vpop.f32.mrb[0].mxu0
        %2554 = vdwg.mxu0
        %v2556 = vsel %vm1197, %v2322, 0
        %v2559 = vsel %vm1201, %v1850, 0
        %2561 = vmatprep.subr.bf16.mxu0 0
        %2562 = vmatpush1.bf16.msra.mxu0 %v2559
        %2563 = vmatprep.subr.bf16.mxu0 0
        %2564 = vmatpush1.bf16.msra.mxu0 0
        %2565 = vmatprep.subr.bf16.mxu0 0
        %2566 = vmatpush1.bf16.msra.mxu0 0
        %2567 = vmatprep.subr.bf16.mxu0 0
        %2568 = vmatpush1.bf16.msra.mxu0 0
        %2569 = vmatprep.subr.bf16.mxu0 0
        %2570 = vmatpush1.bf16.msra.mxu0 0
        %2571 = vmatprep.subr.bf16.mxu0 0
        %2572 = vmatpush1.bf16.msra.mxu0 0
        %2573 = vmatprep.subr.bf16.mxu0 0
        %2574 = vmatpush1.bf16.msra.mxu0 0
        %2575 = vmatprep.subr.bf16.mxu0 0
        %2576 = vmatpush1.bf16.msra.mxu0 0
        %2577 = vmatprep.subr.bf16.mxu0 0
        %2578 = vmatpush1.bf16.msra.mxu0 0
        %2579 = vmatprep.subr.bf16.mxu0 0
        %2580 = vmatpush1.bf16.msra.mxu0 0
        %2581 = vmatprep.subr.bf16.mxu0 0
        %2582 = vmatpush1.bf16.msra.mxu0 0
        %2583 = vmatprep.subr.bf16.mxu0 0
        %2584 = vmatpush1.bf16.msra.mxu0 0
        %2585 = vmatprep.subr.bf16.mxu0 0
        %2586 = vmatpush1.bf16.msra.mxu0 0
        %2587 = vmatprep.subr.bf16.mxu0 0
        %2588 = vmatpush1.bf16.msra.mxu0 0
        %2589 = vmatprep.subr.bf16.mxu0 0
        %2590 = vmatpush1.bf16.msra.mxu0 0
        %2591 = vmatprep.subr.bf16.mxu0 0
        %2592 = vmatpush1.bf16.msra.mxu0 0
        %2593 = vmatprep.mubr.bf16.mxu0 0
        %2594 = vmatmul.mubr.bf16.gmra.mrb[0].mxu0 %v2556
        %v2595 = vpop.f32.mrb[0].mxu0
        %v2596 = vadd.f32 0.0, %v2595
        %v2597 = vpop.f32.mrb[0].mxu0
        %v2598 = vpop.f32.mrb[0].mxu0
        %v2599 = vpop.f32.mrb[0].mxu0
        %2600 = vdwg.mxu0
        %v2602 = vsel %vm1197, %v2323, 0
        %v2605 = vsel %vm1201, %v1851, 0
        %2607 = vmatprep.subr.bf16.mxu0 0
        %2608 = vmatpush1.bf16.msra.mxu0 %v2605
        %2609 = vmatprep.subr.bf16.mxu0 0
        %2610 = vmatpush1.bf16.msra.mxu0 0
        %2611 = vmatprep.subr.bf16.mxu0 0
        %2612 = vmatpush1.bf16.msra.mxu0 0
        %2613 = vmatprep.subr.bf16.mxu0 0
        %2614 = vmatpush1.bf16.msra.mxu0 0
        %2615 = vmatprep.subr.bf16.mxu0 0
        %2616 = vmatpush1.bf16.msra.mxu0 0
        %2617 = vmatprep.subr.bf16.mxu0 0
        %2618 = vmatpush1.bf16.msra.mxu0 0
        %2619 = vmatprep.subr.bf16.mxu0 0
        %2620 = vmatpush1.bf16.msra.mxu0 0
        %2621 = vmatprep.subr.bf16.mxu0 0
        %2622 = vmatpush1.bf16.msra.mxu0 0
        %2623 = vmatprep.subr.bf16.mxu0 0
        %2624 = vmatpush1.bf16.msra.mxu0 0
        %2625 = vmatprep.subr.bf16.mxu0 0
        %2626 = vmatpush1.bf16.msra.mxu0 0
        %2627 = vmatprep.subr.bf16.mxu0 0
        %2628 = vmatpush1.bf16.msra.mxu0 0
        %2629 = vmatprep.subr.bf16.mxu0 0
        %2630 = vmatpush1.bf16.msra.mxu0 0
        %2631 = vmatprep.subr.bf16.mxu0 0
        %2632 = vmatpush1.bf16.msra.mxu0 0
        %2633 = vmatprep.subr.bf16.mxu0 0
        %2634 = vmatpush1.bf16.msra.mxu0 0
        %2635 = vmatprep.subr.bf16.mxu0 0
        %2636 = vmatpush1.bf16.msra.mxu0 0
        %2637 = vmatprep.subr.bf16.mxu0 0
        %2638 = vmatpush1.bf16.msra.mxu0 0
        %2639 = vmatprep.mubr.bf16.mxu0 0
        %2640 = vmatmul.mubr.bf16.gmra.mrb[0].mxu0 %v2602
        %v2641 = vpop.f32.mrb[0].mxu0
        %v2642 = vadd.f32 0.0, %v2641
        %v2643 = vpop.f32.mrb[0].mxu0
        %v2644 = vpop.f32.mrb[0].mxu0
        %v2645 = vpop.f32.mrb[0].mxu0
        %2646 = vdwg.mxu0
        %v2648 = vsel %vm1197, %v2324, 0
        %v2651 = vsel %vm1201, %v1852, 0
        %2653 = vmatprep.subr.bf16.mxu0 0
        %2654 = vmatpush1.bf16.msra.mxu0 %v2651
        %2655 = vmatprep.subr.bf16.mxu0 0
        %2656 = vmatpush1.bf16.msra.mxu0 0
        %2657 = vmatprep.subr.bf16.mxu0 0
        %2658 = vmatpush1.bf16.msra.mxu0 0
        %2659 = vmatprep.subr.bf16.mxu0 0
        %2660 = vmatpush1.bf16.msra.mxu0 0
        %2661 = vmatprep.subr.bf16.mxu0 0
        %2662 = vmatpush1.bf16.msra.mxu0 0
        %2663 = vmatprep.subr.bf16.mxu0 0
        %2664 = vmatpush1.bf16.msra.mxu0 0
        %2665 = vmatprep.subr.bf16.mxu0 0
        %2666 = vmatpush1.bf16.msra.mxu0 0
        %2667 = vmatprep.subr.bf16.mxu0 0
        %2668 = vmatpush1.bf16.msra.mxu0 0
        %2669 = vmatprep.subr.bf16.mxu0 0
        %2670 = vmatpush1.bf16.msra.mxu0 0
        %2671 = vmatprep.subr.bf16.mxu0 0
        %2672 = vmatpush1.bf16.msra.mxu0 0
        %2673 = vmatprep.subr.bf16.mxu0 0
        %2674 = vmatpush1.bf16.msra.mxu0 0
        %2675 = vmatprep.subr.bf16.mxu0 0
        %2676 = vmatpush1.bf16.msra.mxu0 0
        %2677 = vmatprep.subr.bf16.mxu0 0
        %2678 = vmatpush1.bf16.msra.mxu0 0
        %2679 = vmatprep.subr.bf16.mxu0 0
        %2680 = vmatpush1.bf16.msra.mxu0 0
        %2681 = vmatprep.subr.bf16.mxu0 0
        %2682 = vmatpush1.bf16.msra.mxu0 0
        %2683 = vmatprep.subr.bf16.mxu0 0
        %2684 = vmatpush1.bf16.msra.mxu0 0
        %2685 = vmatprep.mubr.bf16.mxu0 0
        %2686 = vmatmul.mubr.bf16.gmra.mrb[0].mxu0 %v2648
        %v2687 = vpop.f32.mrb[0].mxu0
        %v2688 = vadd.f32 0.0, %v2687
        %v2689 = vpop.f32.mrb[0].mxu0
        %v2690 = vpop.f32.mrb[0].mxu0
        %v2691 = vpop.f32.mrb[0].mxu0
        %2692 = vdwg.mxu0
        %v2701 = vcombine.low %v2366, %v2412
        %v2702 = vcombine.low %v2458, %v2504
        %v2703 = vcombine.low %v2550, %v2596
        %v2704 = vcombine.low %v2642, %v2688
        %v2709 = vpack.c.bf16 %v2702, %v2701
        %v2710 = vpack.c.bf16 %v2704, %v2703
        %s2711 = scalar_lea.vmem %s4, 16
        %v2712 = vld [vmem:[%s2711] sm:$0xf]
        %v2713 = vld [vmem:[%s2711 + $0x4] sm:$0xf]
        %v2714 = vld [vmem:[%s2711 + $0x8] sm:$0xf]
        %v2715 = vld [vmem:[%s2711 + $0xc] sm:$0xf]
        %v2720 = vunpack.c.l.b16 %v2712
        %v2721 = vunpack.c.l.b16 %v2713
        %v2722 = vunpack.c.l.b16 %v2714
        %v2723 = vunpack.c.l.b16 %v2715
        %v2724 = vpack.c.b16 %v2721, %v2720
        %v2725 = vpack.c.b16 %v2723, %v2722
        %v2727 = vsel %vm723, %v2709, 0
        %v2730 = vsel %vm723, %v2710, 0
        %v2733 = vsel %vm723, %v2724, 0
        %v2736 = vsel %vm723, %v2725, 0
        %2738 = vmatprep.subr.bf16.mxu0 0
        %2739 = vmatpush1.bf16.xpose.msra.mxu0 %v2733
        %2740 = vmatprep.subr.bf16.mxu0 0
        %2741 = vmatpush1.bf16.xpose.msra.mxu0 %v2736
        %2742 = vmatprep.subr.bf16.mxu0 0
        %2743 = vmatpush1.bf16.xpose.msra.mxu0 0
        %2744 = vmatprep.subr.bf16.mxu0 0
        %2745 = vmatpush1.bf16.xpose.msra.mxu0 0
        %2746 = vmatprep.subr.bf16.mxu0 0
        %2747 = vmatpush1.bf16.xpose.msra.mxu0 0
        %2748 = vmatprep.subr.bf16.mxu0 0
        %2749 = vmatpush1.bf16.xpose.msra.mxu0 0
        %2750 = vmatprep.subr.bf16.mxu0 0
        %2751 = vmatpush1.bf16.xpose.msra.mxu0 0
        %2752 = vmatprep.subr.bf16.mxu0 0
        %2753 = vmatpush1.bf16.xpose.msra.mxu0 0
        %2754 = vmatprep.subr.bf16.mxu0 0
        %2755 = vmatpush1.bf16.xpose.msra.mxu0 0
        %2756 = vmatprep.subr.bf16.mxu0 0
        %2757 = vmatpush1.bf16.xpose.msra.mxu0 0
        %2758 = vmatprep.subr.bf16.mxu0 0
        %2759 = vmatpush1.bf16.xpose.msra.mxu0 0
        %2760 = vmatprep.subr.bf16.mxu0 0
        %2761 = vmatpush1.bf16.xpose.msra.mxu0 0
        %2762 = vmatprep.subr.bf16.mxu0 0
        %2763 = vmatpush1.bf16.xpose.msra.mxu0 0
        %2764 = vmatprep.subr.bf16.mxu0 0
        %2765 = vmatpush1.bf16.xpose.msra.mxu0 0
        %2766 = vmatprep.subr.bf16.mxu0 0
        %2767 = vmatpush1.bf16.xpose.msra.mxu0 0
        %2768 = vmatprep.subr.bf16.mxu0 0
        %2769 = vmatpush1.bf16.xpose.msra.mxu0 0
        %2770 = vmatprep.mubr.bf16.mxu0 0
        %2771 = vmatmul.mubr.bf16.gmra.mrb[0].mxu0 %v2727
        %v2772 = vpop.f32.mrb[0].mxu0
        %v2773 = vadd.f32 0.0, %v2772
        %v2774 = vpop.f32.mrb[0].mxu0
        %v2775 = vpop.f32.mrb[0].mxu0
        %v2776 = vadd.f32 0.0, %v2775
        %v2777 = vpop.f32.mrb[0].mxu0
        %2778 = vmatprep.mubr.bf16.mxu0 0
        %2779 = vmatmul.mubr.bf16.gmra.mrb[0].mxu0 %v2730
        %v2780 = vpop.f32.mrb[0].mxu0
        %v2781 = vadd.f32 0.0, %v2780
        %v2782 = vpop.f32.mrb[0].mxu0
        %v2783 = vpop.f32.mrb[0].mxu0
        %v2784 = vadd.f32 0.0, %v2783
        %v2785 = vpop.f32.mrb[0].mxu0
        %2786 = vdwg.mxu0
        %v2791 = vunpack.c.l.b16 %v1585
        %v2792 = vunpack.c.l.b16 %v1586
        %v2793 = vunpack.c.l.b16 %v1587
        %v2794 = vunpack.c.l.b16 %v1588
        %v2795 = vpack.c.b16 %v2792, %v2791
        %v2796 = vpack.c.b16 %v2794, %v2793
        %v2798 = vsel %vm723, %v1583, 0
        %v2801 = vsel %vm723, %v1584, 0
        %v2804 = vsel %vm723, %v2795, 0
        %v2807 = vsel %vm723, %v2796, 0
        %2809 = vmatprep.subr.bf16.mxu0 0
        %2810 = vmatpush1.bf16.xpose.msra.mxu0 %v2804
        %2811 = vmatprep.subr.bf16.mxu0 0
        %2812 = vmatpush1.bf16.xpose.msra.mxu0 %v2807
        %2813 = vmatprep.subr.bf16.mxu0 0
        %2814 = vmatpush1.bf16.xpose.msra.mxu0 0
        %2815 = vmatprep.subr.bf16.mxu0 0
        %2816 = vmatpush1.bf16.xpose.msra.mxu0 0
        %2817 = vmatprep.subr.bf16.mxu0 0
        %2818 = vmatpush1.bf16.xpose.msra.mxu0 0
        %2819 = vmatprep.subr.bf16.mxu0 0
        %2820 = vmatpush1.bf16.xpose.msra.mxu0 0
        %2821 = vmatprep.subr.bf16.mxu0 0
        %2822 = vmatpush1.bf16.xpose.msra.mxu0 0
        %2823 = vmatprep.subr.bf16.mxu0 0
        %2824 = vmatpush1.bf16.xpose.msra.mxu0 0
        %2825 = vmatprep.subr.bf16.mxu0 0
        %2826 = vmatpush1.bf16.xpose.msra.mxu0 0
        %2827 = vmatprep.subr.bf16.mxu0 0
        %2828 = vmatpush1.bf16.xpose.msra.mxu0 0
        %2829 = vmatprep.subr.bf16.mxu0 0
        %2830 = vmatpush1.bf16.xpose.msra.mxu0 0
        %2831 = vmatprep.subr.bf16.mxu0 0
        %2832 = vmatpush1.bf16.xpose.msra.mxu0 0
        %2833 = vmatprep.subr.bf16.mxu0 0
        %2834 = vmatpush1.bf16.xpose.msra.mxu0 0
        %2835 = vmatprep.subr.bf16.mxu0 0
        %2836 = vmatpush1.bf16.xpose.msra.mxu0 0
        %2837 = vmatprep.subr.bf16.mxu0 0
        %2838 = vmatpush1.bf16.xpose.msra.mxu0 0
        %2839 = vmatprep.subr.bf16.mxu0 0
        %2840 = vmatpush1.bf16.xpose.msra.mxu0 0
        %2841 = vmatprep.mubr.bf16.mxu0 0
        %2842 = vmatmul.mubr.bf16.gmra.mrb[0].mxu0 %v2798
        %v2843 = vpop.f32.mrb[0].mxu0
        %v2844 = vadd.f32 %v2773, %v2843
        %v2845 = vpop.f32.mrb[0].mxu0
        %v2846 = vpop.f32.mrb[0].mxu0
        %v2847 = vadd.f32 %v2776, %v2846
        %v2848 = vpop.f32.mrb[0].mxu0
        %2849 = vmatprep.mubr.bf16.mxu0 0
        %2850 = vmatmul.mubr.bf16.gmra.mrb[0].mxu0 %v2801
        %v2851 = vpop.f32.mrb[0].mxu0
        %v2852 = vadd.f32 %v2781, %v2851
        %v2853 = vpop.f32.mrb[0].mxu0
        %v2854 = vpop.f32.mrb[0].mxu0
        %v2855 = vadd.f32 %v2784, %v2854
        %v2856 = vpop.f32.mrb[0].mxu0
        %2857 = vdwg.mxu0
        %v2858 = vld [vmem:[%s5] sm:$0x1]
        %v2860 = vlaneseq
        %v2861 = vshrl.u32 %v2860, 7
        %v2862 = vsub.s32 0, %v2861
        %v2863 = vrot.slane %v2858, %v2862
        %v2865 = vadd.f32 %v2844, %v2863
        %v2866 = vadd.f32 %v2847, %v2863
        %v2867 = vadd.f32 %v2852, %v2863
        %v2868 = vadd.f32 %v2855, %v2863
        %v2869 = vpack.c.bf16 %v2866, %v2865
        %v2870 = vpack.c.bf16 %v2868, %v2867
        %v2871 = vld [vmem:[%s6] sm:$0xf]
        %v2872 = vld [vmem:[%s6 + $0x4] sm:$0xf]
        %v2873 = vld [vmem:[%s7] sm:$0x1]
        %v2875 = vlaneseq
        %v2876 = vshrl.u32 %v2875, 7
        %v2877 = vsub.s32 0, %v2876
        %v2878 = vrot.slane %v2873, %v2877
        %v2882 = vunpack.c.l.b16 %v2871
        %v2883 = vunpack.c.l.b16 %v2872
        %v2884 = vpack.c.b16 %v2883, %v2882
        %v2886 = vsel %vm468, %v2869, 0
        %v2889 = vsel %vm468, %v2870, 0
        %v2892 = vsel %vm468, %v2884, 0
        %2894 = vmatprep.subr.bf16.mxu0 0
        %2895 = vmatpush1.bf16.xpose.msra.mxu0 %v2892
        %2896 = vmatprep.subr.bf16.mxu0 0
        %2897 = vmatpush1.bf16.xpose.msra.mxu0 0
        %2898 = vmatprep.subr.bf16.mxu0 0
        %2899 = vmatpush1.bf16.xpose.msra.mxu0 0
        %2900 = vmatprep.subr.bf16.mxu0 0
        %2901 = vmatpush1.bf16.xpose.msra.mxu0 0
        %2902 = vmatprep.subr.bf16.mxu0 0
        %2903 = vmatpush1.bf16.xpose.msra.mxu0 0
        %2904 = vmatprep.subr.bf16.mxu0 0
        %2905 = vmatpush1.bf16.xpose.msra.mxu0 0
        %2906 = vmatprep.subr.bf16.mxu0 0
        %2907 = vmatpush1.bf16.xpose.msra.mxu0 0
        %2908 = vmatprep.subr.bf16.mxu0 0
        %2909 = vmatpush1.bf16.xpose.msra.mxu0 0
        %2910 = vmatprep.subr.bf16.mxu0 0
        %2911 = vmatpush1.bf16.xpose.msra.mxu0 0
        %2912 = vmatprep.subr.bf16.mxu0 0
        %2913 = vmatpush1.bf16.xpose.msra.mxu0 0
        %2914 = vmatprep.subr.bf16.mxu0 0
        %2915 = vmatpush1.bf16.xpose.msra.mxu0 0
        %2916 = vmatprep.subr.bf16.mxu0 0
        %2917 = vmatpush1.bf16.xpose.msra.mxu0 0
        %2918 = vmatprep.subr.bf16.mxu0 0
        %2919 = vmatpush1.bf16.xpose.msra.mxu0 0
        %2920 = vmatprep.subr.bf16.mxu0 0
        %2921 = vmatpush1.bf16.xpose.msra.mxu0 0
        %2922 = vmatprep.subr.bf16.mxu0 0
        %2923 = vmatpush1.bf16.xpose.msra.mxu0 0
        %2924 = vmatprep.subr.bf16.mxu0 0
        %2925 = vmatpush1.bf16.xpose.msra.mxu0 0
        %2926 = vmatprep.mubr.bf16.mxu0 0
        %2927 = vmatmul.mubr.bf16.gmra.mrb[0].mxu0 %v2886
        %v2928 = vpop.f32.mrb[0].mxu0
        %v2929 = vadd.f32 %v2878, %v2928
        %v2930 = vpop.f32.mrb[0].mxu0
        %v2931 = vpop.f32.mrb[0].mxu0
        %v2932 = vadd.f32 %v2878, %v2931
        %v2933 = vpop.f32.mrb[0].mxu0
        %2934 = vmatprep.mubr.bf16.mxu0 0
        %2935 = vmatmul.mubr.bf16.gmra.mrb[0].mxu0 %v2889
        %v2936 = vpop.f32.mrb[0].mxu0
        %v2937 = vadd.f32 %v2878, %v2936
        %v2938 = vpop.f32.mrb[0].mxu0
        %v2939 = vpop.f32.mrb[0].mxu0
        %v2940 = vadd.f32 %v2878, %v2939
        %v2941 = vpop.f32.mrb[0].mxu0
        %2942 = vdwg.mxu0
        %v2943 = vtanh.pop %v2929
        %v2944 = vtanh.pop %v2932
        %v2945 = vtanh.pop %v2937
        %v2946 = vtanh.pop %v2940
        %v2947 = vld [vmem:[%s8] sm:$0x1]
        %v2949 = vlaneseq
        %v2950 = vshrl.u32 %v2949, 7
        %v2951 = vsub.s32 0, %v2950
        %v2952 = vrot.slane %v2947, %v2951
        %v2954 = vmul.f32 %v2943, %v2952
        %v2955 = vmul.f32 %v2944, %v2952
        %v2956 = vmul.f32 %v2945, %v2952
        %v2957 = vmul.f32 %v2946, %v2952
        %v2958 = vsel %vm723, %v2954, 0.0
        %2959 = vadd.xlane.f32.xlu0 %v2958
        %v2960 = vpop.xlane.xlu0 %2959
        %v2961 = vsel %vm723, %v2955, 0.0
        %2962 = vadd.xlane.f32.xlu0 %v2961
        %v2963 = vpop.xlane.xlu0 %2962
        %v2964 = vsel %vm723, %v2956, 0.0
        %2965 = vadd.xlane.f32.xlu0 %v2964
        %v2966 = vpop.xlane.xlu0 %2965
        %v2967 = vsel %vm723, %v2957, 0.0
        %2968 = vadd.xlane.f32.xlu0 %v2967
        %v2969 = vpop.xlane.xlu0 %2968
        %v2975 = vunpack.c.l.s4 839922192
        %v2976 = vunpack.c.0.s8 %v2975
        %v2977 = vlaneseq
        %v2978 = vshrl.u32 %v2977, 7
        %v2979 = vsub.s32 %v2976, %v2978
        %v2980 = vrot.slane %v2960, %v2979
        %v2982 = vunpack.c.l.s4 1985246804
        %v2983 = vunpack.c.0.s8 %v2982
        %v2984 = vlaneseq
        %v2985 = vshrl.u32 %v2984, 7
        %v2986 = vsub.s32 %v2983, %v2985
        %v2987 = vrot.slane %v2960, %v2986
        %v2989 = vunpack.c.l.s4 839922192
        %v2990 = vunpack.c.0.s8 %v2989
        %v2991 = vlaneseq
        %v2992 = vshrl.u32 %v2991, 7
        %v2993 = vsub.s32 %v2990, %v2992
        %v2994 = vrot.slane %v2963, %v2993
        %v2996 = vunpack.c.l.s4 1985246804
        %v2997 = vunpack.c.0.s8 %v2996
        %v2998 = vlaneseq
        %v2999 = vshrl.u32 %v2998, 7
        %v3000 = vsub.s32 %v2997, %v2999
        %v3001 = vrot.slane %v2963, %v3000
        %v3003 = vunpack.c.l.s4 839922192
        %v3004 = vunpack.c.0.s8 %v3003
        %v3005 = vlaneseq
        %v3006 = vshrl.u32 %v3005, 7
        %v3007 = vsub.s32 %v3004, %v3006
        %v3008 = vrot.slane %v2966, %v3007
        %v3010 = vunpack.c.l.s4 1985246804
        %v3011 = vunpack.c.0.s8 %v3010
        %v3012 = vlaneseq
        %v3013 = vshrl.u32 %v3012, 7
        %v3014 = vsub.s32 %v3011, %v3013
        %v3015 = vrot.slane %v2966, %v3014
        %v3017 = vunpack.c.l.s4 839922192
        %v3018 = vunpack.c.0.s8 %v3017
        %v3019 = vlaneseq
        %v3020 = vshrl.u32 %v3019, 7
        %v3021 = vsub.s32 %v3018, %v3020
        %v3022 = vrot.slane %v2969, %v3021
        %v3024 = vunpack.c.l.s4 1985246804
        %v3025 = vunpack.c.0.s8 %v3024
        %v3026 = vlaneseq
        %v3027 = vshrl.u32 %v3026, 7
        %v3028 = vsub.s32 %v3025, %v3027
        %v3029 = vrot.slane %v2969, %v3028
        %v3038 = vmax.f32 %v2980, %v3008
        %v3039 = vmax.f32 %v2987, %v3015
        %v3040 = vmax.f32 %v2994, %v3022
        %v3041 = vmax.f32 %v3001, %v3029
        %v3042 = vmax.f32 %v3038, %v3039
        %v3043 = vmax.f32 %v3040, %v3041
        %v3044 = vmax.f32 %v3042, %v3043
        %v3045 = vsub.f32 %v2980, %v3044
        %v3046 = vsub.f32 %v2987, %v3044
        %v3047 = vsub.f32 %v2994, %v3044
        %v3048 = vsub.f32 %v3001, %v3044
        %v3049 = vsub.f32 %v3008, %v3044
        %v3050 = vsub.f32 %v3015, %v3044
        %v3051 = vsub.f32 %v3022, %v3044
        %v3052 = vsub.f32 %v3029, %v3044
        %v3053 = vmul.f32 %v3045, 1.442695
        %v3054 = vpow.pop %v3053
        %v3055 = vmul.f32 %v3046, 1.442695
        %v3056 = vpow.pop %v3055
        %v3057 = vmul.f32 %v3047, 1.442695
        %v3058 = vpow.pop %v3057
        %v3059 = vmul.f32 %v3048, 1.442695
        %v3060 = vpow.pop %v3059
        %v3061 = vmul.f32 %v3049, 1.442695
        %v3062 = vpow.pop %v3061
        %v3063 = vmul.f32 %v3050, 1.442695
        %v3064 = vpow.pop %v3063
        %v3065 = vmul.f32 %v3051, 1.442695
        %v3066 = vpow.pop %v3065
        %v3067 = vmul.f32 %v3052, 1.442695
        %v3068 = vpow.pop %v3067
        %vm3069 = vcmask 1043456
        %v3070 = vsel %vm3069, %v3054, 0.0
        %v3071 = vsel %vm3069, %v3056, 0.0
        %v3072 = vadd.f32 %v3070, %v3071
        %v3073 = vsel %vm3069, %v3058, 0.0
        %v3074 = vadd.f32 %v3072, %v3073
        %v3075 = vsel %vm3069, %v3060, 0.0
        %v3076 = vadd.f32 %v3074, %v3075
        %v3077 = vsel %vm3069, %v3062, 0.0
        %v3078 = vadd.f32 %v3076, %v3077
        %v3079 = vsel %vm3069, %v3064, 0.0
        %v3080 = vadd.f32 %v3078, %v3079
        %v3081 = vsel %vm3069, %v3066, 0.0
        %v3082 = vadd.f32 %v3080, %v3081
        %v3083 = vsel %vm3069, %v3068, 0.0
        %v3084 = vadd.f32 %v3082, %v3083
        %v3085 = vrcp.pop %v3084
        %v3086 = vmul.f32 %v3054, %v3085
        %v3087 = vmul.f32 %v3056, %v3085
        %v3088 = vmul.f32 %v3058, %v3085
        %v3089 = vmul.f32 %v3060, %v3085
        %v3090 = vmul.f32 %v3062, %v3085
        %v3091 = vmul.f32 %v3064, %v3085
        %v3092 = vmul.f32 %v3066, %v3085
        %v3093 = vmul.f32 %v3068, %v3085
        %v3098 = vcombine.high %v2865, %v2865
        %v3099 = vcombine.high %v2866, %v2866
        %v3100 = vcombine.high %v2867, %v2867
        %v3101 = vcombine.high %v2868, %v2868
        %3107 = vset.pattern.permute.xlu0 0
        %3108 = vperm.xlu0 %3107, %v3086
        %v3109 = vpop.permute.xlu0 %3108
        %v3112 = vunpack.c.l.s4 839922192
        %v3113 = vunpack.c.0.s8 %v3112
        %v3114 = vlaneseq
        %v3115 = vshrl.u32 %v3114, 7
        %v3116 = vsub.s32 %v3113, %v3115
        %v3117 = vrot.slane %v3109, %v3116
        %3119 = vset.pattern.permute.xlu0 0
        %3120 = vperm.xlu0 %3119, %v3087
        %v3121 = vpop.permute.xlu0 %3120
        %v3124 = vunpack.c.l.s4 839922192
        %v3125 = vunpack.c.0.s8 %v3124
        %v3126 = vlaneseq
        %v3127 = vshrl.u32 %v3126, 7
        %v3128 = vsub.s32 %v3125, %v3127
        %v3129 = vrot.slane %v3121, %v3128
        %3131 = vset.pattern.permute.xlu0 0
        %3132 = vperm.xlu0 %3131, %v3088
        %v3133 = vpop.permute.xlu0 %3132
        %v3136 = vunpack.c.l.s4 839922192
        %v3137 = vunpack.c.0.s8 %v3136
        %v3138 = vlaneseq
        %v3139 = vshrl.u32 %v3138, 7
        %v3140 = vsub.s32 %v3137, %v3139
        %v3141 = vrot.slane %v3133, %v3140
        %3143 = vset.pattern.permute.xlu0 0
        %3144 = vperm.xlu0 %3143, %v3089
        %v3145 = vpop.permute.xlu0 %3144
        %v3148 = vunpack.c.l.s4 839922192
        %v3149 = vunpack.c.0.s8 %v3148
        %v3150 = vlaneseq
        %v3151 = vshrl.u32 %v3150, 7
        %v3152 = vsub.s32 %v3149, %v3151
        %v3153 = vrot.slane %v3145, %v3152
        %3155 = vset.pattern.permute.xlu0 0
        %3156 = vperm.xlu0 %3155, %v3090
        %v3157 = vpop.permute.xlu0 %3156
        %v3160 = vunpack.c.l.s4 839922192
        %v3161 = vunpack.c.0.s8 %v3160
        %v3162 = vlaneseq
        %v3163 = vshrl.u32 %v3162, 7
        %v3164 = vsub.s32 %v3161, %v3163
        %v3165 = vrot.slane %v3157, %v3164
        %3167 = vset.pattern.permute.xlu0 0
        %3168 = vperm.xlu0 %3167, %v3091
        %v3169 = vpop.permute.xlu0 %3168
        %v3172 = vunpack.c.l.s4 839922192
        %v3173 = vunpack.c.0.s8 %v3172
        %v3174 = vlaneseq
        %v3175 = vshrl.u32 %v3174, 7
        %v3176 = vsub.s32 %v3173, %v3175
        %v3177 = vrot.slane %v3169, %v3176
        %3179 = vset.pattern.permute.xlu0 0
        %3180 = vperm.xlu0 %3179, %v3092
        %v3181 = vpop.permute.xlu0 %3180
        %v3184 = vunpack.c.l.s4 839922192
        %v3185 = vunpack.c.0.s8 %v3184
        %v3186 = vlaneseq
        %v3187 = vshrl.u32 %v3186, 7
        %v3188 = vsub.s32 %v3185, %v3187
        %v3189 = vrot.slane %v3181, %v3188
        %3191 = vset.pattern.permute.xlu0 0
        %3192 = vperm.xlu0 %3191, %v3093
        %v3193 = vpop.permute.xlu0 %3192
        %v3196 = vunpack.c.l.s4 839922192
        %v3197 = vunpack.c.0.s8 %v3196
        %v3198 = vlaneseq
        %v3199 = vshrl.u32 %v3198, 7
        %v3200 = vsub.s32 %v3197, %v3199
        %v3201 = vrot.slane %v3193, %v3200
        %v3202 = vmul.f32 %v2865, %v3117
        %v3203 = vmul.f32 %v3098, %v3129
        %v3204 = vmul.f32 %v2866, %v3141
        %v3205 = vmul.f32 %v3099, %v3153
        %v3206 = vmul.f32 %v2867, %v3165
        %v3207 = vmul.f32 %v3100, %v3177
        %v3208 = vmul.f32 %v2868, %v3189
        %v3209 = vmul.f32 %v3101, %v3201
        %vm3210 = vcmask 257024
        %v3211 = vsel %vm3210, %v3202, 0.0
        %v3212 = vsel %vm3210, %v3203, 0.0
        %v3213 = vadd.f32 %v3211, %v3212
        %v3214 = vsel %vm3210, %v3204, 0.0
        %v3215 = vadd.f32 %v3213, %v3214
        %v3216 = vsel %vm3210, %v3205, 0.0
        %v3217 = vadd.f32 %v3215, %v3216
        %v3218 = vsel %vm3210, %v3206, 0.0
        %v3219 = vadd.f32 %v3217, %v3218
        %v3220 = vsel %vm3210, %v3207, 0.0
        %v3221 = vadd.f32 %v3219, %v3220
        %v3222 = vsel %vm3210, %v3208, 0.0
        %v3223 = vadd.f32 %v3221, %v3222
        %v3224 = vsel %vm3210, %v3209, 0.0
        %v3225 = vadd.f32 %v3223, %v3224
        %3226 = vst.msk [vmem:[%s325] sm:$0xf] %vm3210, %v3225
        %s3227 = sand.u32 %s225, 1
        %s3228 = scalar_lea.sflag [#allocation3], %s3227
        %s3229 = sand.u32 %s225, 1
        %s3230 = smul.addr %s3229, 4
        %s3231 = scalar_lea.vmem [#allocation2], %s3230
        // Predicated region
        $region57: #{tpu_custom_call.1} parent=55 // pred_check
          %p3232 = pneg %p235
        $region58: #{tpu_custom_call.1} parent=55 // pred_check_branch
          %3234 = sbr.rel (%p3232) target = $region60
        $region59: #{tpu_custom_call.1} parent=55 // pred_region
          %s3236 = ssub.s32 64, 64
          %3237 = vsyncadd %s3228, %s3236
          %s3238 = smul.addr %s23, 64
          %s3239 = scalar_lea.hbm %s9, %s3238
          %s3241 = sshll.u32 %s3231, 4
          %s3242 = int_to_ptr.vmem [resolvable:$true] %s3241
          %3244 = dma.vmem_to_hbm [thread:$0]  %s3242, 64, %s3239, %s3228
        $region60: #{tpu_custom_call.1} parent=55 // pred_fallthru
          _
      $region56: #{tpu_custom_call.1} parent=5 // pred_fallthru
        _
      %p3245 = scmp.le.s32.totalorder 2, %s18
      // Predicated region
      $region61: #{tpu_custom_call.1} parent=5 // pred_check
        %p3246 = pneg %p3245
      $region62: #{tpu_custom_call.1} parent=5 // pred_check_branch
        %3248 = sbr.rel (%p3246) target = $region64
      $region63: #{tpu_custom_call.1} parent=5 // pred_region
        %s3249 = ssub.s32 %s18, 2
        // Predicated region
        $region65: #{tpu_custom_call.1} parent=63 // pred_check
          %p3250 = pneg %p241
        $region66: #{tpu_custom_call.1} parent=63 // pred_check_branch
          %3252 = sbr.rel (%p3250) target = $region68
        $region67: #{tpu_custom_call.1} parent=63 // pred_region
          %s3253 = sand.u32 %s226, 1
          %s3254 = scalar_lea.sflag [#allocation3], %s3253
          %s3255 = sand.u32 %s226, 1
          %s3256 = smul.addr %s3255, 4
          %s3257 = scalar_lea.vmem [#allocation2], %s3256
          %3258 = dma.done %s3254, 64
        $region68: #{tpu_custom_call.1} parent=63 // pred_fallthru
          _
      $region64: #{tpu_custom_call.1} parent=5 // pred_fallthru
        _
    $region6: #{tpu_custom_call.1} parent=1 // loop_footer
      %s22 = sadd.s32 1, %s18
    $region7: #{tpu_custom_call.1} parent=1 // loop_footer_branch
      %17 = sbr.rel target = $region3
    $region8: #{tpu_custom_call.1} parent=1 // loop_exit
      _
    %3259 = vsyncpa [#allocation3], 1
    %s3260 = scalar_lea.sflag [#allocation3], 1
    %3261 = vsyncpa %s3260, 1

</llo_original>
